<compile_context>
chip_gen: v7x
topology: tpu7x:2x2x1
jax: 0.10.0
libtpu: 0.0.40
codegen_flags: <defaults>
</compile_context>

<pallas_src>
import functools

import jax
import jax.numpy as jnp
import numpy as np
from jax import lax
from jax.experimental import pallas as pl
from jax.experimental.pallas import tpu as pltpu


def _attention_kernel(x_ref, wqkv_ref, wproj_ref, bproj_ref, *out_refs,
                      num_heads, head_dim, seq_len, emit_attn):
    """One grid step == one batch element; heads are an unrolled inner loop."""
    if emit_attn:
        y_ref, attn_ref = out_refs
    else:
        (y_ref,) = out_refs

    x = x_ref[0]                                    # (Np, C), input dtype
    n_pad = x.shape[0]
    cdt = x.dtype                                   # MXU operand dtype (bf16 if model is bf16)

    head_outs = []
    for h in range(num_heads):                      # static unroll (H <= 16)
        # Fused per-head QKV projection: (Np, C) @ (C, 3*hd).
        # Softmax scale is pre-folded into the Q weight columns.
        qkv = jnp.dot(x, wqkv_ref[h],
                      preferred_element_type=jnp.float32)           # (Np, 3*hd) f32
        q = qkv[:, :head_dim].astype(cdt)
        k = qkv[:, head_dim:2 * head_dim].astype(cdt)
        v = qkv[:, 2 * head_dim:].astype(cdt)

        # Scores: contract over head_dim (no explicit transpose / XLU pass).
        s = lax.dot_general(q, k, (((1,), (1,)), ((), ())),
                            preferred_element_type=jnp.float32)     # (Np, Np) f32

        if seq_len < n_pad:
            # Mask padded key columns so they vanish under softmax.
            col = lax.broadcasted_iota(jnp.int32, s.shape, 1)
            s = jnp.where(col < seq_len, s, jnp.float32(-1e30))

        s = s - jnp.max(s, axis=-1, keepdims=True)
        e = jnp.exp(s)
        p = e * pl.reciprocal(jnp.sum(e, axis=-1, keepdims=True), approx=False)
        p = p.astype(cdt)                                            # written once, reused

        if emit_attn:
            attn_ref[0, h] = p.astype(attn_ref.dtype)                # (Np, Np), lane-dense

        head_outs.append(jnp.dot(p, v,
                                 preferred_element_type=jnp.float32))  # (Np, hd)

    # Concatenate heads -> one full-width, full-depth output projection matmul.
    o = jnp.concatenate(head_outs, axis=-1).astype(cdt)             # (Np, C)
    y = jnp.dot(o, wproj_ref[...],
                preferred_element_type=jnp.float32) + bproj_ref[...]
    y_ref[0] = y.astype(y_ref.dtype)


def attention_pallas(x, wqkv, wproj, bproj, *, num_heads, qk_scale=None,
                     return_attn=True, vmem_limit_bytes=None):
    """x: (B, N, C).  wqkv: (3C, C) (torch layout), wproj: (C, C), bproj: (C,)."""
    B, N, C = x.shape
    hd = C // num_heads
    scale = qk_scale if qk_scale is not None else hd ** (-0.5)

    # torch nn.Linear weight layout: (out_features, in_features).
    # qkv output feature index d -> (part=d//C, head=(d%C)//hd, within=d%hd).
    wqkv_r = wqkv.reshape(3, num_heads, hd, C)
    wq = jnp.transpose(wqkv_r[0], (0, 2, 1)) * scale                 # (H, C, hd), scale folded
    wk = jnp.transpose(wqkv_r[1], (0, 2, 1))                         # (H, C, hd)
    wv = jnp.transpose(wqkv_r[2], (0, 2, 1))                         # (H, C, hd)
    wqkv_heads = jnp.concatenate([wq, wk, wv], axis=-1).astype(x.dtype)  # (H, C, 3*hd)
    wproj_t = wproj.T.astype(x.dtype)                                # (C, C): y = o @ wproj_t + b
    bproj_2d = bproj.reshape(1, C).astype(jnp.float32)

    # Lane-dense attn writeback: pad the sequence axis to a multiple of 128.
    Np = N if N % 128 == 0 else ((N // 128) + 1) * 128
    x_p = x if Np == N else jnp.pad(x, ((0, 0), (0, Np - N), (0, 0)))

    out_shapes = [jax.ShapeDtypeStruct((B, Np, C), x.dtype)]
    out_specs = [pl.BlockSpec((1, Np, C), lambda b: (b, 0, 0))]
    if return_attn:
        out_shapes.append(jax.ShapeDtypeStruct((B, num_heads, Np, Np), x.dtype))
        out_specs.append(pl.BlockSpec((1, num_heads, Np, Np), lambda b: (b, 0, 0, 0)))

    kernel = functools.partial(_attention_kernel, num_heads=num_heads,
                               head_dim=hd, seq_len=N, emit_attn=return_attn)

    compiler_params = pltpu.CompilerParams(
        dimension_semantics=("parallel",),
        # For ViT-base shapes (C=768, N~256, H=12) the resident weights +
        # double-buffered blocks approach the default scoped-VMEM limit;
        # raise vmem_limit_bytes there if the compiler complains.
        vmem_limit_bytes=vmem_limit_bytes,
    )

    outs = pl.pallas_call(
        kernel,
        out_shape=tuple(out_shapes),
        grid_spec=pltpu.PrefetchScalarGridSpec(
            num_scalar_prefetch=0,
            grid=(B,),
            in_specs=[
                pl.BlockSpec((1, Np, C), lambda b: (b, 0, 0)),              # x (per batch)
                pl.BlockSpec((num_heads, C, 3 * hd), lambda b: (0, 0, 0)),  # fused QKV weights (resident)
                pl.BlockSpec((C, C), lambda b: (0, 0)),                     # proj weight (resident)
                pl.BlockSpec((1, C), lambda b: (0, 0)),                     # proj bias (resident)
            ],
            out_specs=out_specs,
        ),
        compiler_params=compiler_params,
    )(x_p, wqkv_heads, wproj_t, bproj_2d)

    if return_attn:
        y_p, attn_p = outs
        return y_p[:, :N], attn_p[:, :, :N, :N]
    y_p = outs[0] if isinstance(outs, (tuple, list)) else outs
    return y_p[:, :N]


def attention_reference(x, wqkv, wproj, bproj, *, num_heads, qk_scale=None):
    B, N, C = x.shape
    hd = C // num_heads
    scale = qk_scale if qk_scale is not None else hd ** (-0.5)
    qkv = jnp.einsum("bnc,dc->bnd", x, wqkv)                 # (B, N, 3C)
    qkv = qkv.reshape(B, N, 3, num_heads, hd).transpose(2, 0, 3, 1, 4)
    q, k, v = qkv[0], qkv[1], qkv[2]                         # (B, H, N, hd)
    attn = jnp.einsum("bhqd,bhkd->bhqk", q, k) * scale
    attn = jax.nn.softmax(attn, axis=-1)
    o = jnp.einsum("bhqk,bhkd->bhqd", attn, v)               # (B, H, N, hd)
    o = o.transpose(0, 2, 1, 3).reshape(B, N, C)
    y = jnp.einsum("bnc,dc->bnd", o, wproj) + bproj
    return y, attn


if __name__ == "__main__":
    B, N, C = 2, 8, 32
    num_heads = 4

    key = jax.random.PRNGKey(0)
    kx, kw1, kw2, kb = jax.random.split(key, 4)
    x = jax.random.normal(kx, (B, N, C), dtype=jnp.float32)
    # torch nn.Linear layout: (out_features, in_features)
    wqkv = jax.random.normal(kw1, (3 * C, C), dtype=jnp.float32) * (1.0 / np.sqrt(C))
    wproj = jax.random.normal(kw2, (C, C), dtype=jnp.float32) * (1.0 / np.sqrt(C))
    bproj = jax.random.normal(kb, (C,), dtype=jnp.float32) * 0.01

    y, attn = attention_pallas(x, wqkv, wproj, bproj, num_heads=num_heads)
    jax.block_until_ready((y, attn))

    y_ref, attn_ref = attention_reference(x, wqkv, wproj, bproj, num_heads=num_heads)
    np.testing.assert_allclose(np.asarray(y), np.asarray(y_ref), atol=1e-4, rtol=1e-4)
    np.testing.assert_allclose(np.asarray(attn), np.asarray(attn_ref), atol=1e-5, rtol=1e-5)

    # y-only variant (skips the attn HBM writeback entirely).
    y2 = attention_pallas(x, wqkv, wproj, bproj, num_heads=num_heads, return_attn=False)
    jax.block_until_ready(y2)
    np.testing.assert_allclose(np.asarray(y2), np.asarray(y_ref), atol=1e-4, rtol=1e-4)

    print("KERNEL_OK")
</pallas_src>

<mosaic_0001>
module attributes {stable_mosaic.version = 11 : i64} {
  func.func @_attention_kernel(%arg0: i32, %arg1: memref<1x128x32xf32, #tpu.memory_space<vmem>>, %arg2: memref<4x32x24xf32, #tpu.memory_space<vmem>>, %arg3: memref<32x32xf32, #tpu.memory_space<vmem>>, %arg4: memref<1x32xf32, #tpu.memory_space<vmem>>, %arg5: memref<1x128x32xf32, #tpu.memory_space<vmem>>, %arg6: memref<1x4x128x128xf32, #tpu.memory_space<vmem>>) attributes {dimension_semantics = [#tpu.dimension_semantics<parallel>], iteration_bounds = array<i64: 2>, scalar_prefetch = 0 : i64, scratch_operands = 0 : i64, tpu.core_type = #tpu.core_type<tc>, window_params = [{transform_indices = @transform_0, window_bounds = array<i64: 1, 128, 32>}, {pipeline_mode = #tpu.pipeline_mode<synchronous>, transform_indices = @transform_1, window_bounds = array<i64: 4, 32, 24>}, {pipeline_mode = #tpu.pipeline_mode<synchronous>, transform_indices = @transform_2, window_bounds = array<i64: 32, 32>}, {pipeline_mode = #tpu.pipeline_mode<synchronous>, transform_indices = @transform_3, window_bounds = array<i64: 1, 32>}, {transform_indices = @transform_4, window_bounds = array<i64: 1, 128, 32>}, {transform_indices = @transform_5, window_bounds = array<i64: 1, 4, 128, 128>}]} {
    %c0 = arith.constant 0 : index
    %c0_0 = arith.constant 0 : index
    %c0_1 = arith.constant 0 : index
    %0 = vector.load %arg1[%c0, %c0_0, %c0_1] : memref<1x128x32xf32, #tpu.memory_space<vmem>>, vector<1x128x32xf32>
    %1 = vector.shape_cast %0 : vector<1x128x32xf32> to vector<128x32xf32>
    %c0_2 = arith.constant 0 : index
    %c0_3 = arith.constant 0 : index
    %c0_4 = arith.constant 0 : index
    %2 = vector.load %arg2[%c0_2, %c0_3, %c0_4] : memref<4x32x24xf32, #tpu.memory_space<vmem>>, vector<1x32x24xf32>
    %3 = vector.shape_cast %2 : vector<1x32x24xf32> to vector<32x24xf32>
    %cst = arith.constant dense<0.000000e+00> : vector<128x24xf32>
    %4 = tpu.matmul %1, %3, %cst {dimension_numbers = #tpu.dot_dimension_numbers<[1], [0], [0], [1], [0, 0, 1, 1], [], []>} : vector<128x32xf32>, vector<32x24xf32>, vector<128x24xf32> -> vector<128x24xf32>
    %5 = vector.extract_strided_slice %4 {offsets = [0, 0], sizes = [128, 8], strides = [1, 1]} : vector<128x24xf32> to vector<128x8xf32>
    %6 = vector.extract_strided_slice %4 {offsets = [0, 8], sizes = [128, 8], strides = [1, 1]} : vector<128x24xf32> to vector<128x8xf32>
    %7 = vector.extract_strided_slice %4 {offsets = [0, 16], sizes = [128, 8], strides = [1, 1]} : vector<128x24xf32> to vector<128x8xf32>
    %cst_5 = arith.constant dense<0.000000e+00> : vector<128x128xf32>
    %8 = tpu.matmul %5, %6, %cst_5 {dimension_numbers = #tpu.dot_dimension_numbers<[1], [1], [0], [0], [0, 0, 1, 0], [], []>} : vector<128x8xf32>, vector<128x8xf32>, vector<128x128xf32> -> vector<128x128xf32>
    %9 = tpu.iota {dimensions = array<i32: 1>} : vector<128x128xi32>
    %c8_i32 = arith.constant 8 : i32
    %10 = vector.broadcast %c8_i32 : i32 to vector<128x128xi32>
    %11 = arith.cmpi slt, %9, %10 : vector<128x128xi32>
    %cst_6 = arith.constant -1.000000e+30 : f32
    %12 = vector.broadcast %cst_6 : f32 to vector<128x128xf32>
    %13 = arith.select %11, %8, %12 : vector<128x128xi1>, vector<128x128xf32>
    %cst_7 = arith.constant dense<0xFF800000> : vector<128xf32>
    %14 = vector.multi_reduction <maximumf>, %13, %cst_7 [1] : vector<128x128xf32> to vector<128xf32>
    %15 = vector.shape_cast %14 : vector<128xf32> to vector<128x1xf32>
    %16 = vector.broadcast %15 : vector<128x1xf32> to vector<128x128xf32>
    %17 = arith.subf %13, %16 : vector<128x128xf32>
    %18 = math.exp %17 : vector<128x128xf32>
    %cst_8 = arith.constant dense<0.000000e+00> : vector<128xf32>
    %19 = vector.multi_reduction <add>, %18, %cst_8 [1] : vector<128x128xf32> to vector<128xf32>
    %20 = vector.shape_cast %19 : vector<128xf32> to vector<128x1xf32>
    %21 = tpu.reciprocal %20 : vector<128x1xf32> -> vector<128x1xf32>
    %22 = vector.broadcast %21 : vector<128x1xf32> to vector<128x128xf32>
    %23 = arith.mulf %18, %22 : vector<128x128xf32>
    %c0_9 = arith.constant 0 : index
    %c0_10 = arith.constant 0 : index
    %c0_11 = arith.constant 0 : index
    %c0_12 = arith.constant 0 : index
    %24 = vector.load %arg6[%c0_9, %c0_10, %c0_11, %c0_12] : memref<1x4x128x128xf32, #tpu.memory_space<vmem>>, vector<1x1x128x128xf32>
    %25 = vector.shape_cast %24 : vector<1x1x128x128xf32> to vector<128x128xf32>
    %26 = vector.shape_cast %23 : vector<128x128xf32> to vector<1x1x128x128xf32>
    tpu.vector_store %arg6[%c0_9, %c0_10, %c0_11, %c0_12], %26 {strides = array<i32>} : memref<1x4x128x128xf32, #tpu.memory_space<vmem>>, vector<1x1x128x128xf32>,
    %cst_13 = arith.constant dense<0.000000e+00> : vector<128x8xf32>
    %27 = tpu.matmul %23, %7, %cst_13 {dimension_numbers = #tpu.dot_dimension_numbers<[1], [0], [0], [1], [0, 0, 1, 1], [], []>} : vector<128x128xf32>, vector<128x8xf32>, vector<128x8xf32> -> vector<128x8xf32>
    %c1 = arith.constant 1 : index
    %c0_14 = arith.constant 0 : index
    %c0_15 = arith.constant 0 : index
    %28 = vector.load %arg2[%c1, %c0_14, %c0_15] : memref<4x32x24xf32, #tpu.memory_space<vmem>>, vector<1x32x24xf32>
    %29 = vector.shape_cast %28 : vector<1x32x24xf32> to vector<32x24xf32>
    %cst_16 = arith.constant dense<0.000000e+00> : vector<128x24xf32>
    %30 = tpu.matmul %1, %29, %cst_16 {dimension_numbers = #tpu.dot_dimension_numbers<[1], [0], [0], [1], [0, 0, 1, 1], [], []>} : vector<128x32xf32>, vector<32x24xf32>, vector<128x24xf32> -> vector<128x24xf32>
    %31 = vector.extract_strided_slice %30 {offsets = [0, 0], sizes = [128, 8], strides = [1, 1]} : vector<128x24xf32> to vector<128x8xf32>
    %32 = vector.extract_strided_slice %30 {offsets = [0, 8], sizes = [128, 8], strides = [1, 1]} : vector<128x24xf32> to vector<128x8xf32>
    %33 = vector.extract_strided_slice %30 {offsets = [0, 16], sizes = [128, 8], strides = [1, 1]} : vector<128x24xf32> to vector<128x8xf32>
    %cst_17 = arith.constant dense<0.000000e+00> : vector<128x128xf32>
    %34 = tpu.matmul %31, %32, %cst_17 {dimension_numbers = #tpu.dot_dimension_numbers<[1], [1], [0], [0], [0, 0, 1, 0], [], []>} : vector<128x8xf32>, vector<128x8xf32>, vector<128x128xf32> -> vector<128x128xf32>
    %35 = tpu.iota {dimensions = array<i32: 1>} : vector<128x128xi32>
    %c8_i32_18 = arith.constant 8 : i32
    %36 = vector.broadcast %c8_i32_18 : i32 to vector<128x128xi32>
    %37 = arith.cmpi slt, %35, %36 : vector<128x128xi32>
    %cst_19 = arith.constant -1.000000e+30 : f32
    %38 = vector.broadcast %cst_19 : f32 to vector<128x128xf32>
    %39 = arith.select %37, %34, %38 : vector<128x128xi1>, vector<128x128xf32>
    %cst_20 = arith.constant dense<0xFF800000> : vector<128xf32>
    %40 = vector.multi_reduction <maximumf>, %39, %cst_20 [1] : vector<128x128xf32> to vector<128xf32>
    %41 = vector.shape_cast %40 : vector<128xf32> to vector<128x1xf32>
    %42 = vector.broadcast %41 : vector<128x1xf32> to vector<128x128xf32>
    %43 = arith.subf %39, %42 : vector<128x128xf32>
    %44 = math.exp %43 : vector<128x128xf32>
    %cst_21 = arith.constant dense<0.000000e+00> : vector<128xf32>
    %45 = vector.multi_reduction <add>, %44, %cst_21 [1] : vector<128x128xf32> to vector<128xf32>
    %46 = vector.shape_cast %45 : vector<128xf32> to vector<128x1xf32>
    %47 = tpu.reciprocal %46 : vector<128x1xf32> -> vector<128x1xf32>
    %48 = vector.broadcast %47 : vector<128x1xf32> to vector<128x128xf32>
    %49 = arith.mulf %44, %48 : vector<128x128xf32>
    %c0_22 = arith.constant 0 : index
    %c1_23 = arith.constant 1 : index
    %c0_24 = arith.constant 0 : index
    %c0_25 = arith.constant 0 : index
    %50 = vector.load %arg6[%c0_22, %c1_23, %c0_24, %c0_25] : memref<1x4x128x128xf32, #tpu.memory_space<vmem>>, vector<1x1x128x128xf32>
    %51 = vector.shape_cast %50 : vector<1x1x128x128xf32> to vector<128x128xf32>
    %52 = vector.shape_cast %49 : vector<128x128xf32> to vector<1x1x128x128xf32>
    tpu.vector_store %arg6[%c0_22, %c1_23, %c0_24, %c0_25], %52 {strides = array<i32>} : memref<1x4x128x128xf32, #tpu.memory_space<vmem>>, vector<1x1x128x128xf32>,
    %cst_26 = arith.constant dense<0.000000e+00> : vector<128x8xf32>
    %53 = tpu.matmul %49, %33, %cst_26 {dimension_numbers = #tpu.dot_dimension_numbers<[1], [0], [0], [1], [0, 0, 1, 1], [], []>} : vector<128x128xf32>, vector<128x8xf32>, vector<128x8xf32> -> vector<128x8xf32>
    %c2 = arith.constant 2 : index
    %c0_27 = arith.constant 0 : index
    %c0_28 = arith.constant 0 : index
    %54 = vector.load %arg2[%c2, %c0_27, %c0_28] : memref<4x32x24xf32, #tpu.memory_space<vmem>>, vector<1x32x24xf32>
    %55 = vector.shape_cast %54 : vector<1x32x24xf32> to vector<32x24xf32>
    %cst_29 = arith.constant dense<0.000000e+00> : vector<128x24xf32>
    %56 = tpu.matmul %1, %55, %cst_29 {dimension_numbers = #tpu.dot_dimension_numbers<[1], [0], [0], [1], [0, 0, 1, 1], [], []>} : vector<128x32xf32>, vector<32x24xf32>, vector<128x24xf32> -> vector<128x24xf32>
    %57 = vector.extract_strided_slice %56 {offsets = [0, 0], sizes = [128, 8], strides = [1, 1]} : vector<128x24xf32> to vector<128x8xf32>
    %58 = vector.extract_strided_slice %56 {offsets = [0, 8], sizes = [128, 8], strides = [1, 1]} : vector<128x24xf32> to vector<128x8xf32>
    %59 = vector.extract_strided_slice %56 {offsets = [0, 16], sizes = [128, 8], strides = [1, 1]} : vector<128x24xf32> to vector<128x8xf32>
    %cst_30 = arith.constant dense<0.000000e+00> : vector<128x128xf32>
    %60 = tpu.matmul %57, %58, %cst_30 {dimension_numbers = #tpu.dot_dimension_numbers<[1], [1], [0], [0], [0, 0, 1, 0], [], []>} : vector<128x8xf32>, vector<128x8xf32>, vector<128x128xf32> -> vector<128x128xf32>
    %61 = tpu.iota {dimensions = array<i32: 1>} : vector<128x128xi32>
    %c8_i32_31 = arith.constant 8 : i32
    %62 = vector.broadcast %c8_i32_31 : i32 to vector<128x128xi32>
    %63 = arith.cmpi slt, %61, %62 : vector<128x128xi32>
    %cst_32 = arith.constant -1.000000e+30 : f32
    %64 = vector.broadcast %cst_32 : f32 to vector<128x128xf32>
    %65 = arith.select %63, %60, %64 : vector<128x128xi1>, vector<128x128xf32>
    %cst_33 = arith.constant dense<0xFF800000> : vector<128xf32>
    %66 = vector.multi_reduction <maximumf>, %65, %cst_33 [1] : vector<128x128xf32> to vector<128xf32>
    %67 = vector.shape_cast %66 : vector<128xf32> to vector<128x1xf32>
    %68 = vector.broadcast %67 : vector<128x1xf32> to vector<128x128xf32>
    %69 = arith.subf %65, %68 : vector<128x128xf32>
    %70 = math.exp %69 : vector<128x128xf32>
    %cst_34 = arith.constant dense<0.000000e+00> : vector<128xf32>
    %71 = vector.multi_reduction <add>, %70, %cst_34 [1] : vector<128x128xf32> to vector<128xf32>
    %72 = vector.shape_cast %71 : vector<128xf32> to vector<128x1xf32>
    %73 = tpu.reciprocal %72 : vector<128x1xf32> -> vector<128x1xf32>
    %74 = vector.broadcast %73 : vector<128x1xf32> to vector<128x128xf32>
    %75 = arith.mulf %70, %74 : vector<128x128xf32>
    %c0_35 = arith.constant 0 : index
    %c2_36 = arith.constant 2 : index
    %c0_37 = arith.constant 0 : index
    %c0_38 = arith.constant 0 : index
    %76 = vector.load %arg6[%c0_35, %c2_36, %c0_37, %c0_38] : memref<1x4x128x128xf32, #tpu.memory_space<vmem>>, vector<1x1x128x128xf32>
    %77 = vector.shape_cast %76 : vector<1x1x128x128xf32> to vector<128x128xf32>
    %78 = vector.shape_cast %75 : vector<128x128xf32> to vector<1x1x128x128xf32>
    tpu.vector_store %arg6[%c0_35, %c2_36, %c0_37, %c0_38], %78 {strides = array<i32>} : memref<1x4x128x128xf32, #tpu.memory_space<vmem>>, vector<1x1x128x128xf32>,
    %cst_39 = arith.constant dense<0.000000e+00> : vector<128x8xf32>
    %79 = tpu.matmul %75, %59, %cst_39 {dimension_numbers = #tpu.dot_dimension_numbers<[1], [0], [0], [1], [0, 0, 1, 1], [], []>} : vector<128x128xf32>, vector<128x8xf32>, vector<128x8xf32> -> vector<128x8xf32>
    %c3 = arith.constant 3 : index
    %c0_40 = arith.constant 0 : index
    %c0_41 = arith.constant 0 : index
    %80 = vector.load %arg2[%c3, %c0_40, %c0_41] : memref<4x32x24xf32, #tpu.memory_space<vmem>>, vector<1x32x24xf32>
    %81 = vector.shape_cast %80 : vector<1x32x24xf32> to vector<32x24xf32>
    %cst_42 = arith.constant dense<0.000000e+00> : vector<128x24xf32>
    %82 = tpu.matmul %1, %81, %cst_42 {dimension_numbers = #tpu.dot_dimension_numbers<[1], [0], [0], [1], [0, 0, 1, 1], [], []>} : vector<128x32xf32>, vector<32x24xf32>, vector<128x24xf32> -> vector<128x24xf32>
    %83 = vector.extract_strided_slice %82 {offsets = [0, 0], sizes = [128, 8], strides = [1, 1]} : vector<128x24xf32> to vector<128x8xf32>
    %84 = vector.extract_strided_slice %82 {offsets = [0, 8], sizes = [128, 8], strides = [1, 1]} : vector<128x24xf32> to vector<128x8xf32>
    %85 = vector.extract_strided_slice %82 {offsets = [0, 16], sizes = [128, 8], strides = [1, 1]} : vector<128x24xf32> to vector<128x8xf32>
    %cst_43 = arith.constant dense<0.000000e+00> : vector<128x128xf32>
    %86 = tpu.matmul %83, %84, %cst_43 {dimension_numbers = #tpu.dot_dimension_numbers<[1], [1], [0], [0], [0, 0, 1, 0], [], []>} : vector<128x8xf32>, vector<128x8xf32>, vector<128x128xf32> -> vector<128x128xf32>
    %87 = tpu.iota {dimensions = array<i32: 1>} : vector<128x128xi32>
    %c8_i32_44 = arith.constant 8 : i32
    %88 = vector.broadcast %c8_i32_44 : i32 to vector<128x128xi32>
    %89 = arith.cmpi slt, %87, %88 : vector<128x128xi32>
    %cst_45 = arith.constant -1.000000e+30 : f32
    %90 = vector.broadcast %cst_45 : f32 to vector<128x128xf32>
    %91 = arith.select %89, %86, %90 : vector<128x128xi1>, vector<128x128xf32>
    %cst_46 = arith.constant dense<0xFF800000> : vector<128xf32>
    %92 = vector.multi_reduction <maximumf>, %91, %cst_46 [1] : vector<128x128xf32> to vector<128xf32>
    %93 = vector.shape_cast %92 : vector<128xf32> to vector<128x1xf32>
    %94 = vector.broadcast %93 : vector<128x1xf32> to vector<128x128xf32>
    %95 = arith.subf %91, %94 : vector<128x128xf32>
    %96 = math.exp %95 : vector<128x128xf32>
    %cst_47 = arith.constant dense<0.000000e+00> : vector<128xf32>
    %97 = vector.multi_reduction <add>, %96, %cst_47 [1] : vector<128x128xf32> to vector<128xf32>
    %98 = vector.shape_cast %97 : vector<128xf32> to vector<128x1xf32>
    %99 = tpu.reciprocal %98 : vector<128x1xf32> -> vector<128x1xf32>
    %100 = vector.broadcast %99 : vector<128x1xf32> to vector<128x128xf32>
    %101 = arith.mulf %96, %100 : vector<128x128xf32>
    %c0_48 = arith.constant 0 : index
    %c3_49 = arith.constant 3 : index
    %c0_50 = arith.constant 0 : index
    %c0_51 = arith.constant 0 : index
    %102 = vector.load %arg6[%c0_48, %c3_49, %c0_50, %c0_51] : memref<1x4x128x128xf32, #tpu.memory_space<vmem>>, vector<1x1x128x128xf32>
    %103 = vector.shape_cast %102 : vector<1x1x128x128xf32> to vector<128x128xf32>
    %104 = vector.shape_cast %101 : vector<128x128xf32> to vector<1x1x128x128xf32>
    tpu.vector_store %arg6[%c0_48, %c3_49, %c0_50, %c0_51], %104 {strides = array<i32>} : memref<1x4x128x128xf32, #tpu.memory_space<vmem>>, vector<1x1x128x128xf32>,
    %cst_52 = arith.constant dense<0.000000e+00> : vector<128x8xf32>
    %105 = tpu.matmul %101, %85, %cst_52 {dimension_numbers = #tpu.dot_dimension_numbers<[1], [0], [0], [1], [0, 0, 1, 1], [], []>} : vector<128x128xf32>, vector<128x8xf32>, vector<128x8xf32> -> vector<128x8xf32>
    %106 = tpu.concatenate %27, %53, %79, %105 in 1 : vector<128x8xf32>, vector<128x8xf32>, vector<128x8xf32>, vector<128x8xf32> -> vector<128x32xf32>
    %c0_53 = arith.constant 0 : index
    %c0_54 = arith.constant 0 : index
    %107 = vector.load %arg3[%c0_53, %c0_54] : memref<32x32xf32, #tpu.memory_space<vmem>>, vector<32x32xf32>
    %cst_55 = arith.constant dense<0.000000e+00> : vector<128x32xf32>
    %108 = tpu.matmul %106, %107, %cst_55 {dimension_numbers = #tpu.dot_dimension_numbers<[1], [0], [0], [1], [0, 0, 1, 1], [], []>} : vector<128x32xf32>, vector<32x32xf32>, vector<128x32xf32> -> vector<128x32xf32>
    %c0_56 = arith.constant 0 : index
    %c0_57 = arith.constant 0 : index
    %109 = vector.load %arg4[%c0_56, %c0_57] : memref<1x32xf32, #tpu.memory_space<vmem>>, vector<1x32xf32>
    %110 = vector.broadcast %109 : vector<1x32xf32> to vector<128x32xf32>
    %111 = arith.addf %108, %110 : vector<128x32xf32>
    %c0_58 = arith.constant 0 : index
    %c0_59 = arith.constant 0 : index
    %c0_60 = arith.constant 0 : index
    %112 = vector.load %arg5[%c0_58, %c0_59, %c0_60] : memref<1x128x32xf32, #tpu.memory_space<vmem>>, vector<1x128x32xf32>
    %113 = vector.shape_cast %112 : vector<1x128x32xf32> to vector<128x32xf32>
    %114 = vector.shape_cast %111 : vector<128x32xf32> to vector<1x128x32xf32>
    tpu.vector_store %arg5[%c0_58, %c0_59, %c0_60], %114 {strides = array<i32>} : memref<1x128x32xf32, #tpu.memory_space<vmem>>, vector<1x128x32xf32>,
    return
  }
  func.func @transform_0(%arg0: i32) -> (i32, i32, i32) {
    %c0_i32 = arith.constant 0 : i32
    %c0_i32_0 = arith.constant 0 : i32
    %c0_i32_1 = arith.constant 0 : i32
    return %arg0, %c0_i32, %c0_i32_0 : i32, i32, i32
  }
  func.func @transform_1(%arg0: i32) -> (i32, i32, i32) {
    %c0_i32 = arith.constant 0 : i32
    %c0_i32_0 = arith.constant 0 : i32
    %c0_i32_1 = arith.constant 0 : i32
    %c0_i32_2 = arith.constant 0 : i32
    return %c0_i32, %c0_i32_0, %c0_i32_1 : i32, i32, i32
  }
  func.func @transform_2(%arg0: i32) -> (i32, i32) {
    %c0_i32 = arith.constant 0 : i32
    %c0_i32_0 = arith.constant 0 : i32
    %c0_i32_1 = arith.constant 0 : i32
    return %c0_i32, %c0_i32_0 : i32, i32
  }
  func.func @transform_3(%arg0: i32) -> (i32, i32) {
    %c0_i32 = arith.constant 0 : i32
    %c0_i32_0 = arith.constant 0 : i32
    %c0_i32_1 = arith.constant 0 : i32
    return %c0_i32, %c0_i32_0 : i32, i32
  }
  func.func @transform_4(%arg0: i32) -> (i32, i32, i32) {
    %c0_i32 = arith.constant 0 : i32
    %c0_i32_0 = arith.constant 0 : i32
    %c0_i32_1 = arith.constant 0 : i32
    return %arg0, %c0_i32, %c0_i32_0 : i32, i32, i32
  }
  func.func @transform_5(%arg0: i32) -> (i32, i32, i32, i32) {
    %c0_i32 = arith.constant 0 : i32
    %c0_i32_0 = arith.constant 0 : i32
    %c0_i32_1 = arith.constant 0 : i32
    %c0_i32_2 = arith.constant 0 : i32
    return %arg0, %c0_i32, %c0_i32_0, %c0_i32_1 : i32, i32, i32, i32
  }
}

</mosaic_0001>

<llo_original>
// kernel: tpu_custom_call.1
$region0: #{tpu_custom_call.1}
  #allocation0 [shape = 'u32[]', space=smem, size = 0x4, offset = 0x4, fixed_abs, tag = 'smem constant byte address 0x4 - core index']
  #allocation1 [shape = 'u32[144,128]{1,0:T(1,128)}', space=vmem, size = 0x12000, scoped, tag = 'internal scratch']
  %s0 = inlined_call_operand.vmem [shape: f32[2,128,32], index: 0, kind: input, shape index: {}]
  %s1 = inlined_call_operand.vmem [shape: f32[4,32,24], index: 1, kind: input, shape index: {}]
  %s2 = inlined_call_operand.vmem [shape: f32[32,32], index: 2, kind: input, shape index: {}]
  %s3 = inlined_call_operand.vmem [shape: f32[1,32], index: 3, kind: input, shape index: {}]
  %s4 = inlined_call_operand.vmem [shape: f32[2,128,32], index: 4, kind: output, shape index: {0}]
  %s5 = inlined_call_operand.hbm [shape: f32[2,4,128,128], index: 5, kind: output, shape index: {1}]
  %6 = xla_tuple %s4, %s5
  %s7 = sld [smem:[#allocation0]]
  $region57: #{tpu_custom_call.1} parent=0
    _
  %s9 = ssub.s32 1, %s7
  %s10 = scalar_select 0, %s9, %s7
  $region1: #{tpu_custom_call.1} parent=0
    #allocation2 [shape = 'u8[524288]{0}', space=vmem, size = 0x80000, scoped, tag = 'output window, operand 1']
    #allocation3 [shape = 's32[2]{0}', space=sflag, size = 0x8, scoped, tag = 'scoped memory for tpu_custom_call.1']
    %11 = vsyncpa [#allocation3], 0
    %s12 = scalar_lea.sflag [#allocation3], 1
    %13 = vsyncpa %s12, 0
    loop: start=0, step=1, limit=4
    $region2: #{tpu_custom_call.1} parent=1 // loop_pre_header
      _
    $region3: #{tpu_custom_call.1} parent=1 // loop_header
      %s15 = sphi 0, %s19
      %p16 = scmp.ge.s32.totalorder %s15, 4
      %s25 = sphi 0, %s27
      %s28 = sphi 0, %s25
      %s29 = sphi 0, %s28
      %s45 = sphi 0, %s29
      %s49 = sphi 0, %s49
      %s51 = sphi 0, %s49
      %s52 = sphi 0, %s51
      %s66 = sphi 0, %s52
      %s70 = sphi 0, %s70
      %s72 = sphi 0, %s70
      %s73 = sphi 0, %s72
      %s87 = sphi 0, %s73
      %s91 = sphi 0, %s91
      %s93 = sphi 0, %s91
      %s94 = sphi 0, %s93
      %s108 = sphi 0, %s94
      %s114 = sphi 0, %s116
      %s117 = sphi 0, %s114
      %s118 = sphi 0, %s117
      %s134 = sphi 0, %s118
      %s140 = sphi 0, %s142
      %s143 = sphi 0, %s140
      %s144 = sphi 0, %s143
      %s160 = sphi 0, %s144
    $region4: #{tpu_custom_call.1} parent=1 // loop_header_branch
      %18 = sbr.rel (%p16) target = $region8
    $region5: #{tpu_custom_call.1} parent=1 // loop_body
      %s20 = ssub.s32 %s15, 1
      %s21 = ssub.s32 %s15, 2
      %s22 = sadd.s32 %s15, 1
      %s23 = ssub.s32 %s15, %s22
      %p24 = scmp.eq.s32.totalorder %s23, 0
      %s26 = sadd.s32 %s25, 1
      %s27 = scalar_select %p24, %s25, %s26
      %p30 = pneg %p24
      %p31 = scmp.eq.s32.totalorder %s15, 1
      %p32 = por %p30, %p31
      %p33 = scmp.ne.s32.totalorder %s25, %s28
      %p34 = scmp.eq.s32.totalorder %s15, 0
      %p35 = por %p33, %p34
      %p36 = scmp.ne.s32.totalorder %s25, %s28
      %p37 = scmp.eq.s32.totalorder %s20, 1
      %p38 = por %p36, %p37
      %p39 = scmp.ne.s32.totalorder %s28, %s29
      %p40 = scmp.eq.s32.totalorder %s20, 0
      %p41 = por %p39, %p40
      %p42 = scmp.ne.s32.totalorder %s28, %s29
      %p43 = scmp.eq.s32.totalorder %s21, 1
      %p44 = por %p42, %p43
      %p46 = scmp.ne.s32.totalorder %s29, %s45
      %p47 = scmp.eq.s32.totalorder %s21, 0
      %p48 = por %p46, %p47
      %s50 = sadd.s32 %s49, 1
      %p53 = scmp.eq.s32.totalorder %s15, 1
      %p54 = scmp.ne.s32.totalorder %s49, %s51
      %p55 = scmp.eq.s32.totalorder %s15, 0
      %p56 = por %p54, %p55
      %p57 = scmp.ne.s32.totalorder %s49, %s51
      %p58 = scmp.eq.s32.totalorder %s20, 1
      %p59 = por %p57, %p58
      %p60 = scmp.ne.s32.totalorder %s51, %s52
      %p61 = scmp.eq.s32.totalorder %s20, 0
      %p62 = por %p60, %p61
      %p63 = scmp.ne.s32.totalorder %s51, %s52
      %p64 = scmp.eq.s32.totalorder %s21, 1
      %p65 = por %p63, %p64
      %p67 = scmp.ne.s32.totalorder %s52, %s66
      %p68 = scmp.eq.s32.totalorder %s21, 0
      %p69 = por %p67, %p68
      %s71 = sadd.s32 %s70, 1
      %p74 = scmp.eq.s32.totalorder %s15, 1
      %p75 = scmp.ne.s32.totalorder %s70, %s72
      %p76 = scmp.eq.s32.totalorder %s15, 0
      %p77 = por %p75, %p76
      %p78 = scmp.ne.s32.totalorder %s70, %s72
      %p79 = scmp.eq.s32.totalorder %s20, 1
      %p80 = por %p78, %p79
      %p81 = scmp.ne.s32.totalorder %s72, %s73
      %p82 = scmp.eq.s32.totalorder %s20, 0
      %p83 = por %p81, %p82
      %p84 = scmp.ne.s32.totalorder %s72, %s73
      %p85 = scmp.eq.s32.totalorder %s21, 1
      %p86 = por %p84, %p85
      %p88 = scmp.ne.s32.totalorder %s73, %s87
      %p89 = scmp.eq.s32.totalorder %s21, 0
      %p90 = por %p88, %p89
      %s92 = sadd.s32 %s91, 1
      %p95 = scmp.eq.s32.totalorder %s15, 1
      %p96 = scmp.ne.s32.totalorder %s91, %s93
      %p97 = scmp.eq.s32.totalorder %s15, 0
      %p98 = por %p96, %p97
      %p99 = scmp.ne.s32.totalorder %s91, %s93
      %p100 = scmp.eq.s32.totalorder %s20, 1
      %p101 = por %p99, %p100
      %p102 = scmp.ne.s32.totalorder %s93, %s94
      %p103 = scmp.eq.s32.totalorder %s20, 0
      %p104 = por %p102, %p103
      %p105 = scmp.ne.s32.totalorder %s93, %s94
      %p106 = scmp.eq.s32.totalorder %s21, 1
      %p107 = por %p105, %p106
      %p109 = scmp.ne.s32.totalorder %s94, %s108
      %p110 = scmp.eq.s32.totalorder %s21, 0
      %p111 = por %p109, %p110
      %s112 = ssub.s32 %s15, %s22
      %p113 = scmp.eq.s32.totalorder %s112, 0
      %s115 = sadd.s32 %s114, 1
      %s116 = scalar_select %p113, %s114, %s115
      %p119 = pneg %p113
      %p120 = scmp.eq.s32.totalorder %s15, 1
      %p121 = por %p119, %p120
      %p122 = scmp.ne.s32.totalorder %s114, %s117
      %p123 = scmp.eq.s32.totalorder %s15, 0
      %p124 = por %p122, %p123
      %p125 = scmp.ne.s32.totalorder %s114, %s117
      %p126 = scmp.eq.s32.totalorder %s20, 1
      %p127 = por %p125, %p126
      %p128 = scmp.ne.s32.totalorder %s117, %s118
      %p129 = scmp.eq.s32.totalorder %s20, 0
      %p130 = por %p128, %p129
      %p131 = scmp.ne.s32.totalorder %s117, %s118
      %p132 = scmp.eq.s32.totalorder %s21, 1
      %p133 = por %p131, %p132
      %p135 = scmp.ne.s32.totalorder %s118, %s134
      %p136 = scmp.eq.s32.totalorder %s21, 0
      %p137 = por %p135, %p136
      %s138 = ssub.s32 %s15, %s22
      %p139 = scmp.eq.s32.totalorder %s138, 0
      %s141 = sadd.s32 %s140, 1
      %s142 = scalar_select %p139, %s140, %s141
      %p145 = pneg %p139
      %p146 = scmp.eq.s32.totalorder %s15, 1
      %p147 = por %p145, %p146
      %p148 = scmp.ne.s32.totalorder %s140, %s143
      %p149 = scmp.eq.s32.totalorder %s15, 0
      %p150 = por %p148, %p149
      %p151 = scmp.ne.s32.totalorder %s140, %s143
      %p152 = scmp.eq.s32.totalorder %s20, 1
      %p153 = por %p151, %p152
      %p154 = scmp.ne.s32.totalorder %s143, %s144
      %p155 = scmp.eq.s32.totalorder %s20, 0
      %p156 = por %p154, %p155
      %p157 = scmp.ne.s32.totalorder %s143, %s144
      %p158 = scmp.eq.s32.totalorder %s21, 1
      %p159 = por %p157, %p158
      %p161 = scmp.ne.s32.totalorder %s144, %s160
      %p162 = scmp.eq.s32.totalorder %s21, 0
      %p163 = por %p161, %p162
      %p164 = scmp.le.s32.totalorder 1, %s15
      %p165 = scmp.lt.s32.totalorder %s15, 3
      %p166 = pnand %p164, %p165
      %p167 = pneg %p166
      // Predicated region
      $region9: #{tpu_custom_call.1} parent=5 // pred_check
        _
      $region10: #{tpu_custom_call.1} parent=5 // pred_check_branch
        %169 = sbr.rel (%p166) target = $region12
      $region11: #{tpu_custom_call.1} parent=5 // pred_region
        %s170 = ssub.s32 %s15, 1
        // Predicated region
        $region13: #{tpu_custom_call.1} parent=11 // pred_check
          %p171 = pneg %p62
        $region14: #{tpu_custom_call.1} parent=11 // pred_check_branch
          %173 = sbr.rel (%p171) target = $region16
        $region15: #{tpu_custom_call.1} parent=11 // pred_region
          _
        $region16: #{tpu_custom_call.1} parent=11 // pred_fallthru
          _
        // Predicated region
        $region17: #{tpu_custom_call.1} parent=11 // pred_check
          %p174 = pneg %p83
        $region18: #{tpu_custom_call.1} parent=11 // pred_check_branch
          %176 = sbr.rel (%p174) target = $region20
        $region19: #{tpu_custom_call.1} parent=11 // pred_region
          _
        $region20: #{tpu_custom_call.1} parent=11 // pred_fallthru
          _
        // Predicated region
        $region21: #{tpu_custom_call.1} parent=11 // pred_check
          %p177 = pneg %p104
        $region22: #{tpu_custom_call.1} parent=11 // pred_check_branch
          %179 = sbr.rel (%p177) target = $region24
        $region23: #{tpu_custom_call.1} parent=11 // pred_region
          _
        $region24: #{tpu_custom_call.1} parent=11 // pred_fallthru
          _
      $region12: #{tpu_custom_call.1} parent=5 // pred_fallthru
        _
      %p180 = scmp.lt.s32.totalorder %s15, 2
      // Predicated region
      $region25: #{tpu_custom_call.1} parent=5 // pred_check
        %p181 = pneg %p180
      $region26: #{tpu_custom_call.1} parent=5 // pred_check_branch
        %183 = sbr.rel (%p181) target = $region28
      $region27: #{tpu_custom_call.1} parent=5 // pred_region
        // Predicated region
        $region29: #{tpu_custom_call.1} parent=27 // pred_check
          %p184 = pneg %p35
        $region30: #{tpu_custom_call.1} parent=27 // pred_check_branch
          %186 = sbr.rel (%p184) target = $region32
        $region31: #{tpu_custom_call.1} parent=27 // pred_region
          %p187 = scmp.lt.s32.totalorder %s15, 1
          %s188 = scalar_select %p187, %s15, 1
          %s189 = smul.addr %s188, 16
          %s190 = smul.addr %s189, 8
          %s191 = scalar_lea.vmem %s0, %s190
        $region32: #{tpu_custom_call.1} parent=27 // pred_fallthru
          _
      $region28: #{tpu_custom_call.1} parent=5 // pred_fallthru
        _
      %p192 = scmp.le.s32.totalorder 1, %s15
      %p193 = scmp.lt.s32.totalorder %s15, 3
      %p194 = pnand %p192, %p193
      %p195 = pneg %p194
      // Predicated region
      $region33: #{tpu_custom_call.1} parent=5 // pred_check
        _
      $region34: #{tpu_custom_call.1} parent=5 // pred_check_branch
        %197 = sbr.rel (%p194) target = $region36
      $region35: #{tpu_custom_call.1} parent=5 // pred_region
        %s198 = ssub.s32 %s15, 1
        %p199 = scmp.lt.s32.totalorder %s20, 1
        %s200 = scalar_select %p199, %s20, 1
        %s201 = smul.addr %s200, 16
        %s202 = smul.addr %s201, 8
        %s203 = scalar_lea.vmem %s0, %s202
        %p204 = pneg %p41
        %p205 = pneg %p38
        %p206 = pneg %p62
        %p207 = pneg %p59
        %p208 = pneg %p83
        %p209 = pneg %p80
        %p210 = pneg %p104
        %p211 = pneg %p101
        %p212 = pneg %p130
        %p213 = pneg %p127
        %p214 = scmp.lt.s32.totalorder %s20, 1
        %s215 = scalar_select %p214, %s20, 1
        %s216 = smul.addr %s215, 16
        %s217 = smul.addr %s216, 8
        %s218 = scalar_lea.vmem %s4, %s217
        %p219 = pneg %p156
        %p220 = pneg %p153
        %s221 = sand.u32 %s143, 1
        %s222 = scalar_lea.sflag [#allocation3], %s221
        %s223 = sand.u32 %s143, 1
        %s224 = smul.addr %s223, 512
        %s225 = scalar_lea.vmem [#allocation2], %s224
        %p226 = scmp.lt.s32.totalorder %s20, 1
        %s227 = scalar_select %p226, %s20, 1
        %s228 = smul.addr %s227, 16
        %s229 = smul.addr %s228, 8
        %s230 = scalar_lea.vmem %s0, %s229
        %p231 = scmp.lt.s32.totalorder %s20, 1
        %s232 = scalar_select %p231, %s20, 1
        %s233 = smul.addr %s232, 16
        %s234 = smul.addr %s233, 8
        %s235 = scalar_lea.vmem %s4, %s234
        %v236 = vld [vmem:[%s230] sm:$0xff]
        %v237 = vld [vmem:[%s230 + $0x8] sm:$0xff]
        %v238 = vld [vmem:[%s230 + $0x10] sm:$0xff]
        %v239 = vld [vmem:[%s230 + $0x18] sm:$0xff]
        %v240 = vld [vmem:[%s230 + $0x20] sm:$0xff]
        %v241 = vld [vmem:[%s230 + $0x28] sm:$0xff]
        %v242 = vld [vmem:[%s230 + $0x30] sm:$0xff]
        %v243 = vld [vmem:[%s230 + $0x38] sm:$0xff]
        %v244 = vld [vmem:[%s230 + $0x40] sm:$0xff]
        %v245 = vld [vmem:[%s230 + $0x48] sm:$0xff]
        %v246 = vld [vmem:[%s230 + $0x50] sm:$0xff]
        %v247 = vld [vmem:[%s230 + $0x58] sm:$0xff]
        %v248 = vld [vmem:[%s230 + $0x60] sm:$0xff]
        %v249 = vld [vmem:[%s230 + $0x68] sm:$0xff]
        %v250 = vld [vmem:[%s230 + $0x70] sm:$0xff]
        %v251 = vld [vmem:[%s230 + $0x78] sm:$0xff]
        %v252 = vld [vmem:[%s1] sm:$0xff]
        %v253 = vld [vmem:[%s1 + $0x8] sm:$0xff]
        %v254 = vld [vmem:[%s1 + $0x10] sm:$0xff]
        %v255 = vld [vmem:[%s1 + $0x18] sm:$0xff]
        %vm256 = vcmask 261120
        %v258 = vsel %vm256, %v236, 0
        %v261 = vsel %vm256, %v237, 0
        %v264 = vsel %vm256, %v238, 0
        %v267 = vsel %vm256, %v239, 0
        %v270 = vsel %vm256, %v240, 0
        %v273 = vsel %vm256, %v241, 0
        %v276 = vsel %vm256, %v242, 0
        %v279 = vsel %vm256, %v243, 0
        %v282 = vsel %vm256, %v244, 0
        %v285 = vsel %vm256, %v245, 0
        %v288 = vsel %vm256, %v246, 0
        %v291 = vsel %vm256, %v247, 0
        %v294 = vsel %vm256, %v248, 0
        %v297 = vsel %vm256, %v249, 0
        %v300 = vsel %vm256, %v250, 0
        %v303 = vsel %vm256, %v251, 0
        %305 = vmatprep.subr.mxu0 0.0
        %306 = vmatpush1.msra.mxu0 %v252
        %307 = vmatprep.subr.mxu0 0.0
        %308 = vmatpush1.msra.mxu0 %v253
        %309 = vmatprep.subr.mxu0 0.0
        %310 = vmatpush1.msra.mxu0 %v254
        %311 = vmatprep.subr.mxu0 0.0
        %312 = vmatpush1.msra.mxu0 %v255
        %313 = vmatprep.subr.mxu0 0.0
        %314 = vmatpush1.msra.mxu0 0.0
        %315 = vmatprep.subr.mxu0 0.0
        %316 = vmatpush1.msra.mxu0 0.0
        %317 = vmatprep.subr.mxu0 0.0
        %318 = vmatpush1.msra.mxu0 0.0
        %319 = vmatprep.subr.mxu0 0.0
        %320 = vmatpush1.msra.mxu0 0.0
        %321 = vmatprep.subr.mxu0 0.0
        %322 = vmatpush1.msra.mxu0 0.0
        %323 = vmatprep.subr.mxu0 0.0
        %324 = vmatpush1.msra.mxu0 0.0
        %325 = vmatprep.subr.mxu0 0.0
        %326 = vmatpush1.msra.mxu0 0.0
        %327 = vmatprep.subr.mxu0 0.0
        %328 = vmatpush1.msra.mxu0 0.0
        %329 = vmatprep.subr.mxu0 0.0
        %330 = vmatpush1.msra.mxu0 0.0
        %331 = vmatprep.subr.mxu0 0.0
        %332 = vmatpush1.msra.mxu0 0.0
        %333 = vmatprep.subr.mxu0 0.0
        %334 = vmatpush1.msra.mxu0 0.0
        %335 = vmatprep.subr.mxu0 0.0
        %336 = vmatpush1.msra.mxu0 0.0
        %337 = vmatprep.subr.mxu0 0.0
        %338 = vmatpush1.msra.mxu0 0.0
        %339 = vmatprep.subr.mxu0 0.0
        %340 = vmatpush1.msra.mxu0 0.0
        %341 = vmatprep.subr.mxu0 0.0
        %342 = vmatpush1.msra.mxu0 0.0
        %343 = vmatprep.subr.mxu0 0.0
        %344 = vmatpush1.msra.mxu0 0.0
        %345 = vmatprep.subr.mxu0 0.0
        %346 = vmatpush1.msra.mxu0 0.0
        %347 = vmatprep.subr.mxu0 0.0
        %348 = vmatpush1.msra.mxu0 0.0
        %349 = vmatprep.subr.mxu0 0.0
        %350 = vmatpush1.msra.mxu0 0.0
        %351 = vmatprep.subr.mxu0 0.0
        %352 = vmatpush1.msra.mxu0 0.0
        %353 = vmatprep.subr.mxu0 0.0
        %354 = vmatpush1.msra.mxu0 0.0
        %355 = vmatprep.subr.mxu0 0.0
        %356 = vmatpush1.msra.mxu0 0.0
        %357 = vmatprep.subr.mxu0 0.0
        %358 = vmatpush1.msra.mxu0 0.0
        %359 = vmatprep.subr.mxu0 0.0
        %360 = vmatpush1.msra.mxu0 0.0
        %361 = vmatprep.subr.mxu0 0.0
        %362 = vmatpush1.msra.mxu0 0.0
        %363 = vmatprep.subr.mxu0 0.0
        %364 = vmatpush1.msra.mxu0 0.0
        %365 = vmatprep.subr.mxu0 0.0
        %366 = vmatpush1.msra.mxu0 0.0
        %367 = vmatprep.subr.mxu0 0.0
        %368 = vmatpush1.msra.mxu0 0.0
        %369 = vmatprep.mubr.f32.mxu0 0.0
        %370 = vmatmul.mubr.f32.gmra.mrb[0].mxu0 %v258
        %v371 = vpop.f32.mrb[0].mxu0
        %v372 = vadd.f32 0.0, %v371
        %v373 = vpop.f32.mrb[0].mxu0
        %374 = vmatprep.mubr.f32.mxu0 0.0
        %375 = vmatmul.mubr.f32.gmra.mrb[0].mxu0 %v261
        %v376 = vpop.f32.mrb[0].mxu0
        %v377 = vadd.f32 0.0, %v376
        %v378 = vpop.f32.mrb[0].mxu0
        %379 = vmatprep.mubr.f32.mxu0 0.0
        %380 = vmatmul.mubr.f32.gmra.mrb[0].mxu0 %v264
        %v381 = vpop.f32.mrb[0].mxu0
        %v382 = vadd.f32 0.0, %v381
        %v383 = vpop.f32.mrb[0].mxu0
        %384 = vmatprep.mubr.f32.mxu0 0.0
        %385 = vmatmul.mubr.f32.gmra.mrb[0].mxu0 %v267
        %v386 = vpop.f32.mrb[0].mxu0
        %v387 = vadd.f32 0.0, %v386
        %v388 = vpop.f32.mrb[0].mxu0
        %389 = vmatprep.mubr.f32.mxu0 0.0
        %390 = vmatmul.mubr.f32.gmra.mrb[0].mxu0 %v270
        %v391 = vpop.f32.mrb[0].mxu0
        %v392 = vadd.f32 0.0, %v391
        %v393 = vpop.f32.mrb[0].mxu0
        %394 = vmatprep.mubr.f32.mxu0 0.0
        %395 = vmatmul.mubr.f32.gmra.mrb[0].mxu0 %v273
        %v396 = vpop.f32.mrb[0].mxu0
        %v397 = vadd.f32 0.0, %v396
        %v398 = vpop.f32.mrb[0].mxu0
        %399 = vmatprep.mubr.f32.mxu0 0.0
        %400 = vmatmul.mubr.f32.gmra.mrb[0].mxu0 %v276
        %v401 = vpop.f32.mrb[0].mxu0
        %v402 = vadd.f32 0.0, %v401
        %v403 = vpop.f32.mrb[0].mxu0
        %404 = vmatprep.mubr.f32.mxu0 0.0
        %405 = vmatmul.mubr.f32.gmra.mrb[0].mxu0 %v279
        %v406 = vpop.f32.mrb[0].mxu0
        %v407 = vadd.f32 0.0, %v406
        %v408 = vpop.f32.mrb[0].mxu0
        %409 = vmatprep.mubr.f32.mxu0 0.0
        %410 = vmatmul.mubr.f32.gmra.mrb[0].mxu0 %v282
        %v411 = vpop.f32.mrb[0].mxu0
        %v412 = vadd.f32 0.0, %v411
        %v413 = vpop.f32.mrb[0].mxu0
        %414 = vmatprep.mubr.f32.mxu0 0.0
        %415 = vmatmul.mubr.f32.gmra.mrb[0].mxu0 %v285
        %v416 = vpop.f32.mrb[0].mxu0
        %v417 = vadd.f32 0.0, %v416
        %v418 = vpop.f32.mrb[0].mxu0
        %419 = vmatprep.mubr.f32.mxu0 0.0
        %420 = vmatmul.mubr.f32.gmra.mrb[0].mxu0 %v288
        %v421 = vpop.f32.mrb[0].mxu0
        %v422 = vadd.f32 0.0, %v421
        %v423 = vpop.f32.mrb[0].mxu0
        %424 = vmatprep.mubr.f32.mxu0 0.0
        %425 = vmatmul.mubr.f32.gmra.mrb[0].mxu0 %v291
        %v426 = vpop.f32.mrb[0].mxu0
        %v427 = vadd.f32 0.0, %v426
        %v428 = vpop.f32.mrb[0].mxu0
        %429 = vmatprep.mubr.f32.mxu0 0.0
        %430 = vmatmul.mubr.f32.gmra.mrb[0].mxu0 %v294
        %v431 = vpop.f32.mrb[0].mxu0
        %v432 = vadd.f32 0.0, %v431
        %v433 = vpop.f32.mrb[0].mxu0
        %434 = vmatprep.mubr.f32.mxu0 0.0
        %435 = vmatmul.mubr.f32.gmra.mrb[0].mxu0 %v297
        %v436 = vpop.f32.mrb[0].mxu0
        %v437 = vadd.f32 0.0, %v436
        %v438 = vpop.f32.mrb[0].mxu0
        %439 = vmatprep.mubr.f32.mxu0 0.0
        %440 = vmatmul.mubr.f32.gmra.mrb[0].mxu0 %v300
        %v441 = vpop.f32.mrb[0].mxu0
        %v442 = vadd.f32 0.0, %v441
        %v443 = vpop.f32.mrb[0].mxu0
        %444 = vmatprep.mubr.f32.mxu0 0.0
        %445 = vmatmul.mubr.f32.gmra.mrb[0].mxu0 %v303
        %v446 = vpop.f32.mrb[0].mxu0
        %v447 = vadd.f32 0.0, %v446
        %v448 = vpop.f32.mrb[0].mxu0
        %449 = vdwg.mxu0
        %466 = vrot.lane.b32.xlu0 %v372, 120
        %v467 = vpop.permute.xlu0 %466
        %468 = vrot.lane.b32.xlu0 %v377, 120
        %v469 = vpop.permute.xlu0 %468
        %470 = vrot.lane.b32.xlu0 %v382, 120
        %v471 = vpop.permute.xlu0 %470
        %472 = vrot.lane.b32.xlu0 %v387, 120
        %v473 = vpop.permute.xlu0 %472
        %474 = vrot.lane.b32.xlu0 %v392, 120
        %v475 = vpop.permute.xlu0 %474
        %476 = vrot.lane.b32.xlu0 %v397, 120
        %v477 = vpop.permute.xlu0 %476
        %478 = vrot.lane.b32.xlu0 %v402, 120
        %v479 = vpop.permute.xlu0 %478
        %480 = vrot.lane.b32.xlu0 %v407, 120
        %v481 = vpop.permute.xlu0 %480
        %482 = vrot.lane.b32.xlu0 %v412, 120
        %v483 = vpop.permute.xlu0 %482
        %484 = vrot.lane.b32.xlu0 %v417, 120
        %v485 = vpop.permute.xlu0 %484
        %486 = vrot.lane.b32.xlu0 %v422, 120
        %v487 = vpop.permute.xlu0 %486
        %488 = vrot.lane.b32.xlu0 %v427, 120
        %v489 = vpop.permute.xlu0 %488
        %490 = vrot.lane.b32.xlu0 %v432, 120
        %v491 = vpop.permute.xlu0 %490
        %492 = vrot.lane.b32.xlu0 %v437, 120
        %v493 = vpop.permute.xlu0 %492
        %494 = vrot.lane.b32.xlu0 %v442, 120
        %v495 = vpop.permute.xlu0 %494
        %496 = vrot.lane.b32.xlu0 %v447, 120
        %v497 = vpop.permute.xlu0 %496
        %vm498 = vcmask 64512
        %v499 = vsel %vm498, %v372, 0
        %v501 = vsel %vm498, %v377, 0
        %v503 = vsel %vm498, %v382, 0
        %v505 = vsel %vm498, %v387, 0
        %v507 = vsel %vm498, %v392, 0
        %v509 = vsel %vm498, %v397, 0
        %v511 = vsel %vm498, %v402, 0
        %v513 = vsel %vm498, %v407, 0
        %v515 = vsel %vm498, %v412, 0
        %v517 = vsel %vm498, %v417, 0
        %v519 = vsel %vm498, %v422, 0
        %v521 = vsel %vm498, %v427, 0
        %v523 = vsel %vm498, %v432, 0
        %v525 = vsel %vm498, %v437, 0
        %v527 = vsel %vm498, %v442, 0
        %v529 = vsel %vm498, %v447, 0
        %v531 = vsel %vm498, %v467, 0
        %v533 = vsel %vm498, %v469, 0
        %v535 = vsel %vm498, %v471, 0
        %v537 = vsel %vm498, %v473, 0
        %v539 = vsel %vm498, %v475, 0
        %v541 = vsel %vm498, %v477, 0
        %v543 = vsel %vm498, %v479, 0
        %v545 = vsel %vm498, %v481, 0
        %v547 = vsel %vm498, %v483, 0
        %v549 = vsel %vm498, %v485, 0
        %v551 = vsel %vm498, %v487, 0
        %v553 = vsel %vm498, %v489, 0
        %v555 = vsel %vm498, %v491, 0
        %v557 = vsel %vm498, %v493, 0
        %v559 = vsel %vm498, %v495, 0
        %v561 = vsel %vm498, %v497, 0
        %563 = vmatprep.subr.mxu0 0.0
        %564 = vmatpush1.xpose.msra.mxu0 %v531
        %565 = vmatprep.subr.mxu0 0.0
        %566 = vmatpush1.xpose.msra.mxu0 %v533
        %567 = vmatprep.subr.mxu0 0.0
        %568 = vmatpush1.xpose.msra.mxu0 %v535
        %569 = vmatprep.subr.mxu0 0.0
        %570 = vmatpush1.xpose.msra.mxu0 %v537
        %571 = vmatprep.subr.mxu0 0.0
        %572 = vmatpush1.xpose.msra.mxu0 %v539
        %573 = vmatprep.subr.mxu0 0.0
        %574 = vmatpush1.xpose.msra.mxu0 %v541
        %575 = vmatprep.subr.mxu0 0.0
        %576 = vmatpush1.xpose.msra.mxu0 %v543
        %577 = vmatprep.subr.mxu0 0.0
        %578 = vmatpush1.xpose.msra.mxu0 %v545
        %579 = vmatprep.subr.mxu0 0.0
        %580 = vmatpush1.xpose.msra.mxu0 %v547
        %581 = vmatprep.subr.mxu0 0.0
        %582 = vmatpush1.xpose.msra.mxu0 %v549
        %583 = vmatprep.subr.mxu0 0.0
        %584 = vmatpush1.xpose.msra.mxu0 %v551
        %585 = vmatprep.subr.mxu0 0.0
        %586 = vmatpush1.xpose.msra.mxu0 %v553
        %587 = vmatprep.subr.mxu0 0.0
        %588 = vmatpush1.xpose.msra.mxu0 %v555
        %589 = vmatprep.subr.mxu0 0.0
        %590 = vmatpush1.xpose.msra.mxu0 %v557
        %591 = vmatprep.subr.mxu0 0.0
        %592 = vmatpush1.xpose.msra.mxu0 %v559
        %593 = vmatprep.subr.mxu0 0.0
        %594 = vmatpush1.xpose.msra.mxu0 %v561
        %595 = vmatprep.subr.mxu0 0.0
        %596 = vmatpush1.xpose.msra.mxu0 0.0
        %597 = vmatprep.subr.mxu0 0.0
        %598 = vmatpush1.xpose.msra.mxu0 0.0
        %599 = vmatprep.subr.mxu0 0.0
        %600 = vmatpush1.xpose.msra.mxu0 0.0
        %601 = vmatprep.subr.mxu0 0.0
        %602 = vmatpush1.xpose.msra.mxu0 0.0
        %603 = vmatprep.subr.mxu0 0.0
        %604 = vmatpush1.xpose.msra.mxu0 0.0
        %605 = vmatprep.subr.mxu0 0.0
        %606 = vmatpush1.xpose.msra.mxu0 0.0
        %607 = vmatprep.subr.mxu0 0.0
        %608 = vmatpush1.xpose.msra.mxu0 0.0
        %609 = vmatprep.subr.mxu0 0.0
        %610 = vmatpush1.xpose.msra.mxu0 0.0
        %611 = vmatprep.subr.mxu0 0.0
        %612 = vmatpush1.xpose.msra.mxu0 0.0
        %613 = vmatprep.subr.mxu0 0.0
        %614 = vmatpush1.xpose.msra.mxu0 0.0
        %615 = vmatprep.subr.mxu0 0.0
        %616 = vmatpush1.xpose.msra.mxu0 0.0
        %617 = vmatprep.subr.mxu0 0.0
        %618 = vmatpush1.xpose.msra.mxu0 0.0
        %619 = vmatprep.subr.mxu0 0.0
        %620 = vmatpush1.xpose.msra.mxu0 0.0
        %621 = vmatprep.subr.mxu0 0.0
        %622 = vmatpush1.xpose.msra.mxu0 0.0
        %623 = vmatprep.subr.mxu0 0.0
        %624 = vmatpush1.xpose.msra.mxu0 0.0
        %625 = vmatprep.subr.mxu0 0.0
        %626 = vmatpush1.xpose.msra.mxu0 0.0
        %627 = vmatprep.mubr.f32.mxu0 0.0
        %628 = vmatmul.mubr.f32.gmra.mrb[0].mxu0 %v499
        %v629 = vpop.f32.mrb[0].mxu0
        %v630 = vadd.f32 0.0, %v629
        %v631 = vpop.f32.mrb[0].mxu0
        %632 = vmatprep.mubr.f32.mxu0 0.0
        %633 = vmatmul.mubr.f32.gmra.mrb[0].mxu0 %v501
        %v634 = vpop.f32.mrb[0].mxu0
        %v635 = vadd.f32 0.0, %v634
        %v636 = vpop.f32.mrb[0].mxu0
        %637 = vmatprep.mubr.f32.mxu0 0.0
        %638 = vmatmul.mubr.f32.gmra.mrb[0].mxu0 %v503
        %v639 = vpop.f32.mrb[0].mxu0
        %v640 = vadd.f32 0.0, %v639
        %v641 = vpop.f32.mrb[0].mxu0
        %642 = vmatprep.mubr.f32.mxu0 0.0
        %643 = vmatmul.mubr.f32.gmra.mrb[0].mxu0 %v505
        %v644 = vpop.f32.mrb[0].mxu0
        %v645 = vadd.f32 0.0, %v644
        %v646 = vpop.f32.mrb[0].mxu0
        %647 = vmatprep.mubr.f32.mxu0 0.0
        %648 = vmatmul.mubr.f32.gmra.mrb[0].mxu0 %v507
        %v649 = vpop.f32.mrb[0].mxu0
        %v650 = vadd.f32 0.0, %v649
        %v651 = vpop.f32.mrb[0].mxu0
        %652 = vmatprep.mubr.f32.mxu0 0.0
        %653 = vmatmul.mubr.f32.gmra.mrb[0].mxu0 %v509
        %v654 = vpop.f32.mrb[0].mxu0
        %v655 = vadd.f32 0.0, %v654
        %v656 = vpop.f32.mrb[0].mxu0
        %657 = vmatprep.mubr.f32.mxu0 0.0
        %658 = vmatmul.mubr.f32.gmra.mrb[0].mxu0 %v511
        %v659 = vpop.f32.mrb[0].mxu0
        %v660 = vadd.f32 0.0, %v659
        %v661 = vpop.f32.mrb[0].mxu0
        %662 = vmatprep.mubr.f32.mxu0 0.0
        %663 = vmatmul.mubr.f32.gmra.mrb[0].mxu0 %v513
        %v664 = vpop.f32.mrb[0].mxu0
        %v665 = vadd.f32 0.0, %v664
        %v666 = vpop.f32.mrb[0].mxu0
        %667 = vmatprep.mubr.f32.mxu0 0.0
        %668 = vmatmul.mubr.f32.gmra.mrb[0].mxu0 %v515
        %v669 = vpop.f32.mrb[0].mxu0
        %v670 = vadd.f32 0.0, %v669
        %v671 = vpop.f32.mrb[0].mxu0
        %672 = vmatprep.mubr.f32.mxu0 0.0
        %673 = vmatmul.mubr.f32.gmra.mrb[0].mxu0 %v517
        %v674 = vpop.f32.mrb[0].mxu0
        %v675 = vadd.f32 0.0, %v674
        %v676 = vpop.f32.mrb[0].mxu0
        %677 = vmatprep.mubr.f32.mxu0 0.0
        %678 = vmatmul.mubr.f32.gmra.mrb[0].mxu0 %v519
        %v679 = vpop.f32.mrb[0].mxu0
        %v680 = vadd.f32 0.0, %v679
        %v681 = vpop.f32.mrb[0].mxu0
        %682 = vmatprep.mubr.f32.mxu0 0.0
        %683 = vmatmul.mubr.f32.gmra.mrb[0].mxu0 %v521
        %v684 = vpop.f32.mrb[0].mxu0
        %v685 = vadd.f32 0.0, %v684
        %v686 = vpop.f32.mrb[0].mxu0
        %687 = vmatprep.mubr.f32.mxu0 0.0
        %688 = vmatmul.mubr.f32.gmra.mrb[0].mxu0 %v523
        %v689 = vpop.f32.mrb[0].mxu0
        %v690 = vadd.f32 0.0, %v689
        %v691 = vpop.f32.mrb[0].mxu0
        %692 = vmatprep.mubr.f32.mxu0 0.0
        %693 = vmatmul.mubr.f32.gmra.mrb[0].mxu0 %v525
        %v694 = vpop.f32.mrb[0].mxu0
        %v695 = vadd.f32 0.0, %v694
        %v696 = vpop.f32.mrb[0].mxu0
        %697 = vmatprep.mubr.f32.mxu0 0.0
        %698 = vmatmul.mubr.f32.gmra.mrb[0].mxu0 %v527
        %v699 = vpop.f32.mrb[0].mxu0
        %v700 = vadd.f32 0.0, %v699
        %v701 = vpop.f32.mrb[0].mxu0
        %702 = vmatprep.mubr.f32.mxu0 0.0
        %703 = vmatmul.mubr.f32.gmra.mrb[0].mxu0 %v529
        %v704 = vpop.f32.mrb[0].mxu0
        %v705 = vadd.f32 0.0, %v704
        %v706 = vpop.f32.mrb[0].mxu0
        %707 = vdwg.mxu0
        %v708 = vlaneseq
        %v709 = vand.u32 %v708, 127
        %vm710 = vcmp.lt.s32.totalorder %v709, 8
        %v711 = vsel %vm710, %v630, -1e+30
        %v712 = vsel %vm710, %v635, -1e+30
        %v713 = vsel %vm710, %v640, -1e+30
        %v714 = vsel %vm710, %v645, -1e+30
        %v715 = vsel %vm710, %v650, -1e+30
        %v716 = vsel %vm710, %v655, -1e+30
        %v717 = vsel %vm710, %v660, -1e+30
        %v718 = vsel %vm710, %v665, -1e+30
        %v719 = vsel %vm710, %v670, -1e+30
        %v720 = vsel %vm710, %v675, -1e+30
        %v721 = vsel %vm710, %v680, -1e+30
        %v722 = vsel %vm710, %v685, -1e+30
        %v723 = vsel %vm710, %v690, -1e+30
        %v724 = vsel %vm710, %v695, -1e+30
        %v725 = vsel %vm710, %v700, -1e+30
        %v726 = vsel %vm710, %v705, -1e+30
        %727 = vmax.xlane.f32.xlu0 %v711
        %v728 = vpop.xlane.xlu0 %727
        %729 = vmax.xlane.f32.xlu0 %v712
        %v730 = vpop.xlane.xlu0 %729
        %731 = vmax.xlane.f32.xlu0 %v713
        %v732 = vpop.xlane.xlu0 %731
        %733 = vmax.xlane.f32.xlu0 %v714
        %v734 = vpop.xlane.xlu0 %733
        %735 = vmax.xlane.f32.xlu0 %v715
        %v736 = vpop.xlane.xlu0 %735
        %737 = vmax.xlane.f32.xlu0 %v716
        %v738 = vpop.xlane.xlu0 %737
        %739 = vmax.xlane.f32.xlu0 %v717
        %v740 = vpop.xlane.xlu0 %739
        %741 = vmax.xlane.f32.xlu0 %v718
        %v742 = vpop.xlane.xlu0 %741
        %743 = vmax.xlane.f32.xlu0 %v719
        %v744 = vpop.xlane.xlu0 %743
        %745 = vmax.xlane.f32.xlu0 %v720
        %v746 = vpop.xlane.xlu0 %745
        %747 = vmax.xlane.f32.xlu0 %v721
        %v748 = vpop.xlane.xlu0 %747
        %749 = vmax.xlane.f32.xlu0 %v722
        %v750 = vpop.xlane.xlu0 %749
        %751 = vmax.xlane.f32.xlu0 %v723
        %v752 = vpop.xlane.xlu0 %751
        %753 = vmax.xlane.f32.xlu0 %v724
        %v754 = vpop.xlane.xlu0 %753
        %755 = vmax.xlane.f32.xlu0 %v725
        %v756 = vpop.xlane.xlu0 %755
        %757 = vmax.xlane.f32.xlu0 %v726
        %v758 = vpop.xlane.xlu0 %757
        %v759 = vsub.f32 %v711, %v728
        %v760 = vsub.f32 %v712, %v730
        %v761 = vsub.f32 %v713, %v732
        %v762 = vsub.f32 %v714, %v734
        %v763 = vsub.f32 %v715, %v736
        %v764 = vsub.f32 %v716, %v738
        %v765 = vsub.f32 %v717, %v740
        %v766 = vsub.f32 %v718, %v742
        %v767 = vsub.f32 %v719, %v744
        %v768 = vsub.f32 %v720, %v746
        %v769 = vsub.f32 %v721, %v748
        %v770 = vsub.f32 %v722, %v750
        %v771 = vsub.f32 %v723, %v752
        %v772 = vsub.f32 %v724, %v754
        %v773 = vsub.f32 %v725, %v756
        %v774 = vsub.f32 %v726, %v758
        %v775 = vmul.f32 %v759, 1.442695
        %v776 = vpow.pop %v775
        %v777 = vmul.f32 %v760, 1.442695
        %v778 = vpow.pop %v777
        %v779 = vmul.f32 %v761, 1.442695
        %v780 = vpow.pop %v779
        %v781 = vmul.f32 %v762, 1.442695
        %v782 = vpow.pop %v781
        %v783 = vmul.f32 %v763, 1.442695
        %v784 = vpow.pop %v783
        %v785 = vmul.f32 %v764, 1.442695
        %v786 = vpow.pop %v785
        %v787 = vmul.f32 %v765, 1.442695
        %v788 = vpow.pop %v787
        %v789 = vmul.f32 %v766, 1.442695
        %v790 = vpow.pop %v789
        %v791 = vmul.f32 %v767, 1.442695
        %v792 = vpow.pop %v791
        %v793 = vmul.f32 %v768, 1.442695
        %v794 = vpow.pop %v793
        %v795 = vmul.f32 %v769, 1.442695
        %v796 = vpow.pop %v795
        %v797 = vmul.f32 %v770, 1.442695
        %v798 = vpow.pop %v797
        %v799 = vmul.f32 %v771, 1.442695
        %v800 = vpow.pop %v799
        %v801 = vmul.f32 %v772, 1.442695
        %v802 = vpow.pop %v801
        %v803 = vmul.f32 %v773, 1.442695
        %v804 = vpow.pop %v803
        %v805 = vmul.f32 %v774, 1.442695
        %v806 = vpow.pop %v805
        %807 = vadd.xlane.f32.xlu0 %v776
        %v808 = vpop.xlane.xlu0 %807
        %809 = vadd.xlane.f32.xlu0 %v778
        %v810 = vpop.xlane.xlu0 %809
        %811 = vadd.xlane.f32.xlu0 %v780
        %v812 = vpop.xlane.xlu0 %811
        %813 = vadd.xlane.f32.xlu0 %v782
        %v814 = vpop.xlane.xlu0 %813
        %815 = vadd.xlane.f32.xlu0 %v784
        %v816 = vpop.xlane.xlu0 %815
        %817 = vadd.xlane.f32.xlu0 %v786
        %v818 = vpop.xlane.xlu0 %817
        %819 = vadd.xlane.f32.xlu0 %v788
        %v820 = vpop.xlane.xlu0 %819
        %821 = vadd.xlane.f32.xlu0 %v790
        %v822 = vpop.xlane.xlu0 %821
        %823 = vadd.xlane.f32.xlu0 %v792
        %v824 = vpop.xlane.xlu0 %823
        %825 = vadd.xlane.f32.xlu0 %v794
        %v826 = vpop.xlane.xlu0 %825
        %827 = vadd.xlane.f32.xlu0 %v796
        %v828 = vpop.xlane.xlu0 %827
        %829 = vadd.xlane.f32.xlu0 %v798
        %v830 = vpop.xlane.xlu0 %829
        %831 = vadd.xlane.f32.xlu0 %v800
        %v832 = vpop.xlane.xlu0 %831
        %833 = vadd.xlane.f32.xlu0 %v802
        %v834 = vpop.xlane.xlu0 %833
        %835 = vadd.xlane.f32.xlu0 %v804
        %v836 = vpop.xlane.xlu0 %835
        %837 = vadd.xlane.f32.xlu0 %v806
        %v838 = vpop.xlane.xlu0 %837
        %v839 = vrcp.pop %v808
        %v840 = vrcp.pop %v810
        %v841 = vrcp.pop %v812
        %v842 = vrcp.pop %v814
        %v843 = vrcp.pop %v816
        %v844 = vrcp.pop %v818
        %v845 = vrcp.pop %v820
        %v846 = vrcp.pop %v822
        %v847 = vrcp.pop %v824
        %v848 = vrcp.pop %v826
        %v849 = vrcp.pop %v828
        %v850 = vrcp.pop %v830
        %v851 = vrcp.pop %v832
        %v852 = vrcp.pop %v834
        %v853 = vrcp.pop %v836
        %v854 = vrcp.pop %v838
        %v855 = vmul.f32 %v776, %v839
        %v856 = vmul.f32 %v778, %v840
        %v857 = vmul.f32 %v780, %v841
        %v858 = vmul.f32 %v782, %v842
        %v859 = vmul.f32 %v784, %v843
        %v860 = vmul.f32 %v786, %v844
        %v861 = vmul.f32 %v788, %v845
        %v862 = vmul.f32 %v790, %v846
        %v863 = vmul.f32 %v792, %v847
        %v864 = vmul.f32 %v794, %v848
        %v865 = vmul.f32 %v796, %v849
        %v866 = vmul.f32 %v798, %v850
        %v867 = vmul.f32 %v800, %v851
        %v868 = vmul.f32 %v802, %v852
        %v869 = vmul.f32 %v804, %v853
        %v870 = vmul.f32 %v806, %v854
        %871 = vst [vmem:[%s225] sm:$0xff] %v855
        %872 = vst [vmem:[%s225 + $0x8] sm:$0xff] %v856
        %873 = vst [vmem:[%s225 + $0x10] sm:$0xff] %v857
        %874 = vst [vmem:[%s225 + $0x18] sm:$0xff] %v858
        %875 = vst [vmem:[%s225 + $0x20] sm:$0xff] %v859
        %876 = vst [vmem:[%s225 + $0x28] sm:$0xff] %v860
        %877 = vst [vmem:[%s225 + $0x30] sm:$0xff] %v861
        %878 = vst [vmem:[%s225 + $0x38] sm:$0xff] %v862
        %879 = vst [vmem:[%s225 + $0x40] sm:$0xff] %v863
        %880 = vst [vmem:[%s225 + $0x48] sm:$0xff] %v864
        %881 = vst [vmem:[%s225 + $0x50] sm:$0xff] %v865
        %882 = vst [vmem:[%s225 + $0x58] sm:$0xff] %v866
        %883 = vst [vmem:[%s225 + $0x60] sm:$0xff] %v867
        %884 = vst [vmem:[%s225 + $0x68] sm:$0xff] %v868
        %885 = vst [vmem:[%s225 + $0x70] sm:$0xff] %v869
        %886 = vst [vmem:[%s225 + $0x78] sm:$0xff] %v870
        %887 = vrot.lane.b32.xlu0 %v372, 112
        %v888 = vpop.permute.xlu0 %887
        %889 = vrot.lane.b32.xlu0 %v377, 112
        %v890 = vpop.permute.xlu0 %889
        %891 = vrot.lane.b32.xlu0 %v382, 112
        %v892 = vpop.permute.xlu0 %891
        %893 = vrot.lane.b32.xlu0 %v387, 112
        %v894 = vpop.permute.xlu0 %893
        %895 = vrot.lane.b32.xlu0 %v392, 112
        %v896 = vpop.permute.xlu0 %895
        %897 = vrot.lane.b32.xlu0 %v397, 112
        %v898 = vpop.permute.xlu0 %897
        %899 = vrot.lane.b32.xlu0 %v402, 112
        %v900 = vpop.permute.xlu0 %899
        %901 = vrot.lane.b32.xlu0 %v407, 112
        %v902 = vpop.permute.xlu0 %901
        %903 = vrot.lane.b32.xlu0 %v412, 112
        %v904 = vpop.permute.xlu0 %903
        %905 = vrot.lane.b32.xlu0 %v417, 112
        %v906 = vpop.permute.xlu0 %905
        %907 = vrot.lane.b32.xlu0 %v422, 112
        %v908 = vpop.permute.xlu0 %907
        %909 = vrot.lane.b32.xlu0 %v427, 112
        %v910 = vpop.permute.xlu0 %909
        %911 = vrot.lane.b32.xlu0 %v432, 112
        %v912 = vpop.permute.xlu0 %911
        %913 = vrot.lane.b32.xlu0 %v437, 112
        %v914 = vpop.permute.xlu0 %913
        %915 = vrot.lane.b32.xlu0 %v442, 112
        %v916 = vpop.permute.xlu0 %915
        %917 = vrot.lane.b32.xlu0 %v447, 112
        %v918 = vpop.permute.xlu0 %917
        %935 = vmatprep.subr.mxu0 0.0
        %936 = vmatpush1.msra.mxu0 %v888
        %937 = vmatprep.subr.mxu0 0.0
        %938 = vmatpush1.msra.mxu0 %v890
        %939 = vmatprep.subr.mxu0 0.0
        %940 = vmatpush1.msra.mxu0 %v892
        %941 = vmatprep.subr.mxu0 0.0
        %942 = vmatpush1.msra.mxu0 %v894
        %943 = vmatprep.subr.mxu0 0.0
        %944 = vmatpush1.msra.mxu0 %v896
        %945 = vmatprep.subr.mxu0 0.0
        %946 = vmatpush1.msra.mxu0 %v898
        %947 = vmatprep.subr.mxu0 0.0
        %948 = vmatpush1.msra.mxu0 %v900
        %949 = vmatprep.subr.mxu0 0.0
        %950 = vmatpush1.msra.mxu0 %v902
        %951 = vmatprep.subr.mxu0 0.0
        %952 = vmatpush1.msra.mxu0 %v904
        %953 = vmatprep.subr.mxu0 0.0
        %954 = vmatpush1.msra.mxu0 %v906
        %955 = vmatprep.subr.mxu0 0.0
        %956 = vmatpush1.msra.mxu0 %v908
        %957 = vmatprep.subr.mxu0 0.0
        %958 = vmatpush1.msra.mxu0 %v910
        %959 = vmatprep.subr.mxu0 0.0
        %960 = vmatpush1.msra.mxu0 %v912
        %961 = vmatprep.subr.mxu0 0.0
        %962 = vmatpush1.msra.mxu0 %v914
        %963 = vmatprep.subr.mxu0 0.0
        %964 = vmatpush1.msra.mxu0 %v916
        %965 = vmatprep.subr.mxu0 0.0
        %966 = vmatpush1.msra.mxu0 %v918
        %967 = vmatprep.subr.mxu0 0.0
        %968 = vmatpush1.msra.mxu0 0.0
        %969 = vmatprep.subr.mxu0 0.0
        %970 = vmatpush1.msra.mxu0 0.0
        %971 = vmatprep.subr.mxu0 0.0
        %972 = vmatpush1.msra.mxu0 0.0
        %973 = vmatprep.subr.mxu0 0.0
        %974 = vmatpush1.msra.mxu0 0.0
        %975 = vmatprep.subr.mxu0 0.0
        %976 = vmatpush1.msra.mxu0 0.0
        %977 = vmatprep.subr.mxu0 0.0
        %978 = vmatpush1.msra.mxu0 0.0
        %979 = vmatprep.subr.mxu0 0.0
        %980 = vmatpush1.msra.mxu0 0.0
        %981 = vmatprep.subr.mxu0 0.0
        %982 = vmatpush1.msra.mxu0 0.0
        %983 = vmatprep.subr.mxu0 0.0
        %984 = vmatpush1.msra.mxu0 0.0
        %985 = vmatprep.subr.mxu0 0.0
        %986 = vmatpush1.msra.mxu0 0.0
        %987 = vmatprep.subr.mxu0 0.0
        %988 = vmatpush1.msra.mxu0 0.0
        %989 = vmatprep.subr.mxu0 0.0
        %990 = vmatpush1.msra.mxu0 0.0
        %991 = vmatprep.subr.mxu0 0.0
        %992 = vmatpush1.msra.mxu0 0.0
        %993 = vmatprep.subr.mxu0 0.0
        %994 = vmatpush1.msra.mxu0 0.0
        %995 = vmatprep.subr.mxu0 0.0
        %996 = vmatpush1.msra.mxu0 0.0
        %997 = vmatprep.subr.mxu0 0.0
        %998 = vmatpush1.msra.mxu0 0.0
        %999 = vmatprep.mubr.f32.mxu0 0.0
        %1000 = vmatmul.mubr.f32.gmra.mrb[0].mxu0 %v855
        %v1001 = vpop.f32.mrb[0].mxu0
        %v1002 = vadd.f32 0.0, %v1001
        %v1003 = vpop.f32.mrb[0].mxu0
        %1004 = vmatprep.mubr.f32.mxu0 0.0
        %1005 = vmatmul.mubr.f32.gmra.mrb[0].mxu0 %v856
        %v1006 = vpop.f32.mrb[0].mxu0
        %v1007 = vadd.f32 0.0, %v1006
        %v1008 = vpop.f32.mrb[0].mxu0
        %1009 = vmatprep.mubr.f32.mxu0 0.0
        %1010 = vmatmul.mubr.f32.gmra.mrb[0].mxu0 %v857
        %v1011 = vpop.f32.mrb[0].mxu0
        %v1012 = vadd.f32 0.0, %v1011
        %v1013 = vpop.f32.mrb[0].mxu0
        %1014 = vmatprep.mubr.f32.mxu0 0.0
        %1015 = vmatmul.mubr.f32.gmra.mrb[0].mxu0 %v858
        %v1016 = vpop.f32.mrb[0].mxu0
        %v1017 = vadd.f32 0.0, %v1016
        %v1018 = vpop.f32.mrb[0].mxu0
        %1019 = vmatprep.mubr.f32.mxu0 0.0
        %1020 = vmatmul.mubr.f32.gmra.mrb[0].mxu0 %v859
        %v1021 = vpop.f32.mrb[0].mxu0
        %v1022 = vadd.f32 0.0, %v1021
        %v1023 = vpop.f32.mrb[0].mxu0
        %1024 = vmatprep.mubr.f32.mxu0 0.0
        %1025 = vmatmul.mubr.f32.gmra.mrb[0].mxu0 %v860
        %v1026 = vpop.f32.mrb[0].mxu0
        %v1027 = vadd.f32 0.0, %v1026
        %v1028 = vpop.f32.mrb[0].mxu0
        %1029 = vmatprep.mubr.f32.mxu0 0.0
        %1030 = vmatmul.mubr.f32.gmra.mrb[0].mxu0 %v861
        %v1031 = vpop.f32.mrb[0].mxu0
        %v1032 = vadd.f32 0.0, %v1031
        %v1033 = vpop.f32.mrb[0].mxu0
        %1034 = vmatprep.mubr.f32.mxu0 0.0
        %1035 = vmatmul.mubr.f32.gmra.mrb[0].mxu0 %v862
        %v1036 = vpop.f32.mrb[0].mxu0
        %v1037 = vadd.f32 0.0, %v1036
        %v1038 = vpop.f32.mrb[0].mxu0
        %1039 = vmatprep.mubr.f32.mxu0 0.0
        %1040 = vmatmul.mubr.f32.gmra.mrb[0].mxu0 %v863
        %v1041 = vpop.f32.mrb[0].mxu0
        %v1042 = vadd.f32 0.0, %v1041
        %v1043 = vpop.f32.mrb[0].mxu0
        %1044 = vmatprep.mubr.f32.mxu0 0.0
        %1045 = vmatmul.mubr.f32.gmra.mrb[0].mxu0 %v864
        %v1046 = vpop.f32.mrb[0].mxu0
        %v1047 = vadd.f32 0.0, %v1046
        %v1048 = vpop.f32.mrb[0].mxu0
        %1049 = vmatprep.mubr.f32.mxu0 0.0
        %1050 = vmatmul.mubr.f32.gmra.mrb[0].mxu0 %v865
        %v1051 = vpop.f32.mrb[0].mxu0
        %v1052 = vadd.f32 0.0, %v1051
        %v1053 = vpop.f32.mrb[0].mxu0
        %1054 = vmatprep.mubr.f32.mxu0 0.0
        %1055 = vmatmul.mubr.f32.gmra.mrb[0].mxu0 %v866
        %v1056 = vpop.f32.mrb[0].mxu0
        %v1057 = vadd.f32 0.0, %v1056
        %v1058 = vpop.f32.mrb[0].mxu0
        %1059 = vmatprep.mubr.f32.mxu0 0.0
        %1060 = vmatmul.mubr.f32.gmra.mrb[0].mxu0 %v867
        %v1061 = vpop.f32.mrb[0].mxu0
        %v1062 = vadd.f32 0.0, %v1061
        %v1063 = vpop.f32.mrb[0].mxu0
        %1064 = vmatprep.mubr.f32.mxu0 0.0
        %1065 = vmatmul.mubr.f32.gmra.mrb[0].mxu0 %v868
        %v1066 = vpop.f32.mrb[0].mxu0
        %v1067 = vadd.f32 0.0, %v1066
        %v1068 = vpop.f32.mrb[0].mxu0
        %1069 = vmatprep.mubr.f32.mxu0 0.0
        %1070 = vmatmul.mubr.f32.gmra.mrb[0].mxu0 %v869
        %v1071 = vpop.f32.mrb[0].mxu0
        %v1072 = vadd.f32 0.0, %v1071
        %v1073 = vpop.f32.mrb[0].mxu0
        %1074 = vmatprep.mubr.f32.mxu0 0.0
        %1075 = vmatmul.mubr.f32.gmra.mrb[0].mxu0 %v870
        %v1076 = vpop.f32.mrb[0].mxu0
        %v1077 = vadd.f32 0.0, %v1076
        %v1078 = vpop.f32.mrb[0].mxu0
        %1079 = vdwg.mxu0
        %s1080 = scalar_lea.vmem %s1, 32
        %v1081 = vld [vmem:[%s1080] sm:$0xff]
        %v1082 = vld [vmem:[%s1080 + $0x8] sm:$0xff]
        %v1083 = vld [vmem:[%s1080 + $0x10] sm:$0xff]
        %v1084 = vld [vmem:[%s1080 + $0x18] sm:$0xff]
        %1085 = vmatprep.subr.mxu0 0.0
        %1086 = vmatpush1.msra.mxu0 %v1081
        %1087 = vmatprep.subr.mxu0 0.0
        %1088 = vmatpush1.msra.mxu0 %v1082
        %1089 = vmatprep.subr.mxu0 0.0
        %1090 = vmatpush1.msra.mxu0 %v1083
        %1091 = vmatprep.subr.mxu0 0.0
        %1092 = vmatpush1.msra.mxu0 %v1084
        %1093 = vmatprep.subr.mxu0 0.0
        %1094 = vmatpush1.msra.mxu0 0.0
        %1095 = vmatprep.subr.mxu0 0.0
        %1096 = vmatpush1.msra.mxu0 0.0
        %1097 = vmatprep.subr.mxu0 0.0
        %1098 = vmatpush1.msra.mxu0 0.0
        %1099 = vmatprep.subr.mxu0 0.0
        %1100 = vmatpush1.msra.mxu0 0.0
        %1101 = vmatprep.subr.mxu0 0.0
        %1102 = vmatpush1.msra.mxu0 0.0
        %1103 = vmatprep.subr.mxu0 0.0
        %1104 = vmatpush1.msra.mxu0 0.0
        %1105 = vmatprep.subr.mxu0 0.0
        %1106 = vmatpush1.msra.mxu0 0.0
        %1107 = vmatprep.subr.mxu0 0.0
        %1108 = vmatpush1.msra.mxu0 0.0
        %1109 = vmatprep.subr.mxu0 0.0
        %1110 = vmatpush1.msra.mxu0 0.0
        %1111 = vmatprep.subr.mxu0 0.0
        %1112 = vmatpush1.msra.mxu0 0.0
        %1113 = vmatprep.subr.mxu0 0.0
        %1114 = vmatpush1.msra.mxu0 0.0
        %1115 = vmatprep.subr.mxu0 0.0
        %1116 = vmatpush1.msra.mxu0 0.0
        %1117 = vmatprep.subr.mxu0 0.0
        %1118 = vmatpush1.msra.mxu0 0.0
        %1119 = vmatprep.subr.mxu0 0.0
        %1120 = vmatpush1.msra.mxu0 0.0
        %1121 = vmatprep.subr.mxu0 0.0
        %1122 = vmatpush1.msra.mxu0 0.0
        %1123 = vmatprep.subr.mxu0 0.0
        %1124 = vmatpush1.msra.mxu0 0.0
        %1125 = vmatprep.subr.mxu0 0.0
        %1126 = vmatpush1.msra.mxu0 0.0
        %1127 = vmatprep.subr.mxu0 0.0
        %1128 = vmatpush1.msra.mxu0 0.0
        %1129 = vmatprep.subr.mxu0 0.0
        %1130 = vmatpush1.msra.mxu0 0.0
        %1131 = vmatprep.subr.mxu0 0.0
        %1132 = vmatpush1.msra.mxu0 0.0
        %1133 = vmatprep.subr.mxu0 0.0
        %1134 = vmatpush1.msra.mxu0 0.0
        %1135 = vmatprep.subr.mxu0 0.0
        %1136 = vmatpush1.msra.mxu0 0.0
        %1137 = vmatprep.subr.mxu0 0.0
        %1138 = vmatpush1.msra.mxu0 0.0
        %1139 = vmatprep.subr.mxu0 0.0
        %1140 = vmatpush1.msra.mxu0 0.0
        %1141 = vmatprep.subr.mxu0 0.0
        %1142 = vmatpush1.msra.mxu0 0.0
        %1143 = vmatprep.subr.mxu0 0.0
        %1144 = vmatpush1.msra.mxu0 0.0
        %1145 = vmatprep.subr.mxu0 0.0
        %1146 = vmatpush1.msra.mxu0 0.0
        %1147 = vmatprep.subr.mxu0 0.0
        %1148 = vmatpush1.msra.mxu0 0.0
        %1149 = vmatprep.mubr.f32.mxu0 0.0
        %1150 = vmatmul.mubr.f32.gmra.mrb[0].mxu0 %v258
        %v1151 = vpop.f32.mrb[0].mxu0
        %v1152 = vadd.f32 0.0, %v1151
        %v1153 = vpop.f32.mrb[0].mxu0
        %1154 = vmatprep.mubr.f32.mxu0 0.0
        %1155 = vmatmul.mubr.f32.gmra.mrb[0].mxu0 %v261
        %v1156 = vpop.f32.mrb[0].mxu0
        %v1157 = vadd.f32 0.0, %v1156
        %v1158 = vpop.f32.mrb[0].mxu0
        %1159 = vmatprep.mubr.f32.mxu0 0.0
        %1160 = vmatmul.mubr.f32.gmra.mrb[0].mxu0 %v264
        %v1161 = vpop.f32.mrb[0].mxu0
        %v1162 = vadd.f32 0.0, %v1161
        %v1163 = vpop.f32.mrb[0].mxu0
        %1164 = vmatprep.mubr.f32.mxu0 0.0
        %1165 = vmatmul.mubr.f32.gmra.mrb[0].mxu0 %v267
        %v1166 = vpop.f32.mrb[0].mxu0
        %v1167 = vadd.f32 0.0, %v1166
        %v1168 = vpop.f32.mrb[0].mxu0
        %1169 = vmatprep.mubr.f32.mxu0 0.0
        %1170 = vmatmul.mubr.f32.gmra.mrb[0].mxu0 %v270
        %v1171 = vpop.f32.mrb[0].mxu0
        %v1172 = vadd.f32 0.0, %v1171
        %v1173 = vpop.f32.mrb[0].mxu0
        %1174 = vmatprep.mubr.f32.mxu0 0.0
        %1175 = vmatmul.mubr.f32.gmra.mrb[0].mxu0 %v273
        %v1176 = vpop.f32.mrb[0].mxu0
        %v1177 = vadd.f32 0.0, %v1176
        %v1178 = vpop.f32.mrb[0].mxu0
        %1179 = vmatprep.mubr.f32.mxu0 0.0
        %1180 = vmatmul.mubr.f32.gmra.mrb[0].mxu0 %v276
        %v1181 = vpop.f32.mrb[0].mxu0
        %v1182 = vadd.f32 0.0, %v1181
        %v1183 = vpop.f32.mrb[0].mxu0
        %1184 = vmatprep.mubr.f32.mxu0 0.0
        %1185 = vmatmul.mubr.f32.gmra.mrb[0].mxu0 %v279
        %v1186 = vpop.f32.mrb[0].mxu0
        %v1187 = vadd.f32 0.0, %v1186
        %v1188 = vpop.f32.mrb[0].mxu0
        %1189 = vmatprep.mubr.f32.mxu0 0.0
        %1190 = vmatmul.mubr.f32.gmra.mrb[0].mxu0 %v282
        %v1191 = vpop.f32.mrb[0].mxu0
        %v1192 = vadd.f32 0.0, %v1191
        %v1193 = vpop.f32.mrb[0].mxu0
        %1194 = vmatprep.mubr.f32.mxu0 0.0
        %1195 = vmatmul.mubr.f32.gmra.mrb[0].mxu0 %v285
        %v1196 = vpop.f32.mrb[0].mxu0
        %v1197 = vadd.f32 0.0, %v1196
        %v1198 = vpop.f32.mrb[0].mxu0
        %1199 = vmatprep.mubr.f32.mxu0 0.0
        %1200 = vmatmul.mubr.f32.gmra.mrb[0].mxu0 %v288
        %v1201 = vpop.f32.mrb[0].mxu0
        %v1202 = vadd.f32 0.0, %v1201
        %v1203 = vpop.f32.mrb[0].mxu0
        %1204 = vmatprep.mubr.f32.mxu0 0.0
        %1205 = vmatmul.mubr.f32.gmra.mrb[0].mxu0 %v291
        %v1206 = vpop.f32.mrb[0].mxu0
        %v1207 = vadd.f32 0.0, %v1206
        %v1208 = vpop.f32.mrb[0].mxu0
        %1209 = vmatprep.mubr.f32.mxu0 0.0
        %1210 = vmatmul.mubr.f32.gmra.mrb[0].mxu0 %v294
        %v1211 = vpop.f32.mrb[0].mxu0
        %v1212 = vadd.f32 0.0, %v1211
        %v1213 = vpop.f32.mrb[0].mxu0
        %1214 = vmatprep.mubr.f32.mxu0 0.0
        %1215 = vmatmul.mubr.f32.gmra.mrb[0].mxu0 %v297
        %v1216 = vpop.f32.mrb[0].mxu0
        %v1217 = vadd.f32 0.0, %v1216
        %v1218 = vpop.f32.mrb[0].mxu0
        %1219 = vmatprep.mubr.f32.mxu0 0.0
        %1220 = vmatmul.mubr.f32.gmra.mrb[0].mxu0 %v300
        %v1221 = vpop.f32.mrb[0].mxu0
        %v1222 = vadd.f32 0.0, %v1221
        %v1223 = vpop.f32.mrb[0].mxu0
        %1224 = vmatprep.mubr.f32.mxu0 0.0
        %1225 = vmatmul.mubr.f32.gmra.mrb[0].mxu0 %v303
        %v1226 = vpop.f32.mrb[0].mxu0
        %v1227 = vadd.f32 0.0, %v1226
        %v1228 = vpop.f32.mrb[0].mxu0
        %1229 = vdwg.mxu0
        %1246 = vrot.lane.b32.xlu0 %v1152, 120
        %v1247 = vpop.permute.xlu0 %1246
        %1248 = vrot.lane.b32.xlu0 %v1157, 120
        %v1249 = vpop.permute.xlu0 %1248
        %1250 = vrot.lane.b32.xlu0 %v1162, 120
        %v1251 = vpop.permute.xlu0 %1250
        %1252 = vrot.lane.b32.xlu0 %v1167, 120
        %v1253 = vpop.permute.xlu0 %1252
        %1254 = vrot.lane.b32.xlu0 %v1172, 120
        %v1255 = vpop.permute.xlu0 %1254
        %1256 = vrot.lane.b32.xlu0 %v1177, 120
        %v1257 = vpop.permute.xlu0 %1256
        %1258 = vrot.lane.b32.xlu0 %v1182, 120
        %v1259 = vpop.permute.xlu0 %1258
        %1260 = vrot.lane.b32.xlu0 %v1187, 120
        %v1261 = vpop.permute.xlu0 %1260
        %1262 = vrot.lane.b32.xlu0 %v1192, 120
        %v1263 = vpop.permute.xlu0 %1262
        %1264 = vrot.lane.b32.xlu0 %v1197, 120
        %v1265 = vpop.permute.xlu0 %1264
        %1266 = vrot.lane.b32.xlu0 %v1202, 120
        %v1267 = vpop.permute.xlu0 %1266
        %1268 = vrot.lane.b32.xlu0 %v1207, 120
        %v1269 = vpop.permute.xlu0 %1268
        %1270 = vrot.lane.b32.xlu0 %v1212, 120
        %v1271 = vpop.permute.xlu0 %1270
        %1272 = vrot.lane.b32.xlu0 %v1217, 120
        %v1273 = vpop.permute.xlu0 %1272
        %1274 = vrot.lane.b32.xlu0 %v1222, 120
        %v1275 = vpop.permute.xlu0 %1274
        %1276 = vrot.lane.b32.xlu0 %v1227, 120
        %v1277 = vpop.permute.xlu0 %1276
        %v1278 = vsel %vm498, %v1152, 0
        %v1280 = vsel %vm498, %v1157, 0
        %v1282 = vsel %vm498, %v1162, 0
        %v1284 = vsel %vm498, %v1167, 0
        %v1286 = vsel %vm498, %v1172, 0
        %v1288 = vsel %vm498, %v1177, 0
        %v1290 = vsel %vm498, %v1182, 0
        %v1292 = vsel %vm498, %v1187, 0
        %v1294 = vsel %vm498, %v1192, 0
        %v1296 = vsel %vm498, %v1197, 0
        %v1298 = vsel %vm498, %v1202, 0
        %v1300 = vsel %vm498, %v1207, 0
        %v1302 = vsel %vm498, %v1212, 0
        %v1304 = vsel %vm498, %v1217, 0
        %v1306 = vsel %vm498, %v1222, 0
        %v1308 = vsel %vm498, %v1227, 0
        %v1310 = vsel %vm498, %v1247, 0
        %v1312 = vsel %vm498, %v1249, 0
        %v1314 = vsel %vm498, %v1251, 0
        %v1316 = vsel %vm498, %v1253, 0
        %v1318 = vsel %vm498, %v1255, 0
        %v1320 = vsel %vm498, %v1257, 0
        %v1322 = vsel %vm498, %v1259, 0
        %v1324 = vsel %vm498, %v1261, 0
        %v1326 = vsel %vm498, %v1263, 0
        %v1328 = vsel %vm498, %v1265, 0
        %v1330 = vsel %vm498, %v1267, 0
        %v1332 = vsel %vm498, %v1269, 0
        %v1334 = vsel %vm498, %v1271, 0
        %v1336 = vsel %vm498, %v1273, 0
        %v1338 = vsel %vm498, %v1275, 0
        %v1340 = vsel %vm498, %v1277, 0
        %1342 = vmatprep.subr.mxu0 0.0
        %1343 = vmatpush1.xpose.msra.mxu0 %v1310
        %1344 = vmatprep.subr.mxu0 0.0
        %1345 = vmatpush1.xpose.msra.mxu0 %v1312
        %1346 = vmatprep.subr.mxu0 0.0
        %1347 = vmatpush1.xpose.msra.mxu0 %v1314
        %1348 = vmatprep.subr.mxu0 0.0
        %1349 = vmatpush1.xpose.msra.mxu0 %v1316
        %1350 = vmatprep.subr.mxu0 0.0
        %1351 = vmatpush1.xpose.msra.mxu0 %v1318
        %1352 = vmatprep.subr.mxu0 0.0
        %1353 = vmatpush1.xpose.msra.mxu0 %v1320
        %1354 = vmatprep.subr.mxu0 0.0
        %1355 = vmatpush1.xpose.msra.mxu0 %v1322
        %1356 = vmatprep.subr.mxu0 0.0
        %1357 = vmatpush1.xpose.msra.mxu0 %v1324
        %1358 = vmatprep.subr.mxu0 0.0
        %1359 = vmatpush1.xpose.msra.mxu0 %v1326
        %1360 = vmatprep.subr.mxu0 0.0
        %1361 = vmatpush1.xpose.msra.mxu0 %v1328
        %1362 = vmatprep.subr.mxu0 0.0
        %1363 = vmatpush1.xpose.msra.mxu0 %v1330
        %1364 = vmatprep.subr.mxu0 0.0
        %1365 = vmatpush1.xpose.msra.mxu0 %v1332
        %1366 = vmatprep.subr.mxu0 0.0
        %1367 = vmatpush1.xpose.msra.mxu0 %v1334
        %1368 = vmatprep.subr.mxu0 0.0
        %1369 = vmatpush1.xpose.msra.mxu0 %v1336
        %1370 = vmatprep.subr.mxu0 0.0
        %1371 = vmatpush1.xpose.msra.mxu0 %v1338
        %1372 = vmatprep.subr.mxu0 0.0
        %1373 = vmatpush1.xpose.msra.mxu0 %v1340
        %1374 = vmatprep.subr.mxu0 0.0
        %1375 = vmatpush1.xpose.msra.mxu0 0.0
        %1376 = vmatprep.subr.mxu0 0.0
        %1377 = vmatpush1.xpose.msra.mxu0 0.0
        %1378 = vmatprep.subr.mxu0 0.0
        %1379 = vmatpush1.xpose.msra.mxu0 0.0
        %1380 = vmatprep.subr.mxu0 0.0
        %1381 = vmatpush1.xpose.msra.mxu0 0.0
        %1382 = vmatprep.subr.mxu0 0.0
        %1383 = vmatpush1.xpose.msra.mxu0 0.0
        %1384 = vmatprep.subr.mxu0 0.0
        %1385 = vmatpush1.xpose.msra.mxu0 0.0
        %1386 = vmatprep.subr.mxu0 0.0
        %1387 = vmatpush1.xpose.msra.mxu0 0.0
        %1388 = vmatprep.subr.mxu0 0.0
        %1389 = vmatpush1.xpose.msra.mxu0 0.0
        %1390 = vmatprep.subr.mxu0 0.0
        %1391 = vmatpush1.xpose.msra.mxu0 0.0
        %1392 = vmatprep.subr.mxu0 0.0
        %1393 = vmatpush1.xpose.msra.mxu0 0.0
        %1394 = vmatprep.subr.mxu0 0.0
        %1395 = vmatpush1.xpose.msra.mxu0 0.0
        %1396 = vmatprep.subr.mxu0 0.0
        %1397 = vmatpush1.xpose.msra.mxu0 0.0
        %1398 = vmatprep.subr.mxu0 0.0
        %1399 = vmatpush1.xpose.msra.mxu0 0.0
        %1400 = vmatprep.subr.mxu0 0.0
        %1401 = vmatpush1.xpose.msra.mxu0 0.0
        %1402 = vmatprep.subr.mxu0 0.0
        %1403 = vmatpush1.xpose.msra.mxu0 0.0
        %1404 = vmatprep.subr.mxu0 0.0
        %1405 = vmatpush1.xpose.msra.mxu0 0.0
        %1406 = vmatprep.mubr.f32.mxu0 0.0
        %1407 = vmatmul.mubr.f32.gmra.mrb[0].mxu0 %v1278
        %v1408 = vpop.f32.mrb[0].mxu0
        %v1409 = vadd.f32 0.0, %v1408
        %v1410 = vpop.f32.mrb[0].mxu0
        %1411 = vmatprep.mubr.f32.mxu0 0.0
        %1412 = vmatmul.mubr.f32.gmra.mrb[0].mxu0 %v1280
        %v1413 = vpop.f32.mrb[0].mxu0
        %v1414 = vadd.f32 0.0, %v1413
        %v1415 = vpop.f32.mrb[0].mxu0
        %1416 = vmatprep.mubr.f32.mxu0 0.0
        %1417 = vmatmul.mubr.f32.gmra.mrb[0].mxu0 %v1282
        %v1418 = vpop.f32.mrb[0].mxu0
        %v1419 = vadd.f32 0.0, %v1418
        %v1420 = vpop.f32.mrb[0].mxu0
        %1421 = vmatprep.mubr.f32.mxu0 0.0
        %1422 = vmatmul.mubr.f32.gmra.mrb[0].mxu0 %v1284
        %v1423 = vpop.f32.mrb[0].mxu0
        %v1424 = vadd.f32 0.0, %v1423
        %v1425 = vpop.f32.mrb[0].mxu0
        %1426 = vmatprep.mubr.f32.mxu0 0.0
        %1427 = vmatmul.mubr.f32.gmra.mrb[0].mxu0 %v1286
        %v1428 = vpop.f32.mrb[0].mxu0
        %v1429 = vadd.f32 0.0, %v1428
        %v1430 = vpop.f32.mrb[0].mxu0
        %1431 = vmatprep.mubr.f32.mxu0 0.0
        %1432 = vmatmul.mubr.f32.gmra.mrb[0].mxu0 %v1288
        %v1433 = vpop.f32.mrb[0].mxu0
        %v1434 = vadd.f32 0.0, %v1433
        %v1435 = vpop.f32.mrb[0].mxu0
        %1436 = vmatprep.mubr.f32.mxu0 0.0
        %1437 = vmatmul.mubr.f32.gmra.mrb[0].mxu0 %v1290
        %v1438 = vpop.f32.mrb[0].mxu0
        %v1439 = vadd.f32 0.0, %v1438
        %v1440 = vpop.f32.mrb[0].mxu0
        %1441 = vmatprep.mubr.f32.mxu0 0.0
        %1442 = vmatmul.mubr.f32.gmra.mrb[0].mxu0 %v1292
        %v1443 = vpop.f32.mrb[0].mxu0
        %v1444 = vadd.f32 0.0, %v1443
        %v1445 = vpop.f32.mrb[0].mxu0
        %1446 = vmatprep.mubr.f32.mxu0 0.0
        %1447 = vmatmul.mubr.f32.gmra.mrb[0].mxu0 %v1294
        %v1448 = vpop.f32.mrb[0].mxu0
        %v1449 = vadd.f32 0.0, %v1448
        %v1450 = vpop.f32.mrb[0].mxu0
        %1451 = vmatprep.mubr.f32.mxu0 0.0
        %1452 = vmatmul.mubr.f32.gmra.mrb[0].mxu0 %v1296
        %v1453 = vpop.f32.mrb[0].mxu0
        %v1454 = vadd.f32 0.0, %v1453
        %v1455 = vpop.f32.mrb[0].mxu0
        %1456 = vmatprep.mubr.f32.mxu0 0.0
        %1457 = vmatmul.mubr.f32.gmra.mrb[0].mxu0 %v1298
        %v1458 = vpop.f32.mrb[0].mxu0
        %v1459 = vadd.f32 0.0, %v1458
        %v1460 = vpop.f32.mrb[0].mxu0
        %1461 = vmatprep.mubr.f32.mxu0 0.0
        %1462 = vmatmul.mubr.f32.gmra.mrb[0].mxu0 %v1300
        %v1463 = vpop.f32.mrb[0].mxu0
        %v1464 = vadd.f32 0.0, %v1463
        %v1465 = vpop.f32.mrb[0].mxu0
        %1466 = vmatprep.mubr.f32.mxu0 0.0
        %1467 = vmatmul.mubr.f32.gmra.mrb[0].mxu0 %v1302
        %v1468 = vpop.f32.mrb[0].mxu0
        %v1469 = vadd.f32 0.0, %v1468
        %v1470 = vpop.f32.mrb[0].mxu0
        %1471 = vmatprep.mubr.f32.mxu0 0.0
        %1472 = vmatmul.mubr.f32.gmra.mrb[0].mxu0 %v1304
        %v1473 = vpop.f32.mrb[0].mxu0
        %v1474 = vadd.f32 0.0, %v1473
        %v1475 = vpop.f32.mrb[0].mxu0
        %1476 = vmatprep.mubr.f32.mxu0 0.0
        %1477 = vmatmul.mubr.f32.gmra.mrb[0].mxu0 %v1306
        %v1478 = vpop.f32.mrb[0].mxu0
        %v1479 = vadd.f32 0.0, %v1478
        %v1480 = vpop.f32.mrb[0].mxu0
        %1481 = vmatprep.mubr.f32.mxu0 0.0
        %1482 = vmatmul.mubr.f32.gmra.mrb[0].mxu0 %v1308
        %v1483 = vpop.f32.mrb[0].mxu0
        %v1484 = vadd.f32 0.0, %v1483
        %v1485 = vpop.f32.mrb[0].mxu0
        %1486 = vdwg.mxu0
        %v1487 = vsel %vm710, %v1409, -1e+30
        %v1488 = vsel %vm710, %v1414, -1e+30
        %v1489 = vsel %vm710, %v1419, -1e+30
        %v1490 = vsel %vm710, %v1424, -1e+30
        %v1491 = vsel %vm710, %v1429, -1e+30
        %v1492 = vsel %vm710, %v1434, -1e+30
        %v1493 = vsel %vm710, %v1439, -1e+30
        %v1494 = vsel %vm710, %v1444, -1e+30
        %v1495 = vsel %vm710, %v1449, -1e+30
        %v1496 = vsel %vm710, %v1454, -1e+30
        %v1497 = vsel %vm710, %v1459, -1e+30
        %v1498 = vsel %vm710, %v1464, -1e+30
        %v1499 = vsel %vm710, %v1469, -1e+30
        %v1500 = vsel %vm710, %v1474, -1e+30
        %v1501 = vsel %vm710, %v1479, -1e+30
        %v1502 = vsel %vm710, %v1484, -1e+30
        %1503 = vmax.xlane.f32.xlu0 %v1487
        %v1504 = vpop.xlane.xlu0 %1503
        %1505 = vmax.xlane.f32.xlu0 %v1488
        %v1506 = vpop.xlane.xlu0 %1505
        %1507 = vmax.xlane.f32.xlu0 %v1489
        %v1508 = vpop.xlane.xlu0 %1507
        %1509 = vmax.xlane.f32.xlu0 %v1490
        %v1510 = vpop.xlane.xlu0 %1509
        %1511 = vmax.xlane.f32.xlu0 %v1491
        %v1512 = vpop.xlane.xlu0 %1511
        %1513 = vmax.xlane.f32.xlu0 %v1492
        %v1514 = vpop.xlane.xlu0 %1513
        %1515 = vmax.xlane.f32.xlu0 %v1493
        %v1516 = vpop.xlane.xlu0 %1515
        %1517 = vmax.xlane.f32.xlu0 %v1494
        %v1518 = vpop.xlane.xlu0 %1517
        %1519 = vmax.xlane.f32.xlu0 %v1495
        %v1520 = vpop.xlane.xlu0 %1519
        %1521 = vmax.xlane.f32.xlu0 %v1496
        %v1522 = vpop.xlane.xlu0 %1521
        %1523 = vmax.xlane.f32.xlu0 %v1497
        %v1524 = vpop.xlane.xlu0 %1523
        %1525 = vmax.xlane.f32.xlu0 %v1498
        %v1526 = vpop.xlane.xlu0 %1525
        %1527 = vmax.xlane.f32.xlu0 %v1499
        %v1528 = vpop.xlane.xlu0 %1527
        %1529 = vmax.xlane.f32.xlu0 %v1500
        %v1530 = vpop.xlane.xlu0 %1529
        %1531 = vmax.xlane.f32.xlu0 %v1501
        %v1532 = vpop.xlane.xlu0 %1531
        %1533 = vmax.xlane.f32.xlu0 %v1502
        %v1534 = vpop.xlane.xlu0 %1533
        %v1535 = vsub.f32 %v1487, %v1504
        %v1536 = vsub.f32 %v1488, %v1506
        %v1537 = vsub.f32 %v1489, %v1508
        %v1538 = vsub.f32 %v1490, %v1510
        %v1539 = vsub.f32 %v1491, %v1512
        %v1540 = vsub.f32 %v1492, %v1514
        %v1541 = vsub.f32 %v1493, %v1516
        %v1542 = vsub.f32 %v1494, %v1518
        %v1543 = vsub.f32 %v1495, %v1520
        %v1544 = vsub.f32 %v1496, %v1522
        %v1545 = vsub.f32 %v1497, %v1524
        %v1546 = vsub.f32 %v1498, %v1526
        %v1547 = vsub.f32 %v1499, %v1528
        %v1548 = vsub.f32 %v1500, %v1530
        %v1549 = vsub.f32 %v1501, %v1532
        %v1550 = vsub.f32 %v1502, %v1534
        %v1551 = vmul.f32 %v1535, 1.442695
        %v1552 = vpow.pop %v1551
        %v1553 = vmul.f32 %v1536, 1.442695
        %v1554 = vpow.pop %v1553
        %v1555 = vmul.f32 %v1537, 1.442695
        %v1556 = vpow.pop %v1555
        %v1557 = vmul.f32 %v1538, 1.442695
        %v1558 = vpow.pop %v1557
        %v1559 = vmul.f32 %v1539, 1.442695
        %v1560 = vpow.pop %v1559
        %v1561 = vmul.f32 %v1540, 1.442695
        %v1562 = vpow.pop %v1561
        %v1563 = vmul.f32 %v1541, 1.442695
        %v1564 = vpow.pop %v1563
        %v1565 = vmul.f32 %v1542, 1.442695
        %v1566 = vpow.pop %v1565
        %v1567 = vmul.f32 %v1543, 1.442695
        %v1568 = vpow.pop %v1567
        %v1569 = vmul.f32 %v1544, 1.442695
        %v1570 = vpow.pop %v1569
        %v1571 = vmul.f32 %v1545, 1.442695
        %v1572 = vpow.pop %v1571
        %v1573 = vmul.f32 %v1546, 1.442695
        %v1574 = vpow.pop %v1573
        %v1575 = vmul.f32 %v1547, 1.442695
        %v1576 = vpow.pop %v1575
        %v1577 = vmul.f32 %v1548, 1.442695
        %v1578 = vpow.pop %v1577
        %v1579 = vmul.f32 %v1549, 1.442695
        %v1580 = vpow.pop %v1579
        %v1581 = vmul.f32 %v1550, 1.442695
        %v1582 = vpow.pop %v1581
        %1583 = vadd.xlane.f32.xlu0 %v1552
        %v1584 = vpop.xlane.xlu0 %1583
        %1585 = vadd.xlane.f32.xlu0 %v1554
        %v1586 = vpop.xlane.xlu0 %1585
        %1587 = vadd.xlane.f32.xlu0 %v1556
        %v1588 = vpop.xlane.xlu0 %1587
        %1589 = vadd.xlane.f32.xlu0 %v1558
        %v1590 = vpop.xlane.xlu0 %1589
        %1591 = vadd.xlane.f32.xlu0 %v1560
        %v1592 = vpop.xlane.xlu0 %1591
        %1593 = vadd.xlane.f32.xlu0 %v1562
        %v1594 = vpop.xlane.xlu0 %1593
        %1595 = vadd.xlane.f32.xlu0 %v1564
        %v1596 = vpop.xlane.xlu0 %1595
        %1597 = vadd.xlane.f32.xlu0 %v1566
        %v1598 = vpop.xlane.xlu0 %1597
        %1599 = vadd.xlane.f32.xlu0 %v1568
        %v1600 = vpop.xlane.xlu0 %1599
        %1601 = vadd.xlane.f32.xlu0 %v1570
        %v1602 = vpop.xlane.xlu0 %1601
        %1603 = vadd.xlane.f32.xlu0 %v1572
        %v1604 = vpop.xlane.xlu0 %1603
        %1605 = vadd.xlane.f32.xlu0 %v1574
        %v1606 = vpop.xlane.xlu0 %1605
        %1607 = vadd.xlane.f32.xlu0 %v1576
        %v1608 = vpop.xlane.xlu0 %1607
        %1609 = vadd.xlane.f32.xlu0 %v1578
        %v1610 = vpop.xlane.xlu0 %1609
        %1611 = vadd.xlane.f32.xlu0 %v1580
        %v1612 = vpop.xlane.xlu0 %1611
        %1613 = vadd.xlane.f32.xlu0 %v1582
        %v1614 = vpop.xlane.xlu0 %1613
        %v1615 = vrcp.pop %v1584
        %v1616 = vrcp.pop %v1586
        %v1617 = vrcp.pop %v1588
        %v1618 = vrcp.pop %v1590
        %v1619 = vrcp.pop %v1592
        %v1620 = vrcp.pop %v1594
        %v1621 = vrcp.pop %v1596
        %v1622 = vrcp.pop %v1598
        %v1623 = vrcp.pop %v1600
        %v1624 = vrcp.pop %v1602
        %v1625 = vrcp.pop %v1604
        %v1626 = vrcp.pop %v1606
        %v1627 = vrcp.pop %v1608
        %v1628 = vrcp.pop %v1610
        %v1629 = vrcp.pop %v1612
        %v1630 = vrcp.pop %v1614
        %v1631 = vmul.f32 %v1552, %v1615
        %v1632 = vmul.f32 %v1554, %v1616
        %v1633 = vmul.f32 %v1556, %v1617
        %v1634 = vmul.f32 %v1558, %v1618
        %v1635 = vmul.f32 %v1560, %v1619
        %v1636 = vmul.f32 %v1562, %v1620
        %v1637 = vmul.f32 %v1564, %v1621
        %v1638 = vmul.f32 %v1566, %v1622
        %v1639 = vmul.f32 %v1568, %v1623
        %v1640 = vmul.f32 %v1570, %v1624
        %v1641 = vmul.f32 %v1572, %v1625
        %v1642 = vmul.f32 %v1574, %v1626
        %v1643 = vmul.f32 %v1576, %v1627
        %v1644 = vmul.f32 %v1578, %v1628
        %v1645 = vmul.f32 %v1580, %v1629
        %v1646 = vmul.f32 %v1582, %v1630
        %s1647 = scalar_lea.vmem %s225, 128 [#allocation2]
        %1648 = vst [vmem:[%s1647] sm:$0xff] %v1631
        %1649 = vst [vmem:[%s1647 + $0x8] sm:$0xff] %v1632
        %1650 = vst [vmem:[%s1647 + $0x10] sm:$0xff] %v1633
        %1651 = vst [vmem:[%s1647 + $0x18] sm:$0xff] %v1634
        %1652 = vst [vmem:[%s1647 + $0x20] sm:$0xff] %v1635
        %1653 = vst [vmem:[%s1647 + $0x28] sm:$0xff] %v1636
        %1654 = vst [vmem:[%s1647 + $0x30] sm:$0xff] %v1637
        %1655 = vst [vmem:[%s1647 + $0x38] sm:$0xff] %v1638
        %1656 = vst [vmem:[%s1647 + $0x40] sm:$0xff] %v1639
        %1657 = vst [vmem:[%s1647 + $0x48] sm:$0xff] %v1640
        %1658 = vst [vmem:[%s1647 + $0x50] sm:$0xff] %v1641
        %1659 = vst [vmem:[%s1647 + $0x58] sm:$0xff] %v1642
        %1660 = vst [vmem:[%s1647 + $0x60] sm:$0xff] %v1643
        %1661 = vst [vmem:[%s1647 + $0x68] sm:$0xff] %v1644
        %1662 = vst [vmem:[%s1647 + $0x70] sm:$0xff] %v1645
        %1663 = vst [vmem:[%s1647 + $0x78] sm:$0xff] %v1646
        %1664 = vrot.lane.b32.xlu0 %v1152, 112
        %v1665 = vpop.permute.xlu0 %1664
        %1666 = vrot.lane.b32.xlu0 %v1157, 112
        %v1667 = vpop.permute.xlu0 %1666
        %1668 = vrot.lane.b32.xlu0 %v1162, 112
        %v1669 = vpop.permute.xlu0 %1668
        %1670 = vrot.lane.b32.xlu0 %v1167, 112
        %v1671 = vpop.permute.xlu0 %1670
        %1672 = vrot.lane.b32.xlu0 %v1172, 112
        %v1673 = vpop.permute.xlu0 %1672
        %1674 = vrot.lane.b32.xlu0 %v1177, 112
        %v1675 = vpop.permute.xlu0 %1674
        %1676 = vrot.lane.b32.xlu0 %v1182, 112
        %v1677 = vpop.permute.xlu0 %1676
        %1678 = vrot.lane.b32.xlu0 %v1187, 112
        %v1679 = vpop.permute.xlu0 %1678
        %1680 = vrot.lane.b32.xlu0 %v1192, 112
        %v1681 = vpop.permute.xlu0 %1680
        %1682 = vrot.lane.b32.xlu0 %v1197, 112
        %v1683 = vpop.permute.xlu0 %1682
        %1684 = vrot.lane.b32.xlu0 %v1202, 112
        %v1685 = vpop.permute.xlu0 %1684
        %1686 = vrot.lane.b32.xlu0 %v1207, 112
        %v1687 = vpop.permute.xlu0 %1686
        %1688 = vrot.lane.b32.xlu0 %v1212, 112
        %v1689 = vpop.permute.xlu0 %1688
        %1690 = vrot.lane.b32.xlu0 %v1217, 112
        %v1691 = vpop.permute.xlu0 %1690
        %1692 = vrot.lane.b32.xlu0 %v1222, 112
        %v1693 = vpop.permute.xlu0 %1692
        %1694 = vrot.lane.b32.xlu0 %v1227, 112
        %v1695 = vpop.permute.xlu0 %1694
        %1712 = vmatprep.subr.mxu0 0.0
        %1713 = vmatpush1.msra.mxu0 %v1665
        %1714 = vmatprep.subr.mxu0 0.0
        %1715 = vmatpush1.msra.mxu0 %v1667
        %1716 = vmatprep.subr.mxu0 0.0
        %1717 = vmatpush1.msra.mxu0 %v1669
        %1718 = vmatprep.subr.mxu0 0.0
        %1719 = vmatpush1.msra.mxu0 %v1671
        %1720 = vmatprep.subr.mxu0 0.0
        %1721 = vmatpush1.msra.mxu0 %v1673
        %1722 = vmatprep.subr.mxu0 0.0
        %1723 = vmatpush1.msra.mxu0 %v1675
        %1724 = vmatprep.subr.mxu0 0.0
        %1725 = vmatpush1.msra.mxu0 %v1677
        %1726 = vmatprep.subr.mxu0 0.0
        %1727 = vmatpush1.msra.mxu0 %v1679
        %1728 = vmatprep.subr.mxu0 0.0
        %1729 = vmatpush1.msra.mxu0 %v1681
        %1730 = vmatprep.subr.mxu0 0.0
        %1731 = vmatpush1.msra.mxu0 %v1683
        %1732 = vmatprep.subr.mxu0 0.0
        %1733 = vmatpush1.msra.mxu0 %v1685
        %1734 = vmatprep.subr.mxu0 0.0
        %1735 = vmatpush1.msra.mxu0 %v1687
        %1736 = vmatprep.subr.mxu0 0.0
        %1737 = vmatpush1.msra.mxu0 %v1689
        %1738 = vmatprep.subr.mxu0 0.0
        %1739 = vmatpush1.msra.mxu0 %v1691
        %1740 = vmatprep.subr.mxu0 0.0
        %1741 = vmatpush1.msra.mxu0 %v1693
        %1742 = vmatprep.subr.mxu0 0.0
        %1743 = vmatpush1.msra.mxu0 %v1695
        %1744 = vmatprep.subr.mxu0 0.0
        %1745 = vmatpush1.msra.mxu0 0.0
        %1746 = vmatprep.subr.mxu0 0.0
        %1747 = vmatpush1.msra.mxu0 0.0
        %1748 = vmatprep.subr.mxu0 0.0
        %1749 = vmatpush1.msra.mxu0 0.0
        %1750 = vmatprep.subr.mxu0 0.0
        %1751 = vmatpush1.msra.mxu0 0.0
        %1752 = vmatprep.subr.mxu0 0.0
        %1753 = vmatpush1.msra.mxu0 0.0
        %1754 = vmatprep.subr.mxu0 0.0
        %1755 = vmatpush1.msra.mxu0 0.0
        %1756 = vmatprep.subr.mxu0 0.0
        %1757 = vmatpush1.msra.mxu0 0.0
        %1758 = vmatprep.subr.mxu0 0.0
        %1759 = vmatpush1.msra.mxu0 0.0
        %1760 = vmatprep.subr.mxu0 0.0
        %1761 = vmatpush1.msra.mxu0 0.0
        %1762 = vmatprep.subr.mxu0 0.0
        %1763 = vmatpush1.msra.mxu0 0.0
        %1764 = vmatprep.subr.mxu0 0.0
        %1765 = vmatpush1.msra.mxu0 0.0
        %1766 = vmatprep.subr.mxu0 0.0
        %1767 = vmatpush1.msra.mxu0 0.0
        %1768 = vmatprep.subr.mxu0 0.0
        %1769 = vmatpush1.msra.mxu0 0.0
        %1770 = vmatprep.subr.mxu0 0.0
        %1771 = vmatpush1.msra.mxu0 0.0
        %1772 = vmatprep.subr.mxu0 0.0
        %1773 = vmatpush1.msra.mxu0 0.0
        %1774 = vmatprep.subr.mxu0 0.0
        %1775 = vmatpush1.msra.mxu0 0.0
        %1776 = vmatprep.mubr.f32.mxu0 0.0
        %1777 = vmatmul.mubr.f32.gmra.mrb[0].mxu0 %v1631
        %v1778 = vpop.f32.mrb[0].mxu0
        %v1779 = vadd.f32 0.0, %v1778
        %v1780 = vpop.f32.mrb[0].mxu0
        %1781 = vmatprep.mubr.f32.mxu0 0.0
        %1782 = vmatmul.mubr.f32.gmra.mrb[0].mxu0 %v1632
        %v1783 = vpop.f32.mrb[0].mxu0
        %v1784 = vadd.f32 0.0, %v1783
        %v1785 = vpop.f32.mrb[0].mxu0
        %1786 = vmatprep.mubr.f32.mxu0 0.0
        %1787 = vmatmul.mubr.f32.gmra.mrb[0].mxu0 %v1633
        %v1788 = vpop.f32.mrb[0].mxu0
        %v1789 = vadd.f32 0.0, %v1788
        %v1790 = vpop.f32.mrb[0].mxu0
        %1791 = vmatprep.mubr.f32.mxu0 0.0
        %1792 = vmatmul.mubr.f32.gmra.mrb[0].mxu0 %v1634
        %v1793 = vpop.f32.mrb[0].mxu0
        %v1794 = vadd.f32 0.0, %v1793
        %v1795 = vpop.f32.mrb[0].mxu0
        %1796 = vmatprep.mubr.f32.mxu0 0.0
        %1797 = vmatmul.mubr.f32.gmra.mrb[0].mxu0 %v1635
        %v1798 = vpop.f32.mrb[0].mxu0
        %v1799 = vadd.f32 0.0, %v1798
        %v1800 = vpop.f32.mrb[0].mxu0
        %1801 = vmatprep.mubr.f32.mxu0 0.0
        %1802 = vmatmul.mubr.f32.gmra.mrb[0].mxu0 %v1636
        %v1803 = vpop.f32.mrb[0].mxu0
        %v1804 = vadd.f32 0.0, %v1803
        %v1805 = vpop.f32.mrb[0].mxu0
        %1806 = vmatprep.mubr.f32.mxu0 0.0
        %1807 = vmatmul.mubr.f32.gmra.mrb[0].mxu0 %v1637
        %v1808 = vpop.f32.mrb[0].mxu0
        %v1809 = vadd.f32 0.0, %v1808
        %v1810 = vpop.f32.mrb[0].mxu0
        %1811 = vmatprep.mubr.f32.mxu0 0.0
        %1812 = vmatmul.mubr.f32.gmra.mrb[0].mxu0 %v1638
        %v1813 = vpop.f32.mrb[0].mxu0
        %v1814 = vadd.f32 0.0, %v1813
        %v1815 = vpop.f32.mrb[0].mxu0
        %1816 = vmatprep.mubr.f32.mxu0 0.0
        %1817 = vmatmul.mubr.f32.gmra.mrb[0].mxu0 %v1639
        %v1818 = vpop.f32.mrb[0].mxu0
        %v1819 = vadd.f32 0.0, %v1818
        %v1820 = vpop.f32.mrb[0].mxu0
        %1821 = vmatprep.mubr.f32.mxu0 0.0
        %1822 = vmatmul.mubr.f32.gmra.mrb[0].mxu0 %v1640
        %v1823 = vpop.f32.mrb[0].mxu0
        %v1824 = vadd.f32 0.0, %v1823
        %v1825 = vpop.f32.mrb[0].mxu0
        %1826 = vmatprep.mubr.f32.mxu0 0.0
        %1827 = vmatmul.mubr.f32.gmra.mrb[0].mxu0 %v1641
        %v1828 = vpop.f32.mrb[0].mxu0
        %v1829 = vadd.f32 0.0, %v1828
        %v1830 = vpop.f32.mrb[0].mxu0
        %1831 = vmatprep.mubr.f32.mxu0 0.0
        %1832 = vmatmul.mubr.f32.gmra.mrb[0].mxu0 %v1642
        %v1833 = vpop.f32.mrb[0].mxu0
        %v1834 = vadd.f32 0.0, %v1833
        %v1835 = vpop.f32.mrb[0].mxu0
        %1836 = vmatprep.mubr.f32.mxu0 0.0
        %1837 = vmatmul.mubr.f32.gmra.mrb[0].mxu0 %v1643
        %v1838 = vpop.f32.mrb[0].mxu0
        %v1839 = vadd.f32 0.0, %v1838
        %v1840 = vpop.f32.mrb[0].mxu0
        %1841 = vmatprep.mubr.f32.mxu0 0.0
        %1842 = vmatmul.mubr.f32.gmra.mrb[0].mxu0 %v1644
        %v1843 = vpop.f32.mrb[0].mxu0
        %v1844 = vadd.f32 0.0, %v1843
        %v1845 = vpop.f32.mrb[0].mxu0
        %1846 = vmatprep.mubr.f32.mxu0 0.0
        %1847 = vmatmul.mubr.f32.gmra.mrb[0].mxu0 %v1645
        %v1848 = vpop.f32.mrb[0].mxu0
        %v1849 = vadd.f32 0.0, %v1848
        %v1850 = vpop.f32.mrb[0].mxu0
        %1851 = vmatprep.mubr.f32.mxu0 0.0
        %1852 = vmatmul.mubr.f32.gmra.mrb[0].mxu0 %v1646
        %v1853 = vpop.f32.mrb[0].mxu0
        %v1854 = vadd.f32 0.0, %v1853
        %v1855 = vpop.f32.mrb[0].mxu0
        %1856 = vdwg.mxu0
        %s1857 = scalar_lea.vmem %s1, 64
        %v1858 = vld [vmem:[%s1857] sm:$0xff]
        %v1859 = vld [vmem:[%s1857 + $0x8] sm:$0xff]
        %v1860 = vld [vmem:[%s1857 + $0x10] sm:$0xff]
        %v1861 = vld [vmem:[%s1857 + $0x18] sm:$0xff]
        %1862 = vmatprep.subr.mxu0 0.0
        %1863 = vmatpush1.msra.mxu0 %v1858
        %1864 = vmatprep.subr.mxu0 0.0
        %1865 = vmatpush1.msra.mxu0 %v1859
        %1866 = vmatprep.subr.mxu0 0.0
        %1867 = vmatpush1.msra.mxu0 %v1860
        %1868 = vmatprep.subr.mxu0 0.0
        %1869 = vmatpush1.msra.mxu0 %v1861
        %1870 = vmatprep.subr.mxu0 0.0
        %1871 = vmatpush1.msra.mxu0 0.0
        %1872 = vmatprep.subr.mxu0 0.0
        %1873 = vmatpush1.msra.mxu0 0.0
        %1874 = vmatprep.subr.mxu0 0.0
        %1875 = vmatpush1.msra.mxu0 0.0
        %1876 = vmatprep.subr.mxu0 0.0
        %1877 = vmatpush1.msra.mxu0 0.0
        %1878 = vmatprep.subr.mxu0 0.0
        %1879 = vmatpush1.msra.mxu0 0.0
        %1880 = vmatprep.subr.mxu0 0.0
        %1881 = vmatpush1.msra.mxu0 0.0
        %1882 = vmatprep.subr.mxu0 0.0
        %1883 = vmatpush1.msra.mxu0 0.0
        %1884 = vmatprep.subr.mxu0 0.0
        %1885 = vmatpush1.msra.mxu0 0.0
        %1886 = vmatprep.subr.mxu0 0.0
        %1887 = vmatpush1.msra.mxu0 0.0
        %1888 = vmatprep.subr.mxu0 0.0
        %1889 = vmatpush1.msra.mxu0 0.0
        %1890 = vmatprep.subr.mxu0 0.0
        %1891 = vmatpush1.msra.mxu0 0.0
        %1892 = vmatprep.subr.mxu0 0.0
        %1893 = vmatpush1.msra.mxu0 0.0
        %1894 = vmatprep.subr.mxu0 0.0
        %1895 = vmatpush1.msra.mxu0 0.0
        %1896 = vmatprep.subr.mxu0 0.0
        %1897 = vmatpush1.msra.mxu0 0.0
        %1898 = vmatprep.subr.mxu0 0.0
        %1899 = vmatpush1.msra.mxu0 0.0
        %1900 = vmatprep.subr.mxu0 0.0
        %1901 = vmatpush1.msra.mxu0 0.0
        %1902 = vmatprep.subr.mxu0 0.0
        %1903 = vmatpush1.msra.mxu0 0.0
        %1904 = vmatprep.subr.mxu0 0.0
        %1905 = vmatpush1.msra.mxu0 0.0
        %1906 = vmatprep.subr.mxu0 0.0
        %1907 = vmatpush1.msra.mxu0 0.0
        %1908 = vmatprep.subr.mxu0 0.0
        %1909 = vmatpush1.msra.mxu0 0.0
        %1910 = vmatprep.subr.mxu0 0.0
        %1911 = vmatpush1.msra.mxu0 0.0
        %1912 = vmatprep.subr.mxu0 0.0
        %1913 = vmatpush1.msra.mxu0 0.0
        %1914 = vmatprep.subr.mxu0 0.0
        %1915 = vmatpush1.msra.mxu0 0.0
        %1916 = vmatprep.subr.mxu0 0.0
        %1917 = vmatpush1.msra.mxu0 0.0
        %1918 = vmatprep.subr.mxu0 0.0
        %1919 = vmatpush1.msra.mxu0 0.0
        %1920 = vmatprep.subr.mxu0 0.0
        %1921 = vmatpush1.msra.mxu0 0.0
        %1922 = vmatprep.subr.mxu0 0.0
        %1923 = vmatpush1.msra.mxu0 0.0
        %1924 = vmatprep.subr.mxu0 0.0
        %1925 = vmatpush1.msra.mxu0 0.0
        %1926 = vmatprep.mubr.f32.mxu0 0.0
        %1927 = vmatmul.mubr.f32.gmra.mrb[0].mxu0 %v258
        %v1928 = vpop.f32.mrb[0].mxu0
        %v1929 = vadd.f32 0.0, %v1928
        %v1930 = vpop.f32.mrb[0].mxu0
        %1931 = vmatprep.mubr.f32.mxu0 0.0
        %1932 = vmatmul.mubr.f32.gmra.mrb[0].mxu0 %v261
        %v1933 = vpop.f32.mrb[0].mxu0
        %v1934 = vadd.f32 0.0, %v1933
        %v1935 = vpop.f32.mrb[0].mxu0
        %1936 = vmatprep.mubr.f32.mxu0 0.0
        %1937 = vmatmul.mubr.f32.gmra.mrb[0].mxu0 %v264
        %v1938 = vpop.f32.mrb[0].mxu0
        %v1939 = vadd.f32 0.0, %v1938
        %v1940 = vpop.f32.mrb[0].mxu0
        %1941 = vmatprep.mubr.f32.mxu0 0.0
        %1942 = vmatmul.mubr.f32.gmra.mrb[0].mxu0 %v267
        %v1943 = vpop.f32.mrb[0].mxu0
        %v1944 = vadd.f32 0.0, %v1943
        %v1945 = vpop.f32.mrb[0].mxu0
        %1946 = vmatprep.mubr.f32.mxu0 0.0
        %1947 = vmatmul.mubr.f32.gmra.mrb[0].mxu0 %v270
        %v1948 = vpop.f32.mrb[0].mxu0
        %v1949 = vadd.f32 0.0, %v1948
        %v1950 = vpop.f32.mrb[0].mxu0
        %1951 = vmatprep.mubr.f32.mxu0 0.0
        %1952 = vmatmul.mubr.f32.gmra.mrb[0].mxu0 %v273
        %v1953 = vpop.f32.mrb[0].mxu0
        %v1954 = vadd.f32 0.0, %v1953
        %v1955 = vpop.f32.mrb[0].mxu0
        %1956 = vmatprep.mubr.f32.mxu0 0.0
        %1957 = vmatmul.mubr.f32.gmra.mrb[0].mxu0 %v276
        %v1958 = vpop.f32.mrb[0].mxu0
        %v1959 = vadd.f32 0.0, %v1958
        %v1960 = vpop.f32.mrb[0].mxu0
        %1961 = vmatprep.mubr.f32.mxu0 0.0
        %1962 = vmatmul.mubr.f32.gmra.mrb[0].mxu0 %v279
        %v1963 = vpop.f32.mrb[0].mxu0
        %v1964 = vadd.f32 0.0, %v1963
        %v1965 = vpop.f32.mrb[0].mxu0
        %1966 = vmatprep.mubr.f32.mxu0 0.0
        %1967 = vmatmul.mubr.f32.gmra.mrb[0].mxu0 %v282
        %v1968 = vpop.f32.mrb[0].mxu0
        %v1969 = vadd.f32 0.0, %v1968
        %v1970 = vpop.f32.mrb[0].mxu0
        %1971 = vmatprep.mubr.f32.mxu0 0.0
        %1972 = vmatmul.mubr.f32.gmra.mrb[0].mxu0 %v285
        %v1973 = vpop.f32.mrb[0].mxu0
        %v1974 = vadd.f32 0.0, %v1973
        %v1975 = vpop.f32.mrb[0].mxu0
        %1976 = vmatprep.mubr.f32.mxu0 0.0
        %1977 = vmatmul.mubr.f32.gmra.mrb[0].mxu0 %v288
        %v1978 = vpop.f32.mrb[0].mxu0
        %v1979 = vadd.f32 0.0, %v1978
        %v1980 = vpop.f32.mrb[0].mxu0
        %1981 = vmatprep.mubr.f32.mxu0 0.0
        %1982 = vmatmul.mubr.f32.gmra.mrb[0].mxu0 %v291
        %v1983 = vpop.f32.mrb[0].mxu0
        %v1984 = vadd.f32 0.0, %v1983
        %v1985 = vpop.f32.mrb[0].mxu0
        %1986 = vmatprep.mubr.f32.mxu0 0.0
        %1987 = vmatmul.mubr.f32.gmra.mrb[0].mxu0 %v294
        %v1988 = vpop.f32.mrb[0].mxu0
        %v1989 = vadd.f32 0.0, %v1988
        %v1990 = vpop.f32.mrb[0].mxu0
        %1991 = vmatprep.mubr.f32.mxu0 0.0
        %1992 = vmatmul.mubr.f32.gmra.mrb[0].mxu0 %v297
        %v1993 = vpop.f32.mrb[0].mxu0
        %v1994 = vadd.f32 0.0, %v1993
        %v1995 = vpop.f32.mrb[0].mxu0
        %1996 = vmatprep.mubr.f32.mxu0 0.0
        %1997 = vmatmul.mubr.f32.gmra.mrb[0].mxu0 %v300
        %v1998 = vpop.f32.mrb[0].mxu0
        %v1999 = vadd.f32 0.0, %v1998
        %v2000 = vpop.f32.mrb[0].mxu0
        %2001 = vmatprep.mubr.f32.mxu0 0.0
        %2002 = vmatmul.mubr.f32.gmra.mrb[0].mxu0 %v303
        %v2003 = vpop.f32.mrb[0].mxu0
        %v2004 = vadd.f32 0.0, %v2003
        %v2005 = vpop.f32.mrb[0].mxu0
        %2006 = vdwg.mxu0
        %2023 = vrot.lane.b32.xlu0 %v1929, 120
        %v2024 = vpop.permute.xlu0 %2023
        %2025 = vrot.lane.b32.xlu0 %v1934, 120
        %v2026 = vpop.permute.xlu0 %2025
        %2027 = vrot.lane.b32.xlu0 %v1939, 120
        %v2028 = vpop.permute.xlu0 %2027
        %2029 = vrot.lane.b32.xlu0 %v1944, 120
        %v2030 = vpop.permute.xlu0 %2029
        %2031 = vrot.lane.b32.xlu0 %v1949, 120
        %v2032 = vpop.permute.xlu0 %2031
        %2033 = vrot.lane.b32.xlu0 %v1954, 120
        %v2034 = vpop.permute.xlu0 %2033
        %2035 = vrot.lane.b32.xlu0 %v1959, 120
        %v2036 = vpop.permute.xlu0 %2035
        %2037 = vrot.lane.b32.xlu0 %v1964, 120
        %v2038 = vpop.permute.xlu0 %2037
        %2039 = vrot.lane.b32.xlu0 %v1969, 120
        %v2040 = vpop.permute.xlu0 %2039
        %2041 = vrot.lane.b32.xlu0 %v1974, 120
        %v2042 = vpop.permute.xlu0 %2041
        %2043 = vrot.lane.b32.xlu0 %v1979, 120
        %v2044 = vpop.permute.xlu0 %2043
        %2045 = vrot.lane.b32.xlu0 %v1984, 120
        %v2046 = vpop.permute.xlu0 %2045
        %2047 = vrot.lane.b32.xlu0 %v1989, 120
        %v2048 = vpop.permute.xlu0 %2047
        %2049 = vrot.lane.b32.xlu0 %v1994, 120
        %v2050 = vpop.permute.xlu0 %2049
        %2051 = vrot.lane.b32.xlu0 %v1999, 120
        %v2052 = vpop.permute.xlu0 %2051
        %2053 = vrot.lane.b32.xlu0 %v2004, 120
        %v2054 = vpop.permute.xlu0 %2053
        %v2055 = vsel %vm498, %v1929, 0
        %v2057 = vsel %vm498, %v1934, 0
        %v2059 = vsel %vm498, %v1939, 0
        %v2061 = vsel %vm498, %v1944, 0
        %v2063 = vsel %vm498, %v1949, 0
        %v2065 = vsel %vm498, %v1954, 0
        %v2067 = vsel %vm498, %v1959, 0
        %v2069 = vsel %vm498, %v1964, 0
        %v2071 = vsel %vm498, %v1969, 0
        %v2073 = vsel %vm498, %v1974, 0
        %v2075 = vsel %vm498, %v1979, 0
        %v2077 = vsel %vm498, %v1984, 0
        %v2079 = vsel %vm498, %v1989, 0
        %v2081 = vsel %vm498, %v1994, 0
        %v2083 = vsel %vm498, %v1999, 0
        %v2085 = vsel %vm498, %v2004, 0
        %v2087 = vsel %vm498, %v2024, 0
        %v2089 = vsel %vm498, %v2026, 0
        %v2091 = vsel %vm498, %v2028, 0
        %v2093 = vsel %vm498, %v2030, 0
        %v2095 = vsel %vm498, %v2032, 0
        %v2097 = vsel %vm498, %v2034, 0
        %v2099 = vsel %vm498, %v2036, 0
        %v2101 = vsel %vm498, %v2038, 0
        %v2103 = vsel %vm498, %v2040, 0
        %v2105 = vsel %vm498, %v2042, 0
        %v2107 = vsel %vm498, %v2044, 0
        %v2109 = vsel %vm498, %v2046, 0
        %v2111 = vsel %vm498, %v2048, 0
        %v2113 = vsel %vm498, %v2050, 0
        %v2115 = vsel %vm498, %v2052, 0
        %v2117 = vsel %vm498, %v2054, 0
        %2119 = vmatprep.subr.mxu0 0.0
        %2120 = vmatpush1.xpose.msra.mxu0 %v2087
        %2121 = vmatprep.subr.mxu0 0.0
        %2122 = vmatpush1.xpose.msra.mxu0 %v2089
        %2123 = vmatprep.subr.mxu0 0.0
        %2124 = vmatpush1.xpose.msra.mxu0 %v2091
        %2125 = vmatprep.subr.mxu0 0.0
        %2126 = vmatpush1.xpose.msra.mxu0 %v2093
        %2127 = vmatprep.subr.mxu0 0.0
        %2128 = vmatpush1.xpose.msra.mxu0 %v2095
        %2129 = vmatprep.subr.mxu0 0.0
        %2130 = vmatpush1.xpose.msra.mxu0 %v2097
        %2131 = vmatprep.subr.mxu0 0.0
        %2132 = vmatpush1.xpose.msra.mxu0 %v2099
        %2133 = vmatprep.subr.mxu0 0.0
        %2134 = vmatpush1.xpose.msra.mxu0 %v2101
        %2135 = vmatprep.subr.mxu0 0.0
        %2136 = vmatpush1.xpose.msra.mxu0 %v2103
        %2137 = vmatprep.subr.mxu0 0.0
        %2138 = vmatpush1.xpose.msra.mxu0 %v2105
        %2139 = vmatprep.subr.mxu0 0.0
        %2140 = vmatpush1.xpose.msra.mxu0 %v2107
        %2141 = vmatprep.subr.mxu0 0.0
        %2142 = vmatpush1.xpose.msra.mxu0 %v2109
        %2143 = vmatprep.subr.mxu0 0.0
        %2144 = vmatpush1.xpose.msra.mxu0 %v2111
        %2145 = vmatprep.subr.mxu0 0.0
        %2146 = vmatpush1.xpose.msra.mxu0 %v2113
        %2147 = vmatprep.subr.mxu0 0.0
        %2148 = vmatpush1.xpose.msra.mxu0 %v2115
        %2149 = vmatprep.subr.mxu0 0.0
        %2150 = vmatpush1.xpose.msra.mxu0 %v2117
        %2151 = vmatprep.subr.mxu0 0.0
        %2152 = vmatpush1.xpose.msra.mxu0 0.0
        %2153 = vmatprep.subr.mxu0 0.0
        %2154 = vmatpush1.xpose.msra.mxu0 0.0
        %2155 = vmatprep.subr.mxu0 0.0
        %2156 = vmatpush1.xpose.msra.mxu0 0.0
        %2157 = vmatprep.subr.mxu0 0.0
        %2158 = vmatpush1.xpose.msra.mxu0 0.0
        %2159 = vmatprep.subr.mxu0 0.0
        %2160 = vmatpush1.xpose.msra.mxu0 0.0
        %2161 = vmatprep.subr.mxu0 0.0
        %2162 = vmatpush1.xpose.msra.mxu0 0.0
        %2163 = vmatprep.subr.mxu0 0.0
        %2164 = vmatpush1.xpose.msra.mxu0 0.0
        %2165 = vmatprep.subr.mxu0 0.0
        %2166 = vmatpush1.xpose.msra.mxu0 0.0
        %2167 = vmatprep.subr.mxu0 0.0
        %2168 = vmatpush1.xpose.msra.mxu0 0.0
        %2169 = vmatprep.subr.mxu0 0.0
        %2170 = vmatpush1.xpose.msra.mxu0 0.0
        %2171 = vmatprep.subr.mxu0 0.0
        %2172 = vmatpush1.xpose.msra.mxu0 0.0
        %2173 = vmatprep.subr.mxu0 0.0
        %2174 = vmatpush1.xpose.msra.mxu0 0.0
        %2175 = vmatprep.subr.mxu0 0.0
        %2176 = vmatpush1.xpose.msra.mxu0 0.0
        %2177 = vmatprep.subr.mxu0 0.0
        %2178 = vmatpush1.xpose.msra.mxu0 0.0
        %2179 = vmatprep.subr.mxu0 0.0
        %2180 = vmatpush1.xpose.msra.mxu0 0.0
        %2181 = vmatprep.subr.mxu0 0.0
        %2182 = vmatpush1.xpose.msra.mxu0 0.0
        %2183 = vmatprep.mubr.f32.mxu0 0.0
        %2184 = vmatmul.mubr.f32.gmra.mrb[0].mxu0 %v2055
        %v2185 = vpop.f32.mrb[0].mxu0
        %v2186 = vadd.f32 0.0, %v2185
        %v2187 = vpop.f32.mrb[0].mxu0
        %2188 = vmatprep.mubr.f32.mxu0 0.0
        %2189 = vmatmul.mubr.f32.gmra.mrb[0].mxu0 %v2057
        %v2190 = vpop.f32.mrb[0].mxu0
        %v2191 = vadd.f32 0.0, %v2190
        %v2192 = vpop.f32.mrb[0].mxu0
        %2193 = vmatprep.mubr.f32.mxu0 0.0
        %2194 = vmatmul.mubr.f32.gmra.mrb[0].mxu0 %v2059
        %v2195 = vpop.f32.mrb[0].mxu0
        %v2196 = vadd.f32 0.0, %v2195
        %v2197 = vpop.f32.mrb[0].mxu0
        %2198 = vmatprep.mubr.f32.mxu0 0.0
        %2199 = vmatmul.mubr.f32.gmra.mrb[0].mxu0 %v2061
        %v2200 = vpop.f32.mrb[0].mxu0
        %v2201 = vadd.f32 0.0, %v2200
        %v2202 = vpop.f32.mrb[0].mxu0
        %2203 = vmatprep.mubr.f32.mxu0 0.0
        %2204 = vmatmul.mubr.f32.gmra.mrb[0].mxu0 %v2063
        %v2205 = vpop.f32.mrb[0].mxu0
        %v2206 = vadd.f32 0.0, %v2205
        %v2207 = vpop.f32.mrb[0].mxu0
        %2208 = vmatprep.mubr.f32.mxu0 0.0
        %2209 = vmatmul.mubr.f32.gmra.mrb[0].mxu0 %v2065
        %v2210 = vpop.f32.mrb[0].mxu0
        %v2211 = vadd.f32 0.0, %v2210
        %v2212 = vpop.f32.mrb[0].mxu0
        %2213 = vmatprep.mubr.f32.mxu0 0.0
        %2214 = vmatmul.mubr.f32.gmra.mrb[0].mxu0 %v2067
        %v2215 = vpop.f32.mrb[0].mxu0
        %v2216 = vadd.f32 0.0, %v2215
        %v2217 = vpop.f32.mrb[0].mxu0
        %2218 = vmatprep.mubr.f32.mxu0 0.0
        %2219 = vmatmul.mubr.f32.gmra.mrb[0].mxu0 %v2069
        %v2220 = vpop.f32.mrb[0].mxu0
        %v2221 = vadd.f32 0.0, %v2220
        %v2222 = vpop.f32.mrb[0].mxu0
        %2223 = vmatprep.mubr.f32.mxu0 0.0
        %2224 = vmatmul.mubr.f32.gmra.mrb[0].mxu0 %v2071
        %v2225 = vpop.f32.mrb[0].mxu0
        %v2226 = vadd.f32 0.0, %v2225
        %v2227 = vpop.f32.mrb[0].mxu0
        %2228 = vmatprep.mubr.f32.mxu0 0.0
        %2229 = vmatmul.mubr.f32.gmra.mrb[0].mxu0 %v2073
        %v2230 = vpop.f32.mrb[0].mxu0
        %v2231 = vadd.f32 0.0, %v2230
        %v2232 = vpop.f32.mrb[0].mxu0
        %2233 = vmatprep.mubr.f32.mxu0 0.0
        %2234 = vmatmul.mubr.f32.gmra.mrb[0].mxu0 %v2075
        %v2235 = vpop.f32.mrb[0].mxu0
        %v2236 = vadd.f32 0.0, %v2235
        %v2237 = vpop.f32.mrb[0].mxu0
        %2238 = vmatprep.mubr.f32.mxu0 0.0
        %2239 = vmatmul.mubr.f32.gmra.mrb[0].mxu0 %v2077
        %v2240 = vpop.f32.mrb[0].mxu0
        %v2241 = vadd.f32 0.0, %v2240
        %v2242 = vpop.f32.mrb[0].mxu0
        %2243 = vmatprep.mubr.f32.mxu0 0.0
        %2244 = vmatmul.mubr.f32.gmra.mrb[0].mxu0 %v2079
        %v2245 = vpop.f32.mrb[0].mxu0
        %v2246 = vadd.f32 0.0, %v2245
        %v2247 = vpop.f32.mrb[0].mxu0
        %2248 = vmatprep.mubr.f32.mxu0 0.0
        %2249 = vmatmul.mubr.f32.gmra.mrb[0].mxu0 %v2081
        %v2250 = vpop.f32.mrb[0].mxu0
        %v2251 = vadd.f32 0.0, %v2250
        %v2252 = vpop.f32.mrb[0].mxu0
        %2253 = vmatprep.mubr.f32.mxu0 0.0
        %2254 = vmatmul.mubr.f32.gmra.mrb[0].mxu0 %v2083
        %v2255 = vpop.f32.mrb[0].mxu0
        %v2256 = vadd.f32 0.0, %v2255
        %v2257 = vpop.f32.mrb[0].mxu0
        %2258 = vmatprep.mubr.f32.mxu0 0.0
        %2259 = vmatmul.mubr.f32.gmra.mrb[0].mxu0 %v2085
        %v2260 = vpop.f32.mrb[0].mxu0
        %v2261 = vadd.f32 0.0, %v2260
        %v2262 = vpop.f32.mrb[0].mxu0
        %2263 = vdwg.mxu0
        %v2264 = vsel %vm710, %v2186, -1e+30
        %v2265 = vsel %vm710, %v2191, -1e+30
        %v2266 = vsel %vm710, %v2196, -1e+30
        %v2267 = vsel %vm710, %v2201, -1e+30
        %v2268 = vsel %vm710, %v2206, -1e+30
        %v2269 = vsel %vm710, %v2211, -1e+30
        %v2270 = vsel %vm710, %v2216, -1e+30
        %v2271 = vsel %vm710, %v2221, -1e+30
        %v2272 = vsel %vm710, %v2226, -1e+30
        %v2273 = vsel %vm710, %v2231, -1e+30
        %v2274 = vsel %vm710, %v2236, -1e+30
        %v2275 = vsel %vm710, %v2241, -1e+30
        %v2276 = vsel %vm710, %v2246, -1e+30
        %v2277 = vsel %vm710, %v2251, -1e+30
        %v2278 = vsel %vm710, %v2256, -1e+30
        %v2279 = vsel %vm710, %v2261, -1e+30
        %2280 = vmax.xlane.f32.xlu0 %v2264
        %v2281 = vpop.xlane.xlu0 %2280
        %2282 = vmax.xlane.f32.xlu0 %v2265
        %v2283 = vpop.xlane.xlu0 %2282
        %2284 = vmax.xlane.f32.xlu0 %v2266
        %v2285 = vpop.xlane.xlu0 %2284
        %2286 = vmax.xlane.f32.xlu0 %v2267
        %v2287 = vpop.xlane.xlu0 %2286
        %2288 = vmax.xlane.f32.xlu0 %v2268
        %v2289 = vpop.xlane.xlu0 %2288
        %2290 = vmax.xlane.f32.xlu0 %v2269
        %v2291 = vpop.xlane.xlu0 %2290
        %2292 = vmax.xlane.f32.xlu0 %v2270
        %v2293 = vpop.xlane.xlu0 %2292
        %2294 = vmax.xlane.f32.xlu0 %v2271
        %v2295 = vpop.xlane.xlu0 %2294
        %2296 = vmax.xlane.f32.xlu0 %v2272
        %v2297 = vpop.xlane.xlu0 %2296
        %2298 = vmax.xlane.f32.xlu0 %v2273
        %v2299 = vpop.xlane.xlu0 %2298
        %2300 = vmax.xlane.f32.xlu0 %v2274
        %v2301 = vpop.xlane.xlu0 %2300
        %2302 = vmax.xlane.f32.xlu0 %v2275
        %v2303 = vpop.xlane.xlu0 %2302
        %2304 = vmax.xlane.f32.xlu0 %v2276
        %v2305 = vpop.xlane.xlu0 %2304
        %2306 = vmax.xlane.f32.xlu0 %v2277
        %v2307 = vpop.xlane.xlu0 %2306
        %2308 = vmax.xlane.f32.xlu0 %v2278
        %v2309 = vpop.xlane.xlu0 %2308
        %2310 = vmax.xlane.f32.xlu0 %v2279
        %v2311 = vpop.xlane.xlu0 %2310
        %v2312 = vsub.f32 %v2264, %v2281
        %v2313 = vsub.f32 %v2265, %v2283
        %v2314 = vsub.f32 %v2266, %v2285
        %v2315 = vsub.f32 %v2267, %v2287
        %v2316 = vsub.f32 %v2268, %v2289
        %v2317 = vsub.f32 %v2269, %v2291
        %v2318 = vsub.f32 %v2270, %v2293
        %v2319 = vsub.f32 %v2271, %v2295
        %v2320 = vsub.f32 %v2272, %v2297
        %v2321 = vsub.f32 %v2273, %v2299
        %v2322 = vsub.f32 %v2274, %v2301
        %v2323 = vsub.f32 %v2275, %v2303
        %v2324 = vsub.f32 %v2276, %v2305
        %v2325 = vsub.f32 %v2277, %v2307
        %v2326 = vsub.f32 %v2278, %v2309
        %v2327 = vsub.f32 %v2279, %v2311
        %v2328 = vmul.f32 %v2312, 1.442695
        %v2329 = vpow.pop %v2328
        %v2330 = vmul.f32 %v2313, 1.442695
        %v2331 = vpow.pop %v2330
        %v2332 = vmul.f32 %v2314, 1.442695
        %v2333 = vpow.pop %v2332
        %v2334 = vmul.f32 %v2315, 1.442695
        %v2335 = vpow.pop %v2334
        %v2336 = vmul.f32 %v2316, 1.442695
        %v2337 = vpow.pop %v2336
        %v2338 = vmul.f32 %v2317, 1.442695
        %v2339 = vpow.pop %v2338
        %v2340 = vmul.f32 %v2318, 1.442695
        %v2341 = vpow.pop %v2340
        %v2342 = vmul.f32 %v2319, 1.442695
        %v2343 = vpow.pop %v2342
        %v2344 = vmul.f32 %v2320, 1.442695
        %v2345 = vpow.pop %v2344
        %v2346 = vmul.f32 %v2321, 1.442695
        %v2347 = vpow.pop %v2346
        %v2348 = vmul.f32 %v2322, 1.442695
        %v2349 = vpow.pop %v2348
        %v2350 = vmul.f32 %v2323, 1.442695
        %v2351 = vpow.pop %v2350
        %v2352 = vmul.f32 %v2324, 1.442695
        %v2353 = vpow.pop %v2352
        %v2354 = vmul.f32 %v2325, 1.442695
        %v2355 = vpow.pop %v2354
        %v2356 = vmul.f32 %v2326, 1.442695
        %v2357 = vpow.pop %v2356
        %v2358 = vmul.f32 %v2327, 1.442695
        %v2359 = vpow.pop %v2358
        %2360 = vadd.xlane.f32.xlu0 %v2329
        %v2361 = vpop.xlane.xlu0 %2360
        %2362 = vadd.xlane.f32.xlu0 %v2331
        %v2363 = vpop.xlane.xlu0 %2362
        %2364 = vadd.xlane.f32.xlu0 %v2333
        %v2365 = vpop.xlane.xlu0 %2364
        %2366 = vadd.xlane.f32.xlu0 %v2335
        %v2367 = vpop.xlane.xlu0 %2366
        %2368 = vadd.xlane.f32.xlu0 %v2337
        %v2369 = vpop.xlane.xlu0 %2368
        %2370 = vadd.xlane.f32.xlu0 %v2339
        %v2371 = vpop.xlane.xlu0 %2370
        %2372 = vadd.xlane.f32.xlu0 %v2341
        %v2373 = vpop.xlane.xlu0 %2372
        %2374 = vadd.xlane.f32.xlu0 %v2343
        %v2375 = vpop.xlane.xlu0 %2374
        %2376 = vadd.xlane.f32.xlu0 %v2345
        %v2377 = vpop.xlane.xlu0 %2376
        %2378 = vadd.xlane.f32.xlu0 %v2347
        %v2379 = vpop.xlane.xlu0 %2378
        %2380 = vadd.xlane.f32.xlu0 %v2349
        %v2381 = vpop.xlane.xlu0 %2380
        %2382 = vadd.xlane.f32.xlu0 %v2351
        %v2383 = vpop.xlane.xlu0 %2382
        %2384 = vadd.xlane.f32.xlu0 %v2353
        %v2385 = vpop.xlane.xlu0 %2384
        %2386 = vadd.xlane.f32.xlu0 %v2355
        %v2387 = vpop.xlane.xlu0 %2386
        %2388 = vadd.xlane.f32.xlu0 %v2357
        %v2389 = vpop.xlane.xlu0 %2388
        %2390 = vadd.xlane.f32.xlu0 %v2359
        %v2391 = vpop.xlane.xlu0 %2390
        %v2392 = vrcp.pop %v2361
        %v2393 = vrcp.pop %v2363
        %v2394 = vrcp.pop %v2365
        %v2395 = vrcp.pop %v2367
        %v2396 = vrcp.pop %v2369
        %v2397 = vrcp.pop %v2371
        %v2398 = vrcp.pop %v2373
        %v2399 = vrcp.pop %v2375
        %v2400 = vrcp.pop %v2377
        %v2401 = vrcp.pop %v2379
        %v2402 = vrcp.pop %v2381
        %v2403 = vrcp.pop %v2383
        %v2404 = vrcp.pop %v2385
        %v2405 = vrcp.pop %v2387
        %v2406 = vrcp.pop %v2389
        %v2407 = vrcp.pop %v2391
        %v2408 = vmul.f32 %v2329, %v2392
        %v2409 = vmul.f32 %v2331, %v2393
        %v2410 = vmul.f32 %v2333, %v2394
        %v2411 = vmul.f32 %v2335, %v2395
        %v2412 = vmul.f32 %v2337, %v2396
        %v2413 = vmul.f32 %v2339, %v2397
        %v2414 = vmul.f32 %v2341, %v2398
        %v2415 = vmul.f32 %v2343, %v2399
        %v2416 = vmul.f32 %v2345, %v2400
        %v2417 = vmul.f32 %v2347, %v2401
        %v2418 = vmul.f32 %v2349, %v2402
        %v2419 = vmul.f32 %v2351, %v2403
        %v2420 = vmul.f32 %v2353, %v2404
        %v2421 = vmul.f32 %v2355, %v2405
        %v2422 = vmul.f32 %v2357, %v2406
        %v2423 = vmul.f32 %v2359, %v2407
        %s2424 = scalar_lea.vmem %s225, 256 [#allocation2]
        %2425 = vst [vmem:[%s2424] sm:$0xff] %v2408
        %2426 = vst [vmem:[%s2424 + $0x8] sm:$0xff] %v2409
        %2427 = vst [vmem:[%s2424 + $0x10] sm:$0xff] %v2410
        %2428 = vst [vmem:[%s2424 + $0x18] sm:$0xff] %v2411
        %2429 = vst [vmem:[%s2424 + $0x20] sm:$0xff] %v2412
        %2430 = vst [vmem:[%s2424 + $0x28] sm:$0xff] %v2413
        %2431 = vst [vmem:[%s2424 + $0x30] sm:$0xff] %v2414
        %2432 = vst [vmem:[%s2424 + $0x38] sm:$0xff] %v2415
        %2433 = vst [vmem:[%s2424 + $0x40] sm:$0xff] %v2416
        %2434 = vst [vmem:[%s2424 + $0x48] sm:$0xff] %v2417
        %2435 = vst [vmem:[%s2424 + $0x50] sm:$0xff] %v2418
        %2436 = vst [vmem:[%s2424 + $0x58] sm:$0xff] %v2419
        %2437 = vst [vmem:[%s2424 + $0x60] sm:$0xff] %v2420
        %2438 = vst [vmem:[%s2424 + $0x68] sm:$0xff] %v2421
        %2439 = vst [vmem:[%s2424 + $0x70] sm:$0xff] %v2422
        %2440 = vst [vmem:[%s2424 + $0x78] sm:$0xff] %v2423
        %2441 = vrot.lane.b32.xlu0 %v1929, 112
        %v2442 = vpop.permute.xlu0 %2441
        %2443 = vrot.lane.b32.xlu0 %v1934, 112
        %v2444 = vpop.permute.xlu0 %2443
        %2445 = vrot.lane.b32.xlu0 %v1939, 112
        %v2446 = vpop.permute.xlu0 %2445
        %2447 = vrot.lane.b32.xlu0 %v1944, 112
        %v2448 = vpop.permute.xlu0 %2447
        %2449 = vrot.lane.b32.xlu0 %v1949, 112
        %v2450 = vpop.permute.xlu0 %2449
        %2451 = vrot.lane.b32.xlu0 %v1954, 112
        %v2452 = vpop.permute.xlu0 %2451
        %2453 = vrot.lane.b32.xlu0 %v1959, 112
        %v2454 = vpop.permute.xlu0 %2453
        %2455 = vrot.lane.b32.xlu0 %v1964, 112
        %v2456 = vpop.permute.xlu0 %2455
        %2457 = vrot.lane.b32.xlu0 %v1969, 112
        %v2458 = vpop.permute.xlu0 %2457
        %2459 = vrot.lane.b32.xlu0 %v1974, 112
        %v2460 = vpop.permute.xlu0 %2459
        %2461 = vrot.lane.b32.xlu0 %v1979, 112
        %v2462 = vpop.permute.xlu0 %2461
        %2463 = vrot.lane.b32.xlu0 %v1984, 112
        %v2464 = vpop.permute.xlu0 %2463
        %2465 = vrot.lane.b32.xlu0 %v1989, 112
        %v2466 = vpop.permute.xlu0 %2465
        %2467 = vrot.lane.b32.xlu0 %v1994, 112
        %v2468 = vpop.permute.xlu0 %2467
        %2469 = vrot.lane.b32.xlu0 %v1999, 112
        %v2470 = vpop.permute.xlu0 %2469
        %2471 = vrot.lane.b32.xlu0 %v2004, 112
        %v2472 = vpop.permute.xlu0 %2471
        %2489 = vmatprep.subr.mxu0 0.0
        %2490 = vmatpush1.msra.mxu0 %v2442
        %2491 = vmatprep.subr.mxu0 0.0
        %2492 = vmatpush1.msra.mxu0 %v2444
        %2493 = vmatprep.subr.mxu0 0.0
        %2494 = vmatpush1.msra.mxu0 %v2446
        %2495 = vmatprep.subr.mxu0 0.0
        %2496 = vmatpush1.msra.mxu0 %v2448
        %2497 = vmatprep.subr.mxu0 0.0
        %2498 = vmatpush1.msra.mxu0 %v2450
        %2499 = vmatprep.subr.mxu0 0.0
        %2500 = vmatpush1.msra.mxu0 %v2452
        %2501 = vmatprep.subr.mxu0 0.0
        %2502 = vmatpush1.msra.mxu0 %v2454
        %2503 = vmatprep.subr.mxu0 0.0
        %2504 = vmatpush1.msra.mxu0 %v2456
        %2505 = vmatprep.subr.mxu0 0.0
        %2506 = vmatpush1.msra.mxu0 %v2458
        %2507 = vmatprep.subr.mxu0 0.0
        %2508 = vmatpush1.msra.mxu0 %v2460
        %2509 = vmatprep.subr.mxu0 0.0
        %2510 = vmatpush1.msra.mxu0 %v2462
        %2511 = vmatprep.subr.mxu0 0.0
        %2512 = vmatpush1.msra.mxu0 %v2464
        %2513 = vmatprep.subr.mxu0 0.0
        %2514 = vmatpush1.msra.mxu0 %v2466
        %2515 = vmatprep.subr.mxu0 0.0
        %2516 = vmatpush1.msra.mxu0 %v2468
        %2517 = vmatprep.subr.mxu0 0.0
        %2518 = vmatpush1.msra.mxu0 %v2470
        %2519 = vmatprep.subr.mxu0 0.0
        %2520 = vmatpush1.msra.mxu0 %v2472
        %2521 = vmatprep.subr.mxu0 0.0
        %2522 = vmatpush1.msra.mxu0 0.0
        %2523 = vmatprep.subr.mxu0 0.0
        %2524 = vmatpush1.msra.mxu0 0.0
        %2525 = vmatprep.subr.mxu0 0.0
        %2526 = vmatpush1.msra.mxu0 0.0
        %2527 = vmatprep.subr.mxu0 0.0
        %2528 = vmatpush1.msra.mxu0 0.0
        %2529 = vmatprep.subr.mxu0 0.0
        %2530 = vmatpush1.msra.mxu0 0.0
        %2531 = vmatprep.subr.mxu0 0.0
        %2532 = vmatpush1.msra.mxu0 0.0
        %2533 = vmatprep.subr.mxu0 0.0
        %2534 = vmatpush1.msra.mxu0 0.0
        %2535 = vmatprep.subr.mxu0 0.0
        %2536 = vmatpush1.msra.mxu0 0.0
        %2537 = vmatprep.subr.mxu0 0.0
        %2538 = vmatpush1.msra.mxu0 0.0
        %2539 = vmatprep.subr.mxu0 0.0
        %2540 = vmatpush1.msra.mxu0 0.0
        %2541 = vmatprep.subr.mxu0 0.0
        %2542 = vmatpush1.msra.mxu0 0.0
        %2543 = vmatprep.subr.mxu0 0.0
        %2544 = vmatpush1.msra.mxu0 0.0
        %2545 = vmatprep.subr.mxu0 0.0
        %2546 = vmatpush1.msra.mxu0 0.0
        %2547 = vmatprep.subr.mxu0 0.0
        %2548 = vmatpush1.msra.mxu0 0.0
        %2549 = vmatprep.subr.mxu0 0.0
        %2550 = vmatpush1.msra.mxu0 0.0
        %2551 = vmatprep.subr.mxu0 0.0
        %2552 = vmatpush1.msra.mxu0 0.0
        %2553 = vmatprep.mubr.f32.mxu0 0.0
        %2554 = vmatmul.mubr.f32.gmra.mrb[0].mxu0 %v2408
        %v2555 = vpop.f32.mrb[0].mxu0
        %v2556 = vadd.f32 0.0, %v2555
        %v2557 = vpop.f32.mrb[0].mxu0
        %2558 = vmatprep.mubr.f32.mxu0 0.0
        %2559 = vmatmul.mubr.f32.gmra.mrb[0].mxu0 %v2409
        %v2560 = vpop.f32.mrb[0].mxu0
        %v2561 = vadd.f32 0.0, %v2560
        %v2562 = vpop.f32.mrb[0].mxu0
        %2563 = vmatprep.mubr.f32.mxu0 0.0
        %2564 = vmatmul.mubr.f32.gmra.mrb[0].mxu0 %v2410
        %v2565 = vpop.f32.mrb[0].mxu0
        %v2566 = vadd.f32 0.0, %v2565
        %v2567 = vpop.f32.mrb[0].mxu0
        %2568 = vmatprep.mubr.f32.mxu0 0.0
        %2569 = vmatmul.mubr.f32.gmra.mrb[0].mxu0 %v2411
        %v2570 = vpop.f32.mrb[0].mxu0
        %v2571 = vadd.f32 0.0, %v2570
        %v2572 = vpop.f32.mrb[0].mxu0
        %2573 = vmatprep.mubr.f32.mxu0 0.0
        %2574 = vmatmul.mubr.f32.gmra.mrb[0].mxu0 %v2412
        %v2575 = vpop.f32.mrb[0].mxu0
        %v2576 = vadd.f32 0.0, %v2575
        %v2577 = vpop.f32.mrb[0].mxu0
        %2578 = vmatprep.mubr.f32.mxu0 0.0
        %2579 = vmatmul.mubr.f32.gmra.mrb[0].mxu0 %v2413
        %v2580 = vpop.f32.mrb[0].mxu0
        %v2581 = vadd.f32 0.0, %v2580
        %v2582 = vpop.f32.mrb[0].mxu0
        %2583 = vmatprep.mubr.f32.mxu0 0.0
        %2584 = vmatmul.mubr.f32.gmra.mrb[0].mxu0 %v2414
        %v2585 = vpop.f32.mrb[0].mxu0
        %v2586 = vadd.f32 0.0, %v2585
        %v2587 = vpop.f32.mrb[0].mxu0
        %2588 = vmatprep.mubr.f32.mxu0 0.0
        %2589 = vmatmul.mubr.f32.gmra.mrb[0].mxu0 %v2415
        %v2590 = vpop.f32.mrb[0].mxu0
        %v2591 = vadd.f32 0.0, %v2590
        %v2592 = vpop.f32.mrb[0].mxu0
        %2593 = vmatprep.mubr.f32.mxu0 0.0
        %2594 = vmatmul.mubr.f32.gmra.mrb[0].mxu0 %v2416
        %v2595 = vpop.f32.mrb[0].mxu0
        %v2596 = vadd.f32 0.0, %v2595
        %v2597 = vpop.f32.mrb[0].mxu0
        %2598 = vmatprep.mubr.f32.mxu0 0.0
        %2599 = vmatmul.mubr.f32.gmra.mrb[0].mxu0 %v2417
        %v2600 = vpop.f32.mrb[0].mxu0
        %v2601 = vadd.f32 0.0, %v2600
        %v2602 = vpop.f32.mrb[0].mxu0
        %2603 = vmatprep.mubr.f32.mxu0 0.0
        %2604 = vmatmul.mubr.f32.gmra.mrb[0].mxu0 %v2418
        %v2605 = vpop.f32.mrb[0].mxu0
        %v2606 = vadd.f32 0.0, %v2605
        %v2607 = vpop.f32.mrb[0].mxu0
        %2608 = vmatprep.mubr.f32.mxu0 0.0
        %2609 = vmatmul.mubr.f32.gmra.mrb[0].mxu0 %v2419
        %v2610 = vpop.f32.mrb[0].mxu0
        %v2611 = vadd.f32 0.0, %v2610
        %v2612 = vpop.f32.mrb[0].mxu0
        %2613 = vmatprep.mubr.f32.mxu0 0.0
        %2614 = vmatmul.mubr.f32.gmra.mrb[0].mxu0 %v2420
        %v2615 = vpop.f32.mrb[0].mxu0
        %v2616 = vadd.f32 0.0, %v2615
        %v2617 = vpop.f32.mrb[0].mxu0
        %2618 = vmatprep.mubr.f32.mxu0 0.0
        %2619 = vmatmul.mubr.f32.gmra.mrb[0].mxu0 %v2421
        %v2620 = vpop.f32.mrb[0].mxu0
        %v2621 = vadd.f32 0.0, %v2620
        %v2622 = vpop.f32.mrb[0].mxu0
        %2623 = vmatprep.mubr.f32.mxu0 0.0
        %2624 = vmatmul.mubr.f32.gmra.mrb[0].mxu0 %v2422
        %v2625 = vpop.f32.mrb[0].mxu0
        %v2626 = vadd.f32 0.0, %v2625
        %v2627 = vpop.f32.mrb[0].mxu0
        %2628 = vmatprep.mubr.f32.mxu0 0.0
        %2629 = vmatmul.mubr.f32.gmra.mrb[0].mxu0 %v2423
        %v2630 = vpop.f32.mrb[0].mxu0
        %v2631 = vadd.f32 0.0, %v2630
        %v2632 = vpop.f32.mrb[0].mxu0
        %2633 = vdwg.mxu0
        %s2634 = scalar_lea.vmem %s1, 96
        %v2635 = vld [vmem:[%s2634] sm:$0xff]
        %v2636 = vld [vmem:[%s2634 + $0x8] sm:$0xff]
        %v2637 = vld [vmem:[%s2634 + $0x10] sm:$0xff]
        %v2638 = vld [vmem:[%s2634 + $0x18] sm:$0xff]
        %2639 = vmatprep.subr.mxu0 0.0
        %2640 = vmatpush1.msra.mxu0 %v2635
        %2641 = vmatprep.subr.mxu0 0.0
        %2642 = vmatpush1.msra.mxu0 %v2636
        %2643 = vmatprep.subr.mxu0 0.0
        %2644 = vmatpush1.msra.mxu0 %v2637
        %2645 = vmatprep.subr.mxu0 0.0
        %2646 = vmatpush1.msra.mxu0 %v2638
        %2647 = vmatprep.subr.mxu0 0.0
        %2648 = vmatpush1.msra.mxu0 0.0
        %2649 = vmatprep.subr.mxu0 0.0
        %2650 = vmatpush1.msra.mxu0 0.0
        %2651 = vmatprep.subr.mxu0 0.0
        %2652 = vmatpush1.msra.mxu0 0.0
        %2653 = vmatprep.subr.mxu0 0.0
        %2654 = vmatpush1.msra.mxu0 0.0
        %2655 = vmatprep.subr.mxu0 0.0
        %2656 = vmatpush1.msra.mxu0 0.0
        %2657 = vmatprep.subr.mxu0 0.0
        %2658 = vmatpush1.msra.mxu0 0.0
        %2659 = vmatprep.subr.mxu0 0.0
        %2660 = vmatpush1.msra.mxu0 0.0
        %2661 = vmatprep.subr.mxu0 0.0
        %2662 = vmatpush1.msra.mxu0 0.0
        %2663 = vmatprep.subr.mxu0 0.0
        %2664 = vmatpush1.msra.mxu0 0.0
        %2665 = vmatprep.subr.mxu0 0.0
        %2666 = vmatpush1.msra.mxu0 0.0
        %2667 = vmatprep.subr.mxu0 0.0
        %2668 = vmatpush1.msra.mxu0 0.0
        %2669 = vmatprep.subr.mxu0 0.0
        %2670 = vmatpush1.msra.mxu0 0.0
        %2671 = vmatprep.subr.mxu0 0.0
        %2672 = vmatpush1.msra.mxu0 0.0
        %2673 = vmatprep.subr.mxu0 0.0
        %2674 = vmatpush1.msra.mxu0 0.0
        %2675 = vmatprep.subr.mxu0 0.0
        %2676 = vmatpush1.msra.mxu0 0.0
        %2677 = vmatprep.subr.mxu0 0.0
        %2678 = vmatpush1.msra.mxu0 0.0
        %2679 = vmatprep.subr.mxu0 0.0
        %2680 = vmatpush1.msra.mxu0 0.0
        %2681 = vmatprep.subr.mxu0 0.0
        %2682 = vmatpush1.msra.mxu0 0.0
        %2683 = vmatprep.subr.mxu0 0.0
        %2684 = vmatpush1.msra.mxu0 0.0
        %2685 = vmatprep.subr.mxu0 0.0
        %2686 = vmatpush1.msra.mxu0 0.0
        %2687 = vmatprep.subr.mxu0 0.0
        %2688 = vmatpush1.msra.mxu0 0.0
        %2689 = vmatprep.subr.mxu0 0.0
        %2690 = vmatpush1.msra.mxu0 0.0
        %2691 = vmatprep.subr.mxu0 0.0
        %2692 = vmatpush1.msra.mxu0 0.0
        %2693 = vmatprep.subr.mxu0 0.0
        %2694 = vmatpush1.msra.mxu0 0.0
        %2695 = vmatprep.subr.mxu0 0.0
        %2696 = vmatpush1.msra.mxu0 0.0
        %2697 = vmatprep.subr.mxu0 0.0
        %2698 = vmatpush1.msra.mxu0 0.0
        %2699 = vmatprep.subr.mxu0 0.0
        %2700 = vmatpush1.msra.mxu0 0.0
        %2701 = vmatprep.subr.mxu0 0.0
        %2702 = vmatpush1.msra.mxu0 0.0
        %2703 = vmatprep.mubr.f32.mxu0 0.0
        %2704 = vmatmul.mubr.f32.gmra.mrb[0].mxu0 %v258
        %v2705 = vpop.f32.mrb[0].mxu0
        %v2706 = vadd.f32 0.0, %v2705
        %v2707 = vpop.f32.mrb[0].mxu0
        %2708 = vmatprep.mubr.f32.mxu0 0.0
        %2709 = vmatmul.mubr.f32.gmra.mrb[0].mxu0 %v261
        %v2710 = vpop.f32.mrb[0].mxu0
        %v2711 = vadd.f32 0.0, %v2710
        %v2712 = vpop.f32.mrb[0].mxu0
        %2713 = vmatprep.mubr.f32.mxu0 0.0
        %2714 = vmatmul.mubr.f32.gmra.mrb[0].mxu0 %v264
        %v2715 = vpop.f32.mrb[0].mxu0
        %v2716 = vadd.f32 0.0, %v2715
        %v2717 = vpop.f32.mrb[0].mxu0
        %2718 = vmatprep.mubr.f32.mxu0 0.0
        %2719 = vmatmul.mubr.f32.gmra.mrb[0].mxu0 %v267
        %v2720 = vpop.f32.mrb[0].mxu0
        %v2721 = vadd.f32 0.0, %v2720
        %v2722 = vpop.f32.mrb[0].mxu0
        %2723 = vmatprep.mubr.f32.mxu0 0.0
        %2724 = vmatmul.mubr.f32.gmra.mrb[0].mxu0 %v270
        %v2725 = vpop.f32.mrb[0].mxu0
        %v2726 = vadd.f32 0.0, %v2725
        %v2727 = vpop.f32.mrb[0].mxu0
        %2728 = vmatprep.mubr.f32.mxu0 0.0
        %2729 = vmatmul.mubr.f32.gmra.mrb[0].mxu0 %v273
        %v2730 = vpop.f32.mrb[0].mxu0
        %v2731 = vadd.f32 0.0, %v2730
        %v2732 = vpop.f32.mrb[0].mxu0
        %2733 = vmatprep.mubr.f32.mxu0 0.0
        %2734 = vmatmul.mubr.f32.gmra.mrb[0].mxu0 %v276
        %v2735 = vpop.f32.mrb[0].mxu0
        %v2736 = vadd.f32 0.0, %v2735
        %v2737 = vpop.f32.mrb[0].mxu0
        %2738 = vmatprep.mubr.f32.mxu0 0.0
        %2739 = vmatmul.mubr.f32.gmra.mrb[0].mxu0 %v279
        %v2740 = vpop.f32.mrb[0].mxu0
        %v2741 = vadd.f32 0.0, %v2740
        %v2742 = vpop.f32.mrb[0].mxu0
        %2743 = vmatprep.mubr.f32.mxu0 0.0
        %2744 = vmatmul.mubr.f32.gmra.mrb[0].mxu0 %v282
        %v2745 = vpop.f32.mrb[0].mxu0
        %v2746 = vadd.f32 0.0, %v2745
        %v2747 = vpop.f32.mrb[0].mxu0
        %2748 = vmatprep.mubr.f32.mxu0 0.0
        %2749 = vmatmul.mubr.f32.gmra.mrb[0].mxu0 %v285
        %v2750 = vpop.f32.mrb[0].mxu0
        %v2751 = vadd.f32 0.0, %v2750
        %v2752 = vpop.f32.mrb[0].mxu0
        %2753 = vmatprep.mubr.f32.mxu0 0.0
        %2754 = vmatmul.mubr.f32.gmra.mrb[0].mxu0 %v288
        %v2755 = vpop.f32.mrb[0].mxu0
        %v2756 = vadd.f32 0.0, %v2755
        %v2757 = vpop.f32.mrb[0].mxu0
        %2758 = vmatprep.mubr.f32.mxu0 0.0
        %2759 = vmatmul.mubr.f32.gmra.mrb[0].mxu0 %v291
        %v2760 = vpop.f32.mrb[0].mxu0
        %v2761 = vadd.f32 0.0, %v2760
        %v2762 = vpop.f32.mrb[0].mxu0
        %2763 = vmatprep.mubr.f32.mxu0 0.0
        %2764 = vmatmul.mubr.f32.gmra.mrb[0].mxu0 %v294
        %v2765 = vpop.f32.mrb[0].mxu0
        %v2766 = vadd.f32 0.0, %v2765
        %v2767 = vpop.f32.mrb[0].mxu0
        %2768 = vmatprep.mubr.f32.mxu0 0.0
        %2769 = vmatmul.mubr.f32.gmra.mrb[0].mxu0 %v297
        %v2770 = vpop.f32.mrb[0].mxu0
        %v2771 = vadd.f32 0.0, %v2770
        %v2772 = vpop.f32.mrb[0].mxu0
        %2773 = vmatprep.mubr.f32.mxu0 0.0
        %2774 = vmatmul.mubr.f32.gmra.mrb[0].mxu0 %v300
        %v2775 = vpop.f32.mrb[0].mxu0
        %v2776 = vadd.f32 0.0, %v2775
        %v2777 = vpop.f32.mrb[0].mxu0
        %2778 = vmatprep.mubr.f32.mxu0 0.0
        %2779 = vmatmul.mubr.f32.gmra.mrb[0].mxu0 %v303
        %v2780 = vpop.f32.mrb[0].mxu0
        %v2781 = vadd.f32 0.0, %v2780
        %v2782 = vpop.f32.mrb[0].mxu0
        %2783 = vdwg.mxu0
        %2800 = vrot.lane.b32.xlu0 %v2706, 120
        %v2801 = vpop.permute.xlu0 %2800
        %2802 = vrot.lane.b32.xlu0 %v2711, 120
        %v2803 = vpop.permute.xlu0 %2802
        %2804 = vrot.lane.b32.xlu0 %v2716, 120
        %v2805 = vpop.permute.xlu0 %2804
        %2806 = vrot.lane.b32.xlu0 %v2721, 120
        %v2807 = vpop.permute.xlu0 %2806
        %2808 = vrot.lane.b32.xlu0 %v2726, 120
        %v2809 = vpop.permute.xlu0 %2808
        %2810 = vrot.lane.b32.xlu0 %v2731, 120
        %v2811 = vpop.permute.xlu0 %2810
        %2812 = vrot.lane.b32.xlu0 %v2736, 120
        %v2813 = vpop.permute.xlu0 %2812
        %2814 = vrot.lane.b32.xlu0 %v2741, 120
        %v2815 = vpop.permute.xlu0 %2814
        %2816 = vrot.lane.b32.xlu0 %v2746, 120
        %v2817 = vpop.permute.xlu0 %2816
        %2818 = vrot.lane.b32.xlu0 %v2751, 120
        %v2819 = vpop.permute.xlu0 %2818
        %2820 = vrot.lane.b32.xlu0 %v2756, 120
        %v2821 = vpop.permute.xlu0 %2820
        %2822 = vrot.lane.b32.xlu0 %v2761, 120
        %v2823 = vpop.permute.xlu0 %2822
        %2824 = vrot.lane.b32.xlu0 %v2766, 120
        %v2825 = vpop.permute.xlu0 %2824
        %2826 = vrot.lane.b32.xlu0 %v2771, 120
        %v2827 = vpop.permute.xlu0 %2826
        %2828 = vrot.lane.b32.xlu0 %v2776, 120
        %v2829 = vpop.permute.xlu0 %2828
        %2830 = vrot.lane.b32.xlu0 %v2781, 120
        %v2831 = vpop.permute.xlu0 %2830
        %v2832 = vsel %vm498, %v2706, 0
        %v2834 = vsel %vm498, %v2711, 0
        %v2836 = vsel %vm498, %v2716, 0
        %v2838 = vsel %vm498, %v2721, 0
        %v2840 = vsel %vm498, %v2726, 0
        %v2842 = vsel %vm498, %v2731, 0
        %v2844 = vsel %vm498, %v2736, 0
        %v2846 = vsel %vm498, %v2741, 0
        %v2848 = vsel %vm498, %v2746, 0
        %v2850 = vsel %vm498, %v2751, 0
        %v2852 = vsel %vm498, %v2756, 0
        %v2854 = vsel %vm498, %v2761, 0
        %v2856 = vsel %vm498, %v2766, 0
        %v2858 = vsel %vm498, %v2771, 0
        %v2860 = vsel %vm498, %v2776, 0
        %v2862 = vsel %vm498, %v2781, 0
        %v2864 = vsel %vm498, %v2801, 0
        %v2866 = vsel %vm498, %v2803, 0
        %v2868 = vsel %vm498, %v2805, 0
        %v2870 = vsel %vm498, %v2807, 0
        %v2872 = vsel %vm498, %v2809, 0
        %v2874 = vsel %vm498, %v2811, 0
        %v2876 = vsel %vm498, %v2813, 0
        %v2878 = vsel %vm498, %v2815, 0
        %v2880 = vsel %vm498, %v2817, 0
        %v2882 = vsel %vm498, %v2819, 0
        %v2884 = vsel %vm498, %v2821, 0
        %v2886 = vsel %vm498, %v2823, 0
        %v2888 = vsel %vm498, %v2825, 0
        %v2890 = vsel %vm498, %v2827, 0
        %v2892 = vsel %vm498, %v2829, 0
        %v2894 = vsel %vm498, %v2831, 0
        %2896 = vmatprep.subr.mxu0 0.0
        %2897 = vmatpush1.xpose.msra.mxu0 %v2864
        %2898 = vmatprep.subr.mxu0 0.0
        %2899 = vmatpush1.xpose.msra.mxu0 %v2866
        %2900 = vmatprep.subr.mxu0 0.0
        %2901 = vmatpush1.xpose.msra.mxu0 %v2868
        %2902 = vmatprep.subr.mxu0 0.0
        %2903 = vmatpush1.xpose.msra.mxu0 %v2870
        %2904 = vmatprep.subr.mxu0 0.0
        %2905 = vmatpush1.xpose.msra.mxu0 %v2872
        %2906 = vmatprep.subr.mxu0 0.0
        %2907 = vmatpush1.xpose.msra.mxu0 %v2874
        %2908 = vmatprep.subr.mxu0 0.0
        %2909 = vmatpush1.xpose.msra.mxu0 %v2876
        %2910 = vmatprep.subr.mxu0 0.0
        %2911 = vmatpush1.xpose.msra.mxu0 %v2878
        %2912 = vmatprep.subr.mxu0 0.0
        %2913 = vmatpush1.xpose.msra.mxu0 %v2880
        %2914 = vmatprep.subr.mxu0 0.0
        %2915 = vmatpush1.xpose.msra.mxu0 %v2882
        %2916 = vmatprep.subr.mxu0 0.0
        %2917 = vmatpush1.xpose.msra.mxu0 %v2884
        %2918 = vmatprep.subr.mxu0 0.0
        %2919 = vmatpush1.xpose.msra.mxu0 %v2886
        %2920 = vmatprep.subr.mxu0 0.0
        %2921 = vmatpush1.xpose.msra.mxu0 %v2888
        %2922 = vmatprep.subr.mxu0 0.0
        %2923 = vmatpush1.xpose.msra.mxu0 %v2890
        %2924 = vmatprep.subr.mxu0 0.0
        %2925 = vmatpush1.xpose.msra.mxu0 %v2892
        %2926 = vmatprep.subr.mxu0 0.0
        %2927 = vmatpush1.xpose.msra.mxu0 %v2894
        %2928 = vmatprep.subr.mxu0 0.0
        %2929 = vmatpush1.xpose.msra.mxu0 0.0
        %2930 = vmatprep.subr.mxu0 0.0
        %2931 = vmatpush1.xpose.msra.mxu0 0.0
        %2932 = vmatprep.subr.mxu0 0.0
        %2933 = vmatpush1.xpose.msra.mxu0 0.0
        %2934 = vmatprep.subr.mxu0 0.0
        %2935 = vmatpush1.xpose.msra.mxu0 0.0
        %2936 = vmatprep.subr.mxu0 0.0
        %2937 = vmatpush1.xpose.msra.mxu0 0.0
        %2938 = vmatprep.subr.mxu0 0.0
        %2939 = vmatpush1.xpose.msra.mxu0 0.0
        %2940 = vmatprep.subr.mxu0 0.0
        %2941 = vmatpush1.xpose.msra.mxu0 0.0
        %2942 = vmatprep.subr.mxu0 0.0
        %2943 = vmatpush1.xpose.msra.mxu0 0.0
        %2944 = vmatprep.subr.mxu0 0.0
        %2945 = vmatpush1.xpose.msra.mxu0 0.0
        %2946 = vmatprep.subr.mxu0 0.0
        %2947 = vmatpush1.xpose.msra.mxu0 0.0
        %2948 = vmatprep.subr.mxu0 0.0
        %2949 = vmatpush1.xpose.msra.mxu0 0.0
        %2950 = vmatprep.subr.mxu0 0.0
        %2951 = vmatpush1.xpose.msra.mxu0 0.0
        %2952 = vmatprep.subr.mxu0 0.0
        %2953 = vmatpush1.xpose.msra.mxu0 0.0
        %2954 = vmatprep.subr.mxu0 0.0
        %2955 = vmatpush1.xpose.msra.mxu0 0.0
        %2956 = vmatprep.subr.mxu0 0.0
        %2957 = vmatpush1.xpose.msra.mxu0 0.0
        %2958 = vmatprep.subr.mxu0 0.0
        %2959 = vmatpush1.xpose.msra.mxu0 0.0
        %2960 = vmatprep.mubr.f32.mxu0 0.0
        %2961 = vmatmul.mubr.f32.gmra.mrb[0].mxu0 %v2832
        %v2962 = vpop.f32.mrb[0].mxu0
        %v2963 = vadd.f32 0.0, %v2962
        %v2964 = vpop.f32.mrb[0].mxu0
        %2965 = vmatprep.mubr.f32.mxu0 0.0
        %2966 = vmatmul.mubr.f32.gmra.mrb[0].mxu0 %v2834
        %v2967 = vpop.f32.mrb[0].mxu0
        %v2968 = vadd.f32 0.0, %v2967
        %v2969 = vpop.f32.mrb[0].mxu0
        %2970 = vmatprep.mubr.f32.mxu0 0.0
        %2971 = vmatmul.mubr.f32.gmra.mrb[0].mxu0 %v2836
        %v2972 = vpop.f32.mrb[0].mxu0
        %v2973 = vadd.f32 0.0, %v2972
        %v2974 = vpop.f32.mrb[0].mxu0
        %2975 = vmatprep.mubr.f32.mxu0 0.0
        %2976 = vmatmul.mubr.f32.gmra.mrb[0].mxu0 %v2838
        %v2977 = vpop.f32.mrb[0].mxu0
        %v2978 = vadd.f32 0.0, %v2977
        %v2979 = vpop.f32.mrb[0].mxu0
        %2980 = vmatprep.mubr.f32.mxu0 0.0
        %2981 = vmatmul.mubr.f32.gmra.mrb[0].mxu0 %v2840
        %v2982 = vpop.f32.mrb[0].mxu0
        %v2983 = vadd.f32 0.0, %v2982
        %v2984 = vpop.f32.mrb[0].mxu0
        %2985 = vmatprep.mubr.f32.mxu0 0.0
        %2986 = vmatmul.mubr.f32.gmra.mrb[0].mxu0 %v2842
        %v2987 = vpop.f32.mrb[0].mxu0
        %v2988 = vadd.f32 0.0, %v2987
        %v2989 = vpop.f32.mrb[0].mxu0
        %2990 = vmatprep.mubr.f32.mxu0 0.0
        %2991 = vmatmul.mubr.f32.gmra.mrb[0].mxu0 %v2844
        %v2992 = vpop.f32.mrb[0].mxu0
        %v2993 = vadd.f32 0.0, %v2992
        %v2994 = vpop.f32.mrb[0].mxu0
        %2995 = vmatprep.mubr.f32.mxu0 0.0
        %2996 = vmatmul.mubr.f32.gmra.mrb[0].mxu0 %v2846
        %v2997 = vpop.f32.mrb[0].mxu0
        %v2998 = vadd.f32 0.0, %v2997
        %v2999 = vpop.f32.mrb[0].mxu0
        %3000 = vmatprep.mubr.f32.mxu0 0.0
        %3001 = vmatmul.mubr.f32.gmra.mrb[0].mxu0 %v2848
        %v3002 = vpop.f32.mrb[0].mxu0
        %v3003 = vadd.f32 0.0, %v3002
        %v3004 = vpop.f32.mrb[0].mxu0
        %3005 = vmatprep.mubr.f32.mxu0 0.0
        %3006 = vmatmul.mubr.f32.gmra.mrb[0].mxu0 %v2850
        %v3007 = vpop.f32.mrb[0].mxu0
        %v3008 = vadd.f32 0.0, %v3007
        %v3009 = vpop.f32.mrb[0].mxu0
        %3010 = vmatprep.mubr.f32.mxu0 0.0
        %3011 = vmatmul.mubr.f32.gmra.mrb[0].mxu0 %v2852
        %v3012 = vpop.f32.mrb[0].mxu0
        %v3013 = vadd.f32 0.0, %v3012
        %v3014 = vpop.f32.mrb[0].mxu0
        %3015 = vmatprep.mubr.f32.mxu0 0.0
        %3016 = vmatmul.mubr.f32.gmra.mrb[0].mxu0 %v2854
        %v3017 = vpop.f32.mrb[0].mxu0
        %v3018 = vadd.f32 0.0, %v3017
        %v3019 = vpop.f32.mrb[0].mxu0
        %3020 = vmatprep.mubr.f32.mxu0 0.0
        %3021 = vmatmul.mubr.f32.gmra.mrb[0].mxu0 %v2856
        %v3022 = vpop.f32.mrb[0].mxu0
        %v3023 = vadd.f32 0.0, %v3022
        %v3024 = vpop.f32.mrb[0].mxu0
        %3025 = vmatprep.mubr.f32.mxu0 0.0
        %3026 = vmatmul.mubr.f32.gmra.mrb[0].mxu0 %v2858
        %v3027 = vpop.f32.mrb[0].mxu0
        %v3028 = vadd.f32 0.0, %v3027
        %v3029 = vpop.f32.mrb[0].mxu0
        %3030 = vmatprep.mubr.f32.mxu0 0.0
        %3031 = vmatmul.mubr.f32.gmra.mrb[0].mxu0 %v2860
        %v3032 = vpop.f32.mrb[0].mxu0
        %v3033 = vadd.f32 0.0, %v3032
        %v3034 = vpop.f32.mrb[0].mxu0
        %3035 = vmatprep.mubr.f32.mxu0 0.0
        %3036 = vmatmul.mubr.f32.gmra.mrb[0].mxu0 %v2862
        %v3037 = vpop.f32.mrb[0].mxu0
        %v3038 = vadd.f32 0.0, %v3037
        %v3039 = vpop.f32.mrb[0].mxu0
        %3040 = vdwg.mxu0
        %v3041 = vsel %vm710, %v2963, -1e+30
        %v3042 = vsel %vm710, %v2968, -1e+30
        %v3043 = vsel %vm710, %v2973, -1e+30
        %v3044 = vsel %vm710, %v2978, -1e+30
        %v3045 = vsel %vm710, %v2983, -1e+30
        %v3046 = vsel %vm710, %v2988, -1e+30
        %v3047 = vsel %vm710, %v2993, -1e+30
        %v3048 = vsel %vm710, %v2998, -1e+30
        %v3049 = vsel %vm710, %v3003, -1e+30
        %v3050 = vsel %vm710, %v3008, -1e+30
        %v3051 = vsel %vm710, %v3013, -1e+30
        %v3052 = vsel %vm710, %v3018, -1e+30
        %v3053 = vsel %vm710, %v3023, -1e+30
        %v3054 = vsel %vm710, %v3028, -1e+30
        %v3055 = vsel %vm710, %v3033, -1e+30
        %v3056 = vsel %vm710, %v3038, -1e+30
        %3057 = vmax.xlane.f32.xlu0 %v3041
        %v3058 = vpop.xlane.xlu0 %3057
        %3059 = vmax.xlane.f32.xlu0 %v3042
        %v3060 = vpop.xlane.xlu0 %3059
        %3061 = vmax.xlane.f32.xlu0 %v3043
        %v3062 = vpop.xlane.xlu0 %3061
        %3063 = vmax.xlane.f32.xlu0 %v3044
        %v3064 = vpop.xlane.xlu0 %3063
        %3065 = vmax.xlane.f32.xlu0 %v3045
        %v3066 = vpop.xlane.xlu0 %3065
        %3067 = vmax.xlane.f32.xlu0 %v3046
        %v3068 = vpop.xlane.xlu0 %3067
        %3069 = vmax.xlane.f32.xlu0 %v3047
        %v3070 = vpop.xlane.xlu0 %3069
        %3071 = vmax.xlane.f32.xlu0 %v3048
        %v3072 = vpop.xlane.xlu0 %3071
        %3073 = vmax.xlane.f32.xlu0 %v3049
        %v3074 = vpop.xlane.xlu0 %3073
        %3075 = vmax.xlane.f32.xlu0 %v3050
        %v3076 = vpop.xlane.xlu0 %3075
        %3077 = vmax.xlane.f32.xlu0 %v3051
        %v3078 = vpop.xlane.xlu0 %3077
        %3079 = vmax.xlane.f32.xlu0 %v3052
        %v3080 = vpop.xlane.xlu0 %3079
        %3081 = vmax.xlane.f32.xlu0 %v3053
        %v3082 = vpop.xlane.xlu0 %3081
        %3083 = vmax.xlane.f32.xlu0 %v3054
        %v3084 = vpop.xlane.xlu0 %3083
        %3085 = vmax.xlane.f32.xlu0 %v3055
        %v3086 = vpop.xlane.xlu0 %3085
        %3087 = vmax.xlane.f32.xlu0 %v3056
        %v3088 = vpop.xlane.xlu0 %3087
        %v3089 = vsub.f32 %v3041, %v3058
        %v3090 = vsub.f32 %v3042, %v3060
        %v3091 = vsub.f32 %v3043, %v3062
        %v3092 = vsub.f32 %v3044, %v3064
        %v3093 = vsub.f32 %v3045, %v3066
        %v3094 = vsub.f32 %v3046, %v3068
        %v3095 = vsub.f32 %v3047, %v3070
        %v3096 = vsub.f32 %v3048, %v3072
        %v3097 = vsub.f32 %v3049, %v3074
        %v3098 = vsub.f32 %v3050, %v3076
        %v3099 = vsub.f32 %v3051, %v3078
        %v3100 = vsub.f32 %v3052, %v3080
        %v3101 = vsub.f32 %v3053, %v3082
        %v3102 = vsub.f32 %v3054, %v3084
        %v3103 = vsub.f32 %v3055, %v3086
        %v3104 = vsub.f32 %v3056, %v3088
        %v3105 = vmul.f32 %v3089, 1.442695
        %v3106 = vpow.pop %v3105
        %v3107 = vmul.f32 %v3090, 1.442695
        %v3108 = vpow.pop %v3107
        %v3109 = vmul.f32 %v3091, 1.442695
        %v3110 = vpow.pop %v3109
        %v3111 = vmul.f32 %v3092, 1.442695
        %v3112 = vpow.pop %v3111
        %v3113 = vmul.f32 %v3093, 1.442695
        %v3114 = vpow.pop %v3113
        %v3115 = vmul.f32 %v3094, 1.442695
        %v3116 = vpow.pop %v3115
        %v3117 = vmul.f32 %v3095, 1.442695
        %v3118 = vpow.pop %v3117
        %v3119 = vmul.f32 %v3096, 1.442695
        %v3120 = vpow.pop %v3119
        %v3121 = vmul.f32 %v3097, 1.442695
        %v3122 = vpow.pop %v3121
        %v3123 = vmul.f32 %v3098, 1.442695
        %v3124 = vpow.pop %v3123
        %v3125 = vmul.f32 %v3099, 1.442695
        %v3126 = vpow.pop %v3125
        %v3127 = vmul.f32 %v3100, 1.442695
        %v3128 = vpow.pop %v3127
        %v3129 = vmul.f32 %v3101, 1.442695
        %v3130 = vpow.pop %v3129
        %v3131 = vmul.f32 %v3102, 1.442695
        %v3132 = vpow.pop %v3131
        %v3133 = vmul.f32 %v3103, 1.442695
        %v3134 = vpow.pop %v3133
        %v3135 = vmul.f32 %v3104, 1.442695
        %v3136 = vpow.pop %v3135
        %3137 = vadd.xlane.f32.xlu0 %v3106
        %v3138 = vpop.xlane.xlu0 %3137
        %3139 = vadd.xlane.f32.xlu0 %v3108
        %v3140 = vpop.xlane.xlu0 %3139
        %3141 = vadd.xlane.f32.xlu0 %v3110
        %v3142 = vpop.xlane.xlu0 %3141
        %3143 = vadd.xlane.f32.xlu0 %v3112
        %v3144 = vpop.xlane.xlu0 %3143
        %3145 = vadd.xlane.f32.xlu0 %v3114
        %v3146 = vpop.xlane.xlu0 %3145
        %3147 = vadd.xlane.f32.xlu0 %v3116
        %v3148 = vpop.xlane.xlu0 %3147
        %3149 = vadd.xlane.f32.xlu0 %v3118
        %v3150 = vpop.xlane.xlu0 %3149
        %3151 = vadd.xlane.f32.xlu0 %v3120
        %v3152 = vpop.xlane.xlu0 %3151
        %3153 = vadd.xlane.f32.xlu0 %v3122
        %v3154 = vpop.xlane.xlu0 %3153
        %3155 = vadd.xlane.f32.xlu0 %v3124
        %v3156 = vpop.xlane.xlu0 %3155
        %3157 = vadd.xlane.f32.xlu0 %v3126
        %v3158 = vpop.xlane.xlu0 %3157
        %3159 = vadd.xlane.f32.xlu0 %v3128
        %v3160 = vpop.xlane.xlu0 %3159
        %3161 = vadd.xlane.f32.xlu0 %v3130
        %v3162 = vpop.xlane.xlu0 %3161
        %3163 = vadd.xlane.f32.xlu0 %v3132
        %v3164 = vpop.xlane.xlu0 %3163
        %3165 = vadd.xlane.f32.xlu0 %v3134
        %v3166 = vpop.xlane.xlu0 %3165
        %3167 = vadd.xlane.f32.xlu0 %v3136
        %v3168 = vpop.xlane.xlu0 %3167
        %v3169 = vrcp.pop %v3138
        %v3170 = vrcp.pop %v3140
        %v3171 = vrcp.pop %v3142
        %v3172 = vrcp.pop %v3144
        %v3173 = vrcp.pop %v3146
        %v3174 = vrcp.pop %v3148
        %v3175 = vrcp.pop %v3150
        %v3176 = vrcp.pop %v3152
        %v3177 = vrcp.pop %v3154
        %v3178 = vrcp.pop %v3156
        %v3179 = vrcp.pop %v3158
        %v3180 = vrcp.pop %v3160
        %v3181 = vrcp.pop %v3162
        %v3182 = vrcp.pop %v3164
        %v3183 = vrcp.pop %v3166
        %v3184 = vrcp.pop %v3168
        %v3185 = vmul.f32 %v3106, %v3169
        %v3186 = vmul.f32 %v3108, %v3170
        %v3187 = vmul.f32 %v3110, %v3171
        %v3188 = vmul.f32 %v3112, %v3172
        %v3189 = vmul.f32 %v3114, %v3173
        %v3190 = vmul.f32 %v3116, %v3174
        %v3191 = vmul.f32 %v3118, %v3175
        %v3192 = vmul.f32 %v3120, %v3176
        %v3193 = vmul.f32 %v3122, %v3177
        %v3194 = vmul.f32 %v3124, %v3178
        %v3195 = vmul.f32 %v3126, %v3179
        %v3196 = vmul.f32 %v3128, %v3180
        %v3197 = vmul.f32 %v3130, %v3181
        %v3198 = vmul.f32 %v3132, %v3182
        %v3199 = vmul.f32 %v3134, %v3183
        %v3200 = vmul.f32 %v3136, %v3184
        %s3201 = scalar_lea.vmem %s225, 384 [#allocation2]
        %3202 = vst [vmem:[%s3201] sm:$0xff] %v3185
        %3203 = vst [vmem:[%s3201 + $0x8] sm:$0xff] %v3186
        %3204 = vst [vmem:[%s3201 + $0x10] sm:$0xff] %v3187
        %3205 = vst [vmem:[%s3201 + $0x18] sm:$0xff] %v3188
        %3206 = vst [vmem:[%s3201 + $0x20] sm:$0xff] %v3189
        %3207 = vst [vmem:[%s3201 + $0x28] sm:$0xff] %v3190
        %3208 = vst [vmem:[%s3201 + $0x30] sm:$0xff] %v3191
        %3209 = vst [vmem:[%s3201 + $0x38] sm:$0xff] %v3192
        %3210 = vst [vmem:[%s3201 + $0x40] sm:$0xff] %v3193
        %3211 = vst [vmem:[%s3201 + $0x48] sm:$0xff] %v3194
        %3212 = vst [vmem:[%s3201 + $0x50] sm:$0xff] %v3195
        %3213 = vst [vmem:[%s3201 + $0x58] sm:$0xff] %v3196
        %3214 = vst [vmem:[%s3201 + $0x60] sm:$0xff] %v3197
        %3215 = vst [vmem:[%s3201 + $0x68] sm:$0xff] %v3198
        %3216 = vst [vmem:[%s3201 + $0x70] sm:$0xff] %v3199
        %3217 = vst [vmem:[%s3201 + $0x78] sm:$0xff] %v3200
        %3218 = vrot.lane.b32.xlu0 %v2706, 112
        %v3219 = vpop.permute.xlu0 %3218
        %3220 = vrot.lane.b32.xlu0 %v2711, 112
        %v3221 = vpop.permute.xlu0 %3220
        %3222 = vrot.lane.b32.xlu0 %v2716, 112
        %v3223 = vpop.permute.xlu0 %3222
        %3224 = vrot.lane.b32.xlu0 %v2721, 112
        %v3225 = vpop.permute.xlu0 %3224
        %3226 = vrot.lane.b32.xlu0 %v2726, 112
        %v3227 = vpop.permute.xlu0 %3226
        %3228 = vrot.lane.b32.xlu0 %v2731, 112
        %v3229 = vpop.permute.xlu0 %3228
        %3230 = vrot.lane.b32.xlu0 %v2736, 112
        %v3231 = vpop.permute.xlu0 %3230
        %3232 = vrot.lane.b32.xlu0 %v2741, 112
        %v3233 = vpop.permute.xlu0 %3232
        %3234 = vrot.lane.b32.xlu0 %v2746, 112
        %v3235 = vpop.permute.xlu0 %3234
        %3236 = vrot.lane.b32.xlu0 %v2751, 112
        %v3237 = vpop.permute.xlu0 %3236
        %3238 = vrot.lane.b32.xlu0 %v2756, 112
        %v3239 = vpop.permute.xlu0 %3238
        %3240 = vrot.lane.b32.xlu0 %v2761, 112
        %v3241 = vpop.permute.xlu0 %3240
        %3242 = vrot.lane.b32.xlu0 %v2766, 112
        %v3243 = vpop.permute.xlu0 %3242
        %3244 = vrot.lane.b32.xlu0 %v2771, 112
        %v3245 = vpop.permute.xlu0 %3244
        %3246 = vrot.lane.b32.xlu0 %v2776, 112
        %v3247 = vpop.permute.xlu0 %3246
        %3248 = vrot.lane.b32.xlu0 %v2781, 112
        %v3249 = vpop.permute.xlu0 %3248
        %3266 = vmatprep.subr.mxu0 0.0
        %3267 = vmatpush1.msra.mxu0 %v3219
        %3268 = vmatprep.subr.mxu0 0.0
        %3269 = vmatpush1.msra.mxu0 %v3221
        %3270 = vmatprep.subr.mxu0 0.0
        %3271 = vmatpush1.msra.mxu0 %v3223
        %3272 = vmatprep.subr.mxu0 0.0
        %3273 = vmatpush1.msra.mxu0 %v3225
        %3274 = vmatprep.subr.mxu0 0.0
        %3275 = vmatpush1.msra.mxu0 %v3227
        %3276 = vmatprep.subr.mxu0 0.0
        %3277 = vmatpush1.msra.mxu0 %v3229
        %3278 = vmatprep.subr.mxu0 0.0
        %3279 = vmatpush1.msra.mxu0 %v3231
        %3280 = vmatprep.subr.mxu0 0.0
        %3281 = vmatpush1.msra.mxu0 %v3233
        %3282 = vmatprep.subr.mxu0 0.0
        %3283 = vmatpush1.msra.mxu0 %v3235
        %3284 = vmatprep.subr.mxu0 0.0
        %3285 = vmatpush1.msra.mxu0 %v3237
        %3286 = vmatprep.subr.mxu0 0.0
        %3287 = vmatpush1.msra.mxu0 %v3239
        %3288 = vmatprep.subr.mxu0 0.0
        %3289 = vmatpush1.msra.mxu0 %v3241
        %3290 = vmatprep.subr.mxu0 0.0
        %3291 = vmatpush1.msra.mxu0 %v3243
        %3292 = vmatprep.subr.mxu0 0.0
        %3293 = vmatpush1.msra.mxu0 %v3245
        %3294 = vmatprep.subr.mxu0 0.0
        %3295 = vmatpush1.msra.mxu0 %v3247
        %3296 = vmatprep.subr.mxu0 0.0
        %3297 = vmatpush1.msra.mxu0 %v3249
        %3298 = vmatprep.subr.mxu0 0.0
        %3299 = vmatpush1.msra.mxu0 0.0
        %3300 = vmatprep.subr.mxu0 0.0
        %3301 = vmatpush1.msra.mxu0 0.0
        %3302 = vmatprep.subr.mxu0 0.0
        %3303 = vmatpush1.msra.mxu0 0.0
        %3304 = vmatprep.subr.mxu0 0.0
        %3305 = vmatpush1.msra.mxu0 0.0
        %3306 = vmatprep.subr.mxu0 0.0
        %3307 = vmatpush1.msra.mxu0 0.0
        %3308 = vmatprep.subr.mxu0 0.0
        %3309 = vmatpush1.msra.mxu0 0.0
        %3310 = vmatprep.subr.mxu0 0.0
        %3311 = vmatpush1.msra.mxu0 0.0
        %3312 = vmatprep.subr.mxu0 0.0
        %3313 = vmatpush1.msra.mxu0 0.0
        %3314 = vmatprep.subr.mxu0 0.0
        %3315 = vmatpush1.msra.mxu0 0.0
        %3316 = vmatprep.subr.mxu0 0.0
        %3317 = vmatpush1.msra.mxu0 0.0
        %3318 = vmatprep.subr.mxu0 0.0
        %3319 = vmatpush1.msra.mxu0 0.0
        %3320 = vmatprep.subr.mxu0 0.0
        %3321 = vmatpush1.msra.mxu0 0.0
        %3322 = vmatprep.subr.mxu0 0.0
        %3323 = vmatpush1.msra.mxu0 0.0
        %3324 = vmatprep.subr.mxu0 0.0
        %3325 = vmatpush1.msra.mxu0 0.0
        %3326 = vmatprep.subr.mxu0 0.0
        %3327 = vmatpush1.msra.mxu0 0.0
        %3328 = vmatprep.subr.mxu0 0.0
        %3329 = vmatpush1.msra.mxu0 0.0
        %3330 = vmatprep.mubr.f32.mxu0 0.0
        %3331 = vmatmul.mubr.f32.gmra.mrb[0].mxu0 %v3185
        %v3332 = vpop.f32.mrb[0].mxu0
        %v3333 = vadd.f32 0.0, %v3332
        %v3334 = vpop.f32.mrb[0].mxu0
        %3335 = vmatprep.mubr.f32.mxu0 0.0
        %3336 = vmatmul.mubr.f32.gmra.mrb[0].mxu0 %v3186
        %v3337 = vpop.f32.mrb[0].mxu0
        %v3338 = vadd.f32 0.0, %v3337
        %v3339 = vpop.f32.mrb[0].mxu0
        %3340 = vmatprep.mubr.f32.mxu0 0.0
        %3341 = vmatmul.mubr.f32.gmra.mrb[0].mxu0 %v3187
        %v3342 = vpop.f32.mrb[0].mxu0
        %v3343 = vadd.f32 0.0, %v3342
        %v3344 = vpop.f32.mrb[0].mxu0
        %3345 = vmatprep.mubr.f32.mxu0 0.0
        %3346 = vmatmul.mubr.f32.gmra.mrb[0].mxu0 %v3188
        %v3347 = vpop.f32.mrb[0].mxu0
        %v3348 = vadd.f32 0.0, %v3347
        %v3349 = vpop.f32.mrb[0].mxu0
        %3350 = vmatprep.mubr.f32.mxu0 0.0
        %3351 = vmatmul.mubr.f32.gmra.mrb[0].mxu0 %v3189
        %v3352 = vpop.f32.mrb[0].mxu0
        %v3353 = vadd.f32 0.0, %v3352
        %v3354 = vpop.f32.mrb[0].mxu0
        %3355 = vmatprep.mubr.f32.mxu0 0.0
        %3356 = vmatmul.mubr.f32.gmra.mrb[0].mxu0 %v3190
        %v3357 = vpop.f32.mrb[0].mxu0
        %v3358 = vadd.f32 0.0, %v3357
        %v3359 = vpop.f32.mrb[0].mxu0
        %3360 = vmatprep.mubr.f32.mxu0 0.0
        %3361 = vmatmul.mubr.f32.gmra.mrb[0].mxu0 %v3191
        %v3362 = vpop.f32.mrb[0].mxu0
        %v3363 = vadd.f32 0.0, %v3362
        %v3364 = vpop.f32.mrb[0].mxu0
        %3365 = vmatprep.mubr.f32.mxu0 0.0
        %3366 = vmatmul.mubr.f32.gmra.mrb[0].mxu0 %v3192
        %v3367 = vpop.f32.mrb[0].mxu0
        %v3368 = vadd.f32 0.0, %v3367
        %v3369 = vpop.f32.mrb[0].mxu0
        %3370 = vmatprep.mubr.f32.mxu0 0.0
        %3371 = vmatmul.mubr.f32.gmra.mrb[0].mxu0 %v3193
        %v3372 = vpop.f32.mrb[0].mxu0
        %v3373 = vadd.f32 0.0, %v3372
        %v3374 = vpop.f32.mrb[0].mxu0
        %3375 = vmatprep.mubr.f32.mxu0 0.0
        %3376 = vmatmul.mubr.f32.gmra.mrb[0].mxu0 %v3194
        %v3377 = vpop.f32.mrb[0].mxu0
        %v3378 = vadd.f32 0.0, %v3377
        %v3379 = vpop.f32.mrb[0].mxu0
        %3380 = vmatprep.mubr.f32.mxu0 0.0
        %3381 = vmatmul.mubr.f32.gmra.mrb[0].mxu0 %v3195
        %v3382 = vpop.f32.mrb[0].mxu0
        %v3383 = vadd.f32 0.0, %v3382
        %v3384 = vpop.f32.mrb[0].mxu0
        %3385 = vmatprep.mubr.f32.mxu0 0.0
        %3386 = vmatmul.mubr.f32.gmra.mrb[0].mxu0 %v3196
        %v3387 = vpop.f32.mrb[0].mxu0
        %v3388 = vadd.f32 0.0, %v3387
        %v3389 = vpop.f32.mrb[0].mxu0
        %3390 = vmatprep.mubr.f32.mxu0 0.0
        %3391 = vmatmul.mubr.f32.gmra.mrb[0].mxu0 %v3197
        %v3392 = vpop.f32.mrb[0].mxu0
        %v3393 = vadd.f32 0.0, %v3392
        %v3394 = vpop.f32.mrb[0].mxu0
        %3395 = vmatprep.mubr.f32.mxu0 0.0
        %3396 = vmatmul.mubr.f32.gmra.mrb[0].mxu0 %v3198
        %v3397 = vpop.f32.mrb[0].mxu0
        %v3398 = vadd.f32 0.0, %v3397
        %v3399 = vpop.f32.mrb[0].mxu0
        %3400 = vmatprep.mubr.f32.mxu0 0.0
        %3401 = vmatmul.mubr.f32.gmra.mrb[0].mxu0 %v3199
        %v3402 = vpop.f32.mrb[0].mxu0
        %v3403 = vadd.f32 0.0, %v3402
        %v3404 = vpop.f32.mrb[0].mxu0
        %3405 = vmatprep.mubr.f32.mxu0 0.0
        %3406 = vmatmul.mubr.f32.gmra.mrb[0].mxu0 %v3200
        %v3407 = vpop.f32.mrb[0].mxu0
        %v3408 = vadd.f32 0.0, %v3407
        %v3409 = vpop.f32.mrb[0].mxu0
        %3410 = vdwg.mxu0
        %3427 = vrot.lane.b32.xlu0 %v1779, 8
        %v3428 = vpop.permute.xlu0 %3427
        %3429 = vrot.lane.b32.xlu0 %v1784, 8
        %v3430 = vpop.permute.xlu0 %3429
        %3431 = vrot.lane.b32.xlu0 %v1789, 8
        %v3432 = vpop.permute.xlu0 %3431
        %3433 = vrot.lane.b32.xlu0 %v1794, 8
        %v3434 = vpop.permute.xlu0 %3433
        %3435 = vrot.lane.b32.xlu0 %v1799, 8
        %v3436 = vpop.permute.xlu0 %3435
        %3437 = vrot.lane.b32.xlu0 %v1804, 8
        %v3438 = vpop.permute.xlu0 %3437
        %3439 = vrot.lane.b32.xlu0 %v1809, 8
        %v3440 = vpop.permute.xlu0 %3439
        %3441 = vrot.lane.b32.xlu0 %v1814, 8
        %v3442 = vpop.permute.xlu0 %3441
        %3443 = vrot.lane.b32.xlu0 %v1819, 8
        %v3444 = vpop.permute.xlu0 %3443
        %3445 = vrot.lane.b32.xlu0 %v1824, 8
        %v3446 = vpop.permute.xlu0 %3445
        %3447 = vrot.lane.b32.xlu0 %v1829, 8
        %v3448 = vpop.permute.xlu0 %3447
        %3449 = vrot.lane.b32.xlu0 %v1834, 8
        %v3450 = vpop.permute.xlu0 %3449
        %3451 = vrot.lane.b32.xlu0 %v1839, 8
        %v3452 = vpop.permute.xlu0 %3451
        %3453 = vrot.lane.b32.xlu0 %v1844, 8
        %v3454 = vpop.permute.xlu0 %3453
        %3455 = vrot.lane.b32.xlu0 %v1849, 8
        %v3456 = vpop.permute.xlu0 %3455
        %3457 = vrot.lane.b32.xlu0 %v1854, 8
        %v3458 = vpop.permute.xlu0 %3457
        %3491 = vrot.lane.b32.xlu0 %v2556, 16
        %v3492 = vpop.permute.xlu0 %3491
        %3493 = vrot.lane.b32.xlu0 %v2561, 16
        %v3494 = vpop.permute.xlu0 %3493
        %3495 = vrot.lane.b32.xlu0 %v2566, 16
        %v3496 = vpop.permute.xlu0 %3495
        %3497 = vrot.lane.b32.xlu0 %v2571, 16
        %v3498 = vpop.permute.xlu0 %3497
        %3499 = vrot.lane.b32.xlu0 %v2576, 16
        %v3500 = vpop.permute.xlu0 %3499
        %3501 = vrot.lane.b32.xlu0 %v2581, 16
        %v3502 = vpop.permute.xlu0 %3501
        %3503 = vrot.lane.b32.xlu0 %v2586, 16
        %v3504 = vpop.permute.xlu0 %3503
        %3505 = vrot.lane.b32.xlu0 %v2591, 16
        %v3506 = vpop.permute.xlu0 %3505
        %3507 = vrot.lane.b32.xlu0 %v2596, 16
        %v3508 = vpop.permute.xlu0 %3507
        %3509 = vrot.lane.b32.xlu0 %v2601, 16
        %v3510 = vpop.permute.xlu0 %3509
        %3511 = vrot.lane.b32.xlu0 %v2606, 16
        %v3512 = vpop.permute.xlu0 %3511
        %3513 = vrot.lane.b32.xlu0 %v2611, 16
        %v3514 = vpop.permute.xlu0 %3513
        %3515 = vrot.lane.b32.xlu0 %v2616, 16
        %v3516 = vpop.permute.xlu0 %3515
        %3517 = vrot.lane.b32.xlu0 %v2621, 16
        %v3518 = vpop.permute.xlu0 %3517
        %3519 = vrot.lane.b32.xlu0 %v2626, 16
        %v3520 = vpop.permute.xlu0 %3519
        %3521 = vrot.lane.b32.xlu0 %v2631, 16
        %v3522 = vpop.permute.xlu0 %3521
        %3555 = vrot.lane.b32.xlu0 %v3333, 24
        %v3556 = vpop.permute.xlu0 %3555
        %3557 = vrot.lane.b32.xlu0 %v3338, 24
        %v3558 = vpop.permute.xlu0 %3557
        %3559 = vrot.lane.b32.xlu0 %v3343, 24
        %v3560 = vpop.permute.xlu0 %3559
        %3561 = vrot.lane.b32.xlu0 %v3348, 24
        %v3562 = vpop.permute.xlu0 %3561
        %3563 = vrot.lane.b32.xlu0 %v3353, 24
        %v3564 = vpop.permute.xlu0 %3563
        %3565 = vrot.lane.b32.xlu0 %v3358, 24
        %v3566 = vpop.permute.xlu0 %3565
        %3567 = vrot.lane.b32.xlu0 %v3363, 24
        %v3568 = vpop.permute.xlu0 %3567
        %3569 = vrot.lane.b32.xlu0 %v3368, 24
        %v3570 = vpop.permute.xlu0 %3569
        %3571 = vrot.lane.b32.xlu0 %v3373, 24
        %v3572 = vpop.permute.xlu0 %3571
        %3573 = vrot.lane.b32.xlu0 %v3378, 24
        %v3574 = vpop.permute.xlu0 %3573
        %3575 = vrot.lane.b32.xlu0 %v3383, 24
        %v3576 = vpop.permute.xlu0 %3575
        %3577 = vrot.lane.b32.xlu0 %v3388, 24
        %v3578 = vpop.permute.xlu0 %3577
        %3579 = vrot.lane.b32.xlu0 %v3393, 24
        %v3580 = vpop.permute.xlu0 %3579
        %3581 = vrot.lane.b32.xlu0 %v3398, 24
        %v3582 = vpop.permute.xlu0 %3581
        %3583 = vrot.lane.b32.xlu0 %v3403, 24
        %v3584 = vpop.permute.xlu0 %3583
        %3585 = vrot.lane.b32.xlu0 %v3408, 24
        %v3586 = vpop.permute.xlu0 %3585
        %v3603 = vsel %vm498, %v1002, %v3428
        %v3604 = vsel %vm498, %v1007, %v3430
        %v3605 = vsel %vm498, %v1012, %v3432
        %v3606 = vsel %vm498, %v1017, %v3434
        %v3607 = vsel %vm498, %v1022, %v3436
        %v3608 = vsel %vm498, %v1027, %v3438
        %v3609 = vsel %vm498, %v1032, %v3440
        %v3610 = vsel %vm498, %v1037, %v3442
        %v3611 = vsel %vm498, %v1042, %v3444
        %v3612 = vsel %vm498, %v1047, %v3446
        %v3613 = vsel %vm498, %v1052, %v3448
        %v3614 = vsel %vm498, %v1057, %v3450
        %v3615 = vsel %vm498, %v1062, %v3452
        %v3616 = vsel %vm498, %v1067, %v3454
        %v3617 = vsel %vm498, %v1072, %v3456
        %v3618 = vsel %vm498, %v1077, %v3458
        %vm3619 = vcmask 130048
        %v3620 = vsel %vm3619, %v3603, %v3492
        %v3621 = vsel %vm3619, %v3604, %v3494
        %v3622 = vsel %vm3619, %v3605, %v3496
        %v3623 = vsel %vm3619, %v3606, %v3498
        %v3624 = vsel %vm3619, %v3607, %v3500
        %v3625 = vsel %vm3619, %v3608, %v3502
        %v3626 = vsel %vm3619, %v3609, %v3504
        %v3627 = vsel %vm3619, %v3610, %v3506
        %v3628 = vsel %vm3619, %v3611, %v3508
        %v3629 = vsel %vm3619, %v3612, %v3510
        %v3630 = vsel %vm3619, %v3613, %v3512
        %v3631 = vsel %vm3619, %v3614, %v3514
        %v3632 = vsel %vm3619, %v3615, %v3516
        %v3633 = vsel %vm3619, %v3616, %v3518
        %v3634 = vsel %vm3619, %v3617, %v3520
        %v3635 = vsel %vm3619, %v3618, %v3522
        %vm3636 = vcmask 195584
        %v3637 = vsel %vm3636, %v3620, %v3556
        %v3638 = vsel %vm3636, %v3621, %v3558
        %v3639 = vsel %vm3636, %v3622, %v3560
        %v3640 = vsel %vm3636, %v3623, %v3562
        %v3641 = vsel %vm3636, %v3624, %v3564
        %v3642 = vsel %vm3636, %v3625, %v3566
        %v3643 = vsel %vm3636, %v3626, %v3568
        %v3644 = vsel %vm3636, %v3627, %v3570
        %v3645 = vsel %vm3636, %v3628, %v3572
        %v3646 = vsel %vm3636, %v3629, %v3574
        %v3647 = vsel %vm3636, %v3630, %v3576
        %v3648 = vsel %vm3636, %v3631, %v3578
        %v3649 = vsel %vm3636, %v3632, %v3580
        %v3650 = vsel %vm3636, %v3633, %v3582
        %v3651 = vsel %vm3636, %v3634, %v3584
        %v3652 = vsel %vm3636, %v3635, %v3586
        %v3653 = vld [vmem:[%s2] sm:$0xff]
        %v3654 = vld [vmem:[%s2 + $0x8] sm:$0xff]
        %v3655 = vld [vmem:[%s2 + $0x10] sm:$0xff]
        %v3656 = vld [vmem:[%s2 + $0x18] sm:$0xff]
        %v3657 = vld [vmem:[%s3] sm:$0x1]
        %v3659 = vlaneseq
        %v3660 = vshrl.u32 %v3659, 7
        %v3661 = vsub.s32 0, %v3660
        %v3662 = vrot.slane %v3657, %v3661
        %v3665 = vsel %vm256, %v3637, 0
        %v3668 = vsel %vm256, %v3638, 0
        %v3671 = vsel %vm256, %v3639, 0
        %v3674 = vsel %vm256, %v3640, 0
        %v3677 = vsel %vm256, %v3641, 0
        %v3680 = vsel %vm256, %v3642, 0
        %v3683 = vsel %vm256, %v3643, 0
        %v3686 = vsel %vm256, %v3644, 0
        %v3689 = vsel %vm256, %v3645, 0
        %v3692 = vsel %vm256, %v3646, 0
        %v3695 = vsel %vm256, %v3647, 0
        %v3698 = vsel %vm256, %v3648, 0
        %v3701 = vsel %vm256, %v3649, 0
        %v3704 = vsel %vm256, %v3650, 0
        %v3707 = vsel %vm256, %v3651, 0
        %v3710 = vsel %vm256, %v3652, 0
        %3712 = vmatprep.subr.mxu0 0.0
        %3713 = vmatpush1.msra.mxu0 %v3653
        %3714 = vmatprep.subr.mxu0 0.0
        %3715 = vmatpush1.msra.mxu0 %v3654
        %3716 = vmatprep.subr.mxu0 0.0
        %3717 = vmatpush1.msra.mxu0 %v3655
        %3718 = vmatprep.subr.mxu0 0.0
        %3719 = vmatpush1.msra.mxu0 %v3656
        %3720 = vmatprep.subr.mxu0 0.0
        %3721 = vmatpush1.msra.mxu0 0.0
        %3722 = vmatprep.subr.mxu0 0.0
        %3723 = vmatpush1.msra.mxu0 0.0
        %3724 = vmatprep.subr.mxu0 0.0
        %3725 = vmatpush1.msra.mxu0 0.0
        %3726 = vmatprep.subr.mxu0 0.0
        %3727 = vmatpush1.msra.mxu0 0.0
        %3728 = vmatprep.subr.mxu0 0.0
        %3729 = vmatpush1.msra.mxu0 0.0
        %3730 = vmatprep.subr.mxu0 0.0
        %3731 = vmatpush1.msra.mxu0 0.0
        %3732 = vmatprep.subr.mxu0 0.0
        %3733 = vmatpush1.msra.mxu0 0.0
        %3734 = vmatprep.subr.mxu0 0.0
        %3735 = vmatpush1.msra.mxu0 0.0
        %3736 = vmatprep.subr.mxu0 0.0
        %3737 = vmatpush1.msra.mxu0 0.0
        %3738 = vmatprep.subr.mxu0 0.0
        %3739 = vmatpush1.msra.mxu0 0.0
        %3740 = vmatprep.subr.mxu0 0.0
        %3741 = vmatpush1.msra.mxu0 0.0
        %3742 = vmatprep.subr.mxu0 0.0
        %3743 = vmatpush1.msra.mxu0 0.0
        %3744 = vmatprep.subr.mxu0 0.0
        %3745 = vmatpush1.msra.mxu0 0.0
        %3746 = vmatprep.subr.mxu0 0.0
        %3747 = vmatpush1.msra.mxu0 0.0
        %3748 = vmatprep.subr.mxu0 0.0
        %3749 = vmatpush1.msra.mxu0 0.0
        %3750 = vmatprep.subr.mxu0 0.0
        %3751 = vmatpush1.msra.mxu0 0.0
        %3752 = vmatprep.subr.mxu0 0.0
        %3753 = vmatpush1.msra.mxu0 0.0
        %3754 = vmatprep.subr.mxu0 0.0
        %3755 = vmatpush1.msra.mxu0 0.0
        %3756 = vmatprep.subr.mxu0 0.0
        %3757 = vmatpush1.msra.mxu0 0.0
        %3758 = vmatprep.subr.mxu0 0.0
        %3759 = vmatpush1.msra.mxu0 0.0
        %3760 = vmatprep.subr.mxu0 0.0
        %3761 = vmatpush1.msra.mxu0 0.0
        %3762 = vmatprep.subr.mxu0 0.0
        %3763 = vmatpush1.msra.mxu0 0.0
        %3764 = vmatprep.subr.mxu0 0.0
        %3765 = vmatpush1.msra.mxu0 0.0
        %3766 = vmatprep.subr.mxu0 0.0
        %3767 = vmatpush1.msra.mxu0 0.0
        %3768 = vmatprep.subr.mxu0 0.0
        %3769 = vmatpush1.msra.mxu0 0.0
        %3770 = vmatprep.subr.mxu0 0.0
        %3771 = vmatpush1.msra.mxu0 0.0
        %3772 = vmatprep.subr.mxu0 0.0
        %3773 = vmatpush1.msra.mxu0 0.0
        %3774 = vmatprep.subr.mxu0 0.0
        %3775 = vmatpush1.msra.mxu0 0.0
        %3776 = vmatprep.mubr.f32.mxu0 0.0
        %3777 = vmatmul.mubr.f32.gmra.mrb[0].mxu0 %v3665
        %v3778 = vpop.f32.mrb[0].mxu0
        %v3779 = vadd.f32 %v3662, %v3778
        %v3780 = vpop.f32.mrb[0].mxu0
        %3781 = vmatprep.mubr.f32.mxu0 0.0
        %3782 = vmatmul.mubr.f32.gmra.mrb[0].mxu0 %v3668
        %v3783 = vpop.f32.mrb[0].mxu0
        %v3784 = vadd.f32 %v3662, %v3783
        %v3785 = vpop.f32.mrb[0].mxu0
        %3786 = vmatprep.mubr.f32.mxu0 0.0
        %3787 = vmatmul.mubr.f32.gmra.mrb[0].mxu0 %v3671
        %v3788 = vpop.f32.mrb[0].mxu0
        %v3789 = vadd.f32 %v3662, %v3788
        %v3790 = vpop.f32.mrb[0].mxu0
        %3791 = vmatprep.mubr.f32.mxu0 0.0
        %3792 = vmatmul.mubr.f32.gmra.mrb[0].mxu0 %v3674
        %v3793 = vpop.f32.mrb[0].mxu0
        %v3794 = vadd.f32 %v3662, %v3793
        %v3795 = vpop.f32.mrb[0].mxu0
        %3796 = vmatprep.mubr.f32.mxu0 0.0
        %3797 = vmatmul.mubr.f32.gmra.mrb[0].mxu0 %v3677
        %v3798 = vpop.f32.mrb[0].mxu0
        %v3799 = vadd.f32 %v3662, %v3798
        %v3800 = vpop.f32.mrb[0].mxu0
        %3801 = vmatprep.mubr.f32.mxu0 0.0
        %3802 = vmatmul.mubr.f32.gmra.mrb[0].mxu0 %v3680
        %v3803 = vpop.f32.mrb[0].mxu0
        %v3804 = vadd.f32 %v3662, %v3803
        %v3805 = vpop.f32.mrb[0].mxu0
        %3806 = vmatprep.mubr.f32.mxu0 0.0
        %3807 = vmatmul.mubr.f32.gmra.mrb[0].mxu0 %v3683
        %v3808 = vpop.f32.mrb[0].mxu0
        %v3809 = vadd.f32 %v3662, %v3808
        %v3810 = vpop.f32.mrb[0].mxu0
        %3811 = vmatprep.mubr.f32.mxu0 0.0
        %3812 = vmatmul.mubr.f32.gmra.mrb[0].mxu0 %v3686
        %v3813 = vpop.f32.mrb[0].mxu0
        %v3814 = vadd.f32 %v3662, %v3813
        %v3815 = vpop.f32.mrb[0].mxu0
        %3816 = vmatprep.mubr.f32.mxu0 0.0
        %3817 = vmatmul.mubr.f32.gmra.mrb[0].mxu0 %v3689
        %v3818 = vpop.f32.mrb[0].mxu0
        %v3819 = vadd.f32 %v3662, %v3818
        %v3820 = vpop.f32.mrb[0].mxu0
        %3821 = vmatprep.mubr.f32.mxu0 0.0
        %3822 = vmatmul.mubr.f32.gmra.mrb[0].mxu0 %v3692
        %v3823 = vpop.f32.mrb[0].mxu0
        %v3824 = vadd.f32 %v3662, %v3823
        %v3825 = vpop.f32.mrb[0].mxu0
        %3826 = vmatprep.mubr.f32.mxu0 0.0
        %3827 = vmatmul.mubr.f32.gmra.mrb[0].mxu0 %v3695
        %v3828 = vpop.f32.mrb[0].mxu0
        %v3829 = vadd.f32 %v3662, %v3828
        %v3830 = vpop.f32.mrb[0].mxu0
        %3831 = vmatprep.mubr.f32.mxu0 0.0
        %3832 = vmatmul.mubr.f32.gmra.mrb[0].mxu0 %v3698
        %v3833 = vpop.f32.mrb[0].mxu0
        %v3834 = vadd.f32 %v3662, %v3833
        %v3835 = vpop.f32.mrb[0].mxu0
        %3836 = vmatprep.mubr.f32.mxu0 0.0
        %3837 = vmatmul.mubr.f32.gmra.mrb[0].mxu0 %v3701
        %v3838 = vpop.f32.mrb[0].mxu0
        %v3839 = vadd.f32 %v3662, %v3838
        %v3840 = vpop.f32.mrb[0].mxu0
        %3841 = vmatprep.mubr.f32.mxu0 0.0
        %3842 = vmatmul.mubr.f32.gmra.mrb[0].mxu0 %v3704
        %v3843 = vpop.f32.mrb[0].mxu0
        %v3844 = vadd.f32 %v3662, %v3843
        %v3845 = vpop.f32.mrb[0].mxu0
        %3846 = vmatprep.mubr.f32.mxu0 0.0
        %3847 = vmatmul.mubr.f32.gmra.mrb[0].mxu0 %v3707
        %v3848 = vpop.f32.mrb[0].mxu0
        %v3849 = vadd.f32 %v3662, %v3848
        %v3850 = vpop.f32.mrb[0].mxu0
        %3851 = vmatprep.mubr.f32.mxu0 0.0
        %3852 = vmatmul.mubr.f32.gmra.mrb[0].mxu0 %v3710
        %v3853 = vpop.f32.mrb[0].mxu0
        %v3854 = vadd.f32 %v3662, %v3853
        %v3855 = vpop.f32.mrb[0].mxu0
        %3856 = vdwg.mxu0
        %3857 = vst.msk [vmem:[%s235] sm:$0xff] %vm256, %v3779
        %3858 = vst.msk [vmem:[%s235 + $0x8] sm:$0xff] %vm256, %v3784
        %3859 = vst.msk [vmem:[%s235 + $0x10] sm:$0xff] %vm256, %v3789
        %3860 = vst.msk [vmem:[%s235 + $0x18] sm:$0xff] %vm256, %v3794
        %3861 = vst.msk [vmem:[%s235 + $0x20] sm:$0xff] %vm256, %v3799
        %3862 = vst.msk [vmem:[%s235 + $0x28] sm:$0xff] %vm256, %v3804
        %3863 = vst.msk [vmem:[%s235 + $0x30] sm:$0xff] %vm256, %v3809
        %3864 = vst.msk [vmem:[%s235 + $0x38] sm:$0xff] %vm256, %v3814
        %3865 = vst.msk [vmem:[%s235 + $0x40] sm:$0xff] %vm256, %v3819
        %3866 = vst.msk [vmem:[%s235 + $0x48] sm:$0xff] %vm256, %v3824
        %3867 = vst.msk [vmem:[%s235 + $0x50] sm:$0xff] %vm256, %v3829
        %3868 = vst.msk [vmem:[%s235 + $0x58] sm:$0xff] %vm256, %v3834
        %3869 = vst.msk [vmem:[%s235 + $0x60] sm:$0xff] %vm256, %v3839
        %3870 = vst.msk [vmem:[%s235 + $0x68] sm:$0xff] %vm256, %v3844
        %3871 = vst.msk [vmem:[%s235 + $0x70] sm:$0xff] %vm256, %v3849
        %3872 = vst.msk [vmem:[%s235 + $0x78] sm:$0xff] %vm256, %v3854
        %p3873 = scmp.lt.s32.totalorder %s20, 1
        %s3874 = scalar_select %p3873, %s20, 1
        %s3875 = smul.addr %s3874, 16
        %s3876 = smul.addr %s3875, 8
        %s3877 = scalar_lea.vmem %s4, %s3876
        %s3878 = sand.u32 %s143, 1
        %s3879 = scalar_lea.sflag [#allocation3], %s3878
        %s3880 = sand.u32 %s143, 1
        %s3881 = smul.addr %s3880, 512
        %s3882 = scalar_lea.vmem [#allocation2], %s3881
        // Predicated region
        $region37: #{tpu_custom_call.1} parent=35 // pred_check
          %p3883 = pneg %p127
        $region38: #{tpu_custom_call.1} parent=35 // pred_check_branch
          %3885 = sbr.rel (%p3883) target = $region40
        $region39: #{tpu_custom_call.1} parent=35 // pred_region
          _
        $region40: #{tpu_custom_call.1} parent=35 // pred_fallthru
          _
        // Predicated region
        $region41: #{tpu_custom_call.1} parent=35 // pred_check
          %p3886 = pneg %p153
        $region42: #{tpu_custom_call.1} parent=35 // pred_check_branch
          %3888 = sbr.rel (%p3886) target = $region44
        $region43: #{tpu_custom_call.1} parent=35 // pred_region
          %s3890 = ssub.s32 8192, 8192
          %3891 = vsyncadd %s3879, %s3890
          %s3892 = smul.addr %s20, 64
          %s3893 = smul.addr %s3892, 128
          %s3894 = scalar_lea.hbm %s5, %s3893
          %s3895 = sshll.u32 %s3882, 4
          %s3896 = int_to_ptr.vmem [resolvable:$true] %s3895
          %3901 = dma.vmem_to_hbm [thread:$0]  %s3896, 8192, %s3894, %s3879, 128, 128, 8
        $region44: #{tpu_custom_call.1} parent=35 // pred_fallthru
          _
      $region36: #{tpu_custom_call.1} parent=5 // pred_fallthru
        _
      %p3902 = scmp.le.s32.totalorder 2, %s15
      // Predicated region
      $region45: #{tpu_custom_call.1} parent=5 // pred_check
        %p3903 = pneg %p3902
      $region46: #{tpu_custom_call.1} parent=5 // pred_check_branch
        %3905 = sbr.rel (%p3903) target = $region48
      $region47: #{tpu_custom_call.1} parent=5 // pred_region
        %s3906 = ssub.s32 %s15, 2
        // Predicated region
        $region49: #{tpu_custom_call.1} parent=47 // pred_check
          %p3907 = pneg %p133
        $region50: #{tpu_custom_call.1} parent=47 // pred_check_branch
          %3909 = sbr.rel (%p3907) target = $region52
        $region51: #{tpu_custom_call.1} parent=47 // pred_region
          %p3910 = scmp.lt.s32.totalorder %s21, 1
          %s3911 = scalar_select %p3910, %s21, 1
          %s3912 = smul.addr %s3911, 16
          %s3913 = smul.addr %s3912, 8
          %s3914 = scalar_lea.vmem %s4, %s3913
        $region52: #{tpu_custom_call.1} parent=47 // pred_fallthru
          _
        // Predicated region
        $region53: #{tpu_custom_call.1} parent=47 // pred_check
          %p3915 = pneg %p159
        $region54: #{tpu_custom_call.1} parent=47 // pred_check_branch
          %3917 = sbr.rel (%p3915) target = $region56
        $region55: #{tpu_custom_call.1} parent=47 // pred_region
          %s3918 = sand.u32 %s144, 1
          %s3919 = scalar_lea.sflag [#allocation3], %s3918
          %s3920 = sand.u32 %s144, 1
          %s3921 = smul.addr %s3920, 512
          %s3922 = scalar_lea.vmem [#allocation2], %s3921
          %3923 = dma.done %s3919, 8192
        $region56: #{tpu_custom_call.1} parent=47 // pred_fallthru
          _
      $region48: #{tpu_custom_call.1} parent=5 // pred_fallthru
        _
    $region6: #{tpu_custom_call.1} parent=1 // loop_footer
      %s19 = sadd.s32 1, %s15
    $region7: #{tpu_custom_call.1} parent=1 // loop_footer_branch
      %14 = sbr.rel target = $region3
    $region8: #{tpu_custom_call.1} parent=1 // loop_exit
      _
    %3924 = vsyncpa [#allocation3], 1
    %s3925 = scalar_lea.sflag [#allocation3], 1
    %3926 = vsyncpa %s3925, 1

</llo_original>
